<compile_context>
chip_gen: v6e
topology: v6e:2x2x1
jax: 0.10.0
libtpu: 0.0.40
codegen_flags: <defaults>
</compile_context>

<pallas_src>
import functools

import jax
import jax.numpy as jnp
import numpy as np
from jax.experimental import pallas as pl
from jax.experimental.pallas import tpu as pltpu


# ----------------------------------------------------------------------------
# Fused Pallas kernel: conv1 -> conv2 -> conv3 -> flatten -> mlp1 -> mlp2
# ----------------------------------------------------------------------------
def _qnet_fused_kernel(p1_ref, w1_ref, b1_ref,
                       w2_ref, b2_ref,
                       w3_ref, b3_ref,
                       wm1_ref, bm1_ref,
                       wm2_ref, bm2_ref,
                       out_ref,
                       a1_ref, a2_ref, a3_ref, *, batch):
    r1 = batch * 49        # rows of the full 7x7 block grid (valid: 6x6 / 4x4)
    r2 = r1 + 16           # conv2 rows incl. headroom for conv3's max shift

    # conv1 as a 2x2-output-block conv: ONE K=432 matmul on wrapper-built
    # patches; 128 output channels = (py, px, c) of the 2x2 conv1 outputs.
    a1 = jnp.dot(p1_ref[...], w1_ref[...], preferred_element_type=jnp.float32)
    a1_ref[...] = jnp.maximum(a1 + b1_ref[...], 0.0)            # (r1+24, 128)

    # conv2 (4x4/stride-2 == 2x2/stride-1 on the block grid): fuse the 4 taps
    # into ONE K=512 matmul by concatenating row-shifted windows along lanes.
    p2 = jnp.concatenate(
        [a1_ref[pl.ds(7 * ay + ax, r2), :] for ay in range(2) for ax in range(2)],
        axis=-1)                                                 # (r2, 512)
    a2 = jnp.dot(p2, w2_ref[...], preferred_element_type=jnp.float32)
    a2_ref[...] = jnp.maximum(a2 + b2_ref[...], 0.0)             # (r2, 64)

    # conv3 (3x3/stride-1 on the block grid): 9 taps -> ONE K=576 matmul.
    p3 = jnp.concatenate(
        [a2_ref[pl.ds(7 * ky + kx, r1), :] for ky in range(3) for kx in range(3)],
        axis=-1)                                                 # (r1, 576)
    a3 = jnp.dot(p3, w3_ref[...], preferred_element_type=jnp.float32)
    a3_ref[...] = jnp.maximum(a3 + b3_ref[...], 0.0)             # (r1, 64)

    # flatten + mlp1: gather the 16 valid 4x4 positions per sample into a
    # lane-dense (batch, 1024) matrix -> a single K=1024 matmul (mlp1_w was
    # pre-permuted to this (y, x, c) feature order).
    rows = []
    for b in range(batch):
        feats = [a3_ref[pl.ds(b * 49 + y * 7 + x, 1), :]
                 for y in range(4) for x in range(4)]
        rows.append(jnp.concatenate(feats, axis=-1))             # (1, 1024)
    hin = jnp.concatenate(rows, axis=0)                          # (batch, 1024)
    h = jnp.dot(hin, wm1_ref[...], preferred_element_type=jnp.float32)
    h = jnp.maximum(h + bm1_ref[...], 0.0)                       # (batch, 512)

    out = jnp.dot(h, wm2_ref[...], preferred_element_type=jnp.float32)
    out_ref[...] = out + bm2_ref[...]                            # (batch, 128)


# ----------------------------------------------------------------------------
# One-time weight re-layout (off the hot path)
# ----------------------------------------------------------------------------
def prepare_qnet(params):
    c_in = int(params["conv1_w"].shape[1])
    n_actions = int(params["mlp2_w"].shape[0])
    n_pad = ((n_actions + 127) // 128) * 128

    # conv1 as block conv: feature = (u, v, hi, wj, ci) over the 12x12 patch
    # expressed on the 4x4 space-to-depth grid; output channel = (py, px, co).
    w1 = np.asarray(params["conv1_w"], np.float32)               # (32, C, 8, 8)
    w1b = np.zeros((3, 3, 4, 4, c_in, 2, 2, 32), np.float32)
    for u in range(3):
        for v in range(3):
            for hi in range(4):
                for wj in range(4):
                    dy, dx = 4 * u + hi, 4 * v + wj
                    for py in range(2):
                        for px in range(2):
                            kh, kw = dy - 4 * py, dx - 4 * px
                            if 0 <= kh < 8 and 0 <= kw < 8:
                                w1b[u, v, hi, wj, :, py, px, :] = w1[:, :, kh, kw].T
    w1b = w1b.reshape(144 * c_in, 128)
    b1b = np.tile(np.asarray(params["conv1_b"], np.float32), 4).reshape(1, 128)

    # conv2: tap (ay, ax) over blocks, input channel (py, px, ci) -> (512, 64).
    w2 = np.asarray(params["conv2_w"], np.float32)               # (64, 32, 4, 4)
    w2f = np.zeros((2, 2, 2, 2, 32, 64), np.float32)
    for ay in range(2):
        for ax in range(2):
            for py in range(2):
                for px in range(2):
                    w2f[ay, ax, py, px] = w2[:, :, 2 * ay + py, 2 * ax + px].T
    w2f = w2f.reshape(512, 64)
    b2 = np.asarray(params["conv2_b"], np.float32).reshape(1, 64)

    # conv3: (kh, kw, ci) -> (576, 64).
    w3 = np.asarray(params["conv3_w"], np.float32)               # (64, 64, 3, 3)
    w3f = w3.transpose(2, 3, 1, 0).reshape(576, 64)
    b3 = np.asarray(params["conv3_b"], np.float32).reshape(1, 64)

    # mlp1: fold torch's NCHW flatten (c*16 + y*4 + x) into (y, x, c) order.
    wm1 = np.asarray(params["mlp1_w"], np.float32)               # (512, 1024)
    wm1f = wm1.reshape(512, 64, 4, 4).transpose(2, 3, 1, 0).reshape(1024, 512)
    bm1 = np.asarray(params["mlp1_b"], np.float32).reshape(1, 512)

    # mlp2: pre-transposed and zero-padded to lane width 128.
    wm2 = np.zeros((512, n_pad), np.float32)
    wm2[:, :n_actions] = np.asarray(params["mlp2_w"], np.float32).T
    bm2 = np.zeros((1, n_pad), np.float32)
    bm2[0, :n_actions] = np.asarray(params["mlp2_b"], np.float32)

    prep = dict(w1=w1b, b1=b1b, w2=w2f, b2=b2, w3=w3f, b3=b3,
                wm1=wm1f, bm1=bm1, wm2=wm2, bm2=bm2)
    return jax.tree_util.tree_map(jnp.asarray, prep)


# ----------------------------------------------------------------------------
# Forward pass (mirrors Qnet.forward) — a single pallas_call
# ----------------------------------------------------------------------------
@functools.partial(jax.jit, static_argnums=(2,))
def qnet_forward(prep, x, n_actions):
    """x: (B, C, 60, 60) float32 NCHW (PyTorch layout) -> (B, n_actions)."""
    B, C, H, W = x.shape
    assert H == 60 and W == 60, "Qnet's mlp1 expects 60x60 inputs (64*4*4=1024)."
    r1 = B * 49          # 7x7 block-grid rows
    r1p = r1 + 24        # conv1 rows incl. headroom (conv2 shift<=8, window r1+16)
    r2 = r1 + 16

    # Wrapper-side layout plumbing on the tiny input (86 KB for B=2):
    # 4x4 space-to-depth, then the 9 strided taps of the 12x12 block patches.
    x_nhwc = jnp.transpose(x, (0, 2, 3, 1))
    s2d = (x_nhwc.reshape(B, 15, 4, 15, 4, C)
                 .transpose(0, 1, 3, 2, 4, 5)
                 .reshape(B, 15, 15, 16 * C))
    taps = [s2d[:, u:u + 13:2, v:v + 13:2, :] for u in range(3) for v in range(3)]
    p1 = jnp.concatenate(taps, axis=-1).reshape(r1, 144 * C)     # (B*49, 432)
    p1 = jnp.pad(p1, ((0, r1p - r1), (0, 0)))                    # zero tail rows

    n_pad = prep["wm2"].shape[-1]
    kernel = functools.partial(_qnet_fused_kernel, batch=B)
    out = pl.pallas_call(
        kernel,
        out_shape=jax.ShapeDtypeStruct((B, n_pad), jnp.float32),
        in_specs=[pl.BlockSpec(memory_space=pltpu.MemorySpace.VMEM)] * 11,
        out_specs=pl.BlockSpec(memory_space=pltpu.MemorySpace.VMEM),
        scratch_shapes=[
            pltpu.VMEM((r1p, 128), jnp.float32),   # a1 (block-conv output)
            pltpu.VMEM((r2, 64), jnp.float32),     # a2
            pltpu.VMEM((r1, 64), jnp.float32),     # a3
        ],
        compiler_params=pltpu.CompilerParams(
            vmem_limit_bytes=16 * 1024 * 1024),
    )(p1, prep["w1"], prep["b1"], prep["w2"], prep["b2"],
      prep["w3"], prep["b3"], prep["wm1"], prep["bm1"],
      prep["wm2"], prep["bm2"])
    return out[:, :n_actions]


# ----------------------------------------------------------------------------
# Parameter construction (deterministic, PyTorch-default-style uniform bounds)
# ----------------------------------------------------------------------------
def _uniform(key, shape, fan_in):
    bound = 1.0 / jnp.sqrt(jnp.float32(fan_in))
    return jax.random.uniform(key, shape, jnp.float32, -bound, bound)


def init_qnet_params(key, n_input_channels, n_actions):
    ks = jax.random.split(key, 10)
    p = {}
    p["conv1_w"] = _uniform(ks[0], (32, n_input_channels, 8, 8), n_input_channels * 64)
    p["conv1_b"] = _uniform(ks[1], (32,), n_input_channels * 64)
    p["conv2_w"] = _uniform(ks[2], (64, 32, 4, 4), 32 * 16)
    p["conv2_b"] = _uniform(ks[3], (64,), 32 * 16)
    p["conv3_w"] = _uniform(ks[4], (64, 64, 3, 3), 64 * 9)
    p["conv3_b"] = _uniform(ks[5], (64,), 64 * 9)
    p["mlp1_w"] = _uniform(ks[6], (512, 1024), 1024)   # torch Linear: (out, in)
    p["mlp1_b"] = _uniform(ks[7], (512,), 1024)
    p["mlp2_w"] = _uniform(ks[8], (n_actions, 512), 512)
    p["mlp2_b"] = _uniform(ks[9], (n_actions,), 512)
    return p


# ----------------------------------------------------------------------------
# Pure-JAX reference (sanity check)
# ----------------------------------------------------------------------------
def qnet_forward_ref(params, x):
    def conv(x, w, b, s):
        y = jax.lax.conv_general_dilated(
            x, w, window_strides=(s, s), padding="VALID",
            dimension_numbers=("NCHW", "OIHW", "NCHW"))
        return jax.nn.relu(y + b.reshape(1, -1, 1, 1))
    x = conv(x, params["conv1_w"], params["conv1_b"], 4)
    x = conv(x, params["conv2_w"], params["conv2_b"], 2)
    x = conv(x, params["conv3_w"], params["conv3_b"], 1)
    x = x.reshape(x.shape[0], -1)
    x = jax.nn.relu(x @ params["mlp1_w"].T + params["mlp1_b"])
    return x @ params["mlp2_w"].T + params["mlp2_b"]


if __name__ == "__main__":
    key = jax.random.PRNGKey(0)
    k_param, k_x = jax.random.split(key)

    n_input_channels = 3
    n_actions = 6
    batch = 2
    # mlp1 expects 1024 = 64*4*4 flattened features -> input spatial is 60x60.
    x = jax.random.uniform(k_x, (batch, n_input_channels, 60, 60), jnp.float32)

    params = init_qnet_params(k_param, n_input_channels, n_actions)
    prep = prepare_qnet(params)          # one-time re-layout, off the hot path

    out = qnet_forward(prep, x, n_actions)
    out = jax.block_until_ready(out)

    assert out.shape == (batch, n_actions), out.shape
    assert bool(jnp.all(jnp.isfinite(out)))

    ref = jax.block_until_ready(qnet_forward_ref(params, x))
    # f32 end to end; tolerance covers MXU default-precision accumulation
    # differences while still catching layout / tap-ordering / padding bugs.
    assert jnp.allclose(out, ref, rtol=1e-2, atol=1e-2), (
        f"max abs diff {float(jnp.max(jnp.abs(out - ref)))}")

    print("KERNEL_OK")
</pallas_src>

<mosaic_0001>
module attributes {stable_mosaic.version = 11 : i64} {
  func.func @_qnet_fused_kernel(%arg0: memref<122x432xf32, #tpu.memory_space<vmem>>, %arg1: memref<432x128xf32, #tpu.memory_space<vmem>>, %arg2: memref<1x128xf32, #tpu.memory_space<vmem>>, %arg3: memref<512x64xf32, #tpu.memory_space<vmem>>, %arg4: memref<1x64xf32, #tpu.memory_space<vmem>>, %arg5: memref<576x64xf32, #tpu.memory_space<vmem>>, %arg6: memref<1x64xf32, #tpu.memory_space<vmem>>, %arg7: memref<1024x512xf32, #tpu.memory_space<vmem>>, %arg8: memref<1x512xf32, #tpu.memory_space<vmem>>, %arg9: memref<512x128xf32, #tpu.memory_space<vmem>>, %arg10: memref<1x128xf32, #tpu.memory_space<vmem>>, %arg11: memref<2x128xf32, #tpu.memory_space<vmem>>, %arg12: memref<122x128xf32, #tpu.memory_space<vmem>>, %arg13: memref<114x64xf32, #tpu.memory_space<vmem>>, %arg14: memref<98x64xf32, #tpu.memory_space<vmem>>) attributes {dimension_semantics = [], scalar_prefetch = 0 : i64, scratch_operands = 3 : i64, tpu.core_type = #tpu.core_type<tc>} {
    %c0 = arith.constant 0 : index
    %c0_0 = arith.constant 0 : index
    %0 = vector.load %arg0[%c0, %c0_0] : memref<122x432xf32, #tpu.memory_space<vmem>>, vector<122x432xf32>
    %c0_1 = arith.constant 0 : index
    %c0_2 = arith.constant 0 : index
    %1 = vector.load %arg1[%c0_1, %c0_2] : memref<432x128xf32, #tpu.memory_space<vmem>>, vector<432x128xf32>
    %cst = arith.constant dense<0.000000e+00> : vector<122x128xf32>
    %2 = tpu.matmul %0, %1, %cst {dimension_numbers = #tpu.dot_dimension_numbers<[1], [0], [0], [1], [0, 0, 1, 1], [], []>} : vector<122x432xf32>, vector<432x128xf32>, vector<122x128xf32> -> vector<122x128xf32>
    %c0_3 = arith.constant 0 : index
    %c0_4 = arith.constant 0 : index
    %3 = vector.load %arg2[%c0_3, %c0_4] : memref<1x128xf32, #tpu.memory_space<vmem>>, vector<1x128xf32>
    %4 = vector.broadcast %3 : vector<1x128xf32> to vector<122x128xf32>
    %5 = arith.addf %2, %4 : vector<122x128xf32>
    %cst_5 = arith.constant 0.000000e+00 : f32
    %6 = vector.broadcast %cst_5 : f32 to vector<122x128xf32>
    %7 = arith.maximumf %5, %6 : vector<122x128xf32>
    %c0_6 = arith.constant 0 : index
    %c0_7 = arith.constant 0 : index
    %8 = vector.load %arg12[%c0_6, %c0_7] : memref<122x128xf32, #tpu.memory_space<vmem>>, vector<122x128xf32>
    tpu.vector_store %arg12[%c0_6, %c0_7], %7 {strides = array<i32>} : memref<122x128xf32, #tpu.memory_space<vmem>>, vector<122x128xf32>,
    %c0_8 = arith.constant 0 : index
    %c0_9 = arith.constant 0 : index
    %9 = vector.load %arg12[%c0_8, %c0_9] : memref<122x128xf32, #tpu.memory_space<vmem>>, vector<114x128xf32>
    %c1 = arith.constant 1 : index
    %c0_10 = arith.constant 0 : index
    %10 = vector.load %arg12[%c1, %c0_10] : memref<122x128xf32, #tpu.memory_space<vmem>>, vector<114x128xf32>
    %c7 = arith.constant 7 : index
    %c0_11 = arith.constant 0 : index
    %11 = vector.load %arg12[%c7, %c0_11] : memref<122x128xf32, #tpu.memory_space<vmem>>, vector<114x128xf32>
    %c8 = arith.constant 8 : index
    %c0_12 = arith.constant 0 : index
    %12 = vector.load %arg12[%c8, %c0_12] : memref<122x128xf32, #tpu.memory_space<vmem>>, vector<114x128xf32>
    %13 = tpu.concatenate %9, %10, %11, %12 in 1 : vector<114x128xf32>, vector<114x128xf32>, vector<114x128xf32>, vector<114x128xf32> -> vector<114x512xf32>
    %c0_13 = arith.constant 0 : index
    %c0_14 = arith.constant 0 : index
    %14 = vector.load %arg3[%c0_13, %c0_14] : memref<512x64xf32, #tpu.memory_space<vmem>>, vector<512x64xf32>
    %cst_15 = arith.constant dense<0.000000e+00> : vector<114x64xf32>
    %15 = tpu.matmul %13, %14, %cst_15 {dimension_numbers = #tpu.dot_dimension_numbers<[1], [0], [0], [1], [0, 0, 1, 1], [], []>} : vector<114x512xf32>, vector<512x64xf32>, vector<114x64xf32> -> vector<114x64xf32>
    %c0_16 = arith.constant 0 : index
    %c0_17 = arith.constant 0 : index
    %16 = vector.load %arg4[%c0_16, %c0_17] : memref<1x64xf32, #tpu.memory_space<vmem>>, vector<1x64xf32>
    %17 = vector.broadcast %16 : vector<1x64xf32> to vector<114x64xf32>
    %18 = arith.addf %15, %17 : vector<114x64xf32>
    %cst_18 = arith.constant 0.000000e+00 : f32
    %19 = vector.broadcast %cst_18 : f32 to vector<114x64xf32>
    %20 = arith.maximumf %18, %19 : vector<114x64xf32>
    %c0_19 = arith.constant 0 : index
    %c0_20 = arith.constant 0 : index
    %21 = vector.load %arg13[%c0_19, %c0_20] : memref<114x64xf32, #tpu.memory_space<vmem>>, vector<114x64xf32>
    tpu.vector_store %arg13[%c0_19, %c0_20], %20 {strides = array<i32>} : memref<114x64xf32, #tpu.memory_space<vmem>>, vector<114x64xf32>,
    %c0_21 = arith.constant 0 : index
    %c0_22 = arith.constant 0 : index
    %22 = vector.load %arg13[%c0_21, %c0_22] : memref<114x64xf32, #tpu.memory_space<vmem>>, vector<98x64xf32>
    %c1_23 = arith.constant 1 : index
    %c0_24 = arith.constant 0 : index
    %23 = vector.load %arg13[%c1_23, %c0_24] : memref<114x64xf32, #tpu.memory_space<vmem>>, vector<98x64xf32>
    %c2 = arith.constant 2 : index
    %c0_25 = arith.constant 0 : index
    %24 = vector.load %arg13[%c2, %c0_25] : memref<114x64xf32, #tpu.memory_space<vmem>>, vector<98x64xf32>
    %c7_26 = arith.constant 7 : index
    %c0_27 = arith.constant 0 : index
    %25 = vector.load %arg13[%c7_26, %c0_27] : memref<114x64xf32, #tpu.memory_space<vmem>>, vector<98x64xf32>
    %c8_28 = arith.constant 8 : index
    %c0_29 = arith.constant 0 : index
    %26 = vector.load %arg13[%c8_28, %c0_29] : memref<114x64xf32, #tpu.memory_space<vmem>>, vector<98x64xf32>
    %c9 = arith.constant 9 : index
    %c0_30 = arith.constant 0 : index
    %27 = vector.load %arg13[%c9, %c0_30] : memref<114x64xf32, #tpu.memory_space<vmem>>, vector<98x64xf32>
    %c14 = arith.constant 14 : index
    %c0_31 = arith.constant 0 : index
    %28 = vector.load %arg13[%c14, %c0_31] : memref<114x64xf32, #tpu.memory_space<vmem>>, vector<98x64xf32>
    %c15 = arith.constant 15 : index
    %c0_32 = arith.constant 0 : index
    %29 = vector.load %arg13[%c15, %c0_32] : memref<114x64xf32, #tpu.memory_space<vmem>>, vector<98x64xf32>
    %c16 = arith.constant 16 : index
    %c0_33 = arith.constant 0 : index
    %30 = vector.load %arg13[%c16, %c0_33] : memref<114x64xf32, #tpu.memory_space<vmem>>, vector<98x64xf32>
    %31 = tpu.concatenate %22, %23, %24, %25, %26, %27, %28, %29, %30 in 1 : vector<98x64xf32>, vector<98x64xf32>, vector<98x64xf32>, vector<98x64xf32>, vector<98x64xf32>, vector<98x64xf32>, vector<98x64xf32>, vector<98x64xf32>, vector<98x64xf32> -> vector<98x576xf32>
    %c0_34 = arith.constant 0 : index
    %c0_35 = arith.constant 0 : index
    %32 = vector.load %arg5[%c0_34, %c0_35] : memref<576x64xf32, #tpu.memory_space<vmem>>, vector<576x64xf32>
    %cst_36 = arith.constant dense<0.000000e+00> : vector<98x64xf32>
    %33 = tpu.matmul %31, %32, %cst_36 {dimension_numbers = #tpu.dot_dimension_numbers<[1], [0], [0], [1], [0, 0, 1, 1], [], []>} : vector<98x576xf32>, vector<576x64xf32>, vector<98x64xf32> -> vector<98x64xf32>
    %c0_37 = arith.constant 0 : index
    %c0_38 = arith.constant 0 : index
    %34 = vector.load %arg6[%c0_37, %c0_38] : memref<1x64xf32, #tpu.memory_space<vmem>>, vector<1x64xf32>
    %35 = vector.broadcast %34 : vector<1x64xf32> to vector<98x64xf32>
    %36 = arith.addf %33, %35 : vector<98x64xf32>
    %cst_39 = arith.constant 0.000000e+00 : f32
    %37 = vector.broadcast %cst_39 : f32 to vector<98x64xf32>
    %38 = arith.maximumf %36, %37 : vector<98x64xf32>
    %c0_40 = arith.constant 0 : index
    %c0_41 = arith.constant 0 : index
    %39 = vector.load %arg14[%c0_40, %c0_41] : memref<98x64xf32, #tpu.memory_space<vmem>>, vector<98x64xf32>
    tpu.vector_store %arg14[%c0_40, %c0_41], %38 {strides = array<i32>} : memref<98x64xf32, #tpu.memory_space<vmem>>, vector<98x64xf32>,
    %c0_42 = arith.constant 0 : index
    %c0_43 = arith.constant 0 : index
    %40 = vector.load %arg14[%c0_42, %c0_43] : memref<98x64xf32, #tpu.memory_space<vmem>>, vector<1x64xf32>
    %c1_44 = arith.constant 1 : index
    %c0_45 = arith.constant 0 : index
    %41 = vector.load %arg14[%c1_44, %c0_45] : memref<98x64xf32, #tpu.memory_space<vmem>>, vector<1x64xf32>
    %c2_46 = arith.constant 2 : index
    %c0_47 = arith.constant 0 : index
    %42 = vector.load %arg14[%c2_46, %c0_47] : memref<98x64xf32, #tpu.memory_space<vmem>>, vector<1x64xf32>
    %c3 = arith.constant 3 : index
    %c0_48 = arith.constant 0 : index
    %43 = vector.load %arg14[%c3, %c0_48] : memref<98x64xf32, #tpu.memory_space<vmem>>, vector<1x64xf32>
    %c7_49 = arith.constant 7 : index
    %c0_50 = arith.constant 0 : index
    %44 = vector.load %arg14[%c7_49, %c0_50] : memref<98x64xf32, #tpu.memory_space<vmem>>, vector<1x64xf32>
    %c8_51 = arith.constant 8 : index
    %c0_52 = arith.constant 0 : index
    %45 = vector.load %arg14[%c8_51, %c0_52] : memref<98x64xf32, #tpu.memory_space<vmem>>, vector<1x64xf32>
    %c9_53 = arith.constant 9 : index
    %c0_54 = arith.constant 0 : index
    %46 = vector.load %arg14[%c9_53, %c0_54] : memref<98x64xf32, #tpu.memory_space<vmem>>, vector<1x64xf32>
    %c10 = arith.constant 10 : index
    %c0_55 = arith.constant 0 : index
    %47 = vector.load %arg14[%c10, %c0_55] : memref<98x64xf32, #tpu.memory_space<vmem>>, vector<1x64xf32>
    %c14_56 = arith.constant 14 : index
    %c0_57 = arith.constant 0 : index
    %48 = vector.load %arg14[%c14_56, %c0_57] : memref<98x64xf32, #tpu.memory_space<vmem>>, vector<1x64xf32>
    %c15_58 = arith.constant 15 : index
    %c0_59 = arith.constant 0 : index
    %49 = vector.load %arg14[%c15_58, %c0_59] : memref<98x64xf32, #tpu.memory_space<vmem>>, vector<1x64xf32>
    %c16_60 = arith.constant 16 : index
    %c0_61 = arith.constant 0 : index
    %50 = vector.load %arg14[%c16_60, %c0_61] : memref<98x64xf32, #tpu.memory_space<vmem>>, vector<1x64xf32>
    %c17 = arith.constant 17 : index
    %c0_62 = arith.constant 0 : index
    %51 = vector.load %arg14[%c17, %c0_62] : memref<98x64xf32, #tpu.memory_space<vmem>>, vector<1x64xf32>
    %c21 = arith.constant 21 : index
    %c0_63 = arith.constant 0 : index
    %52 = vector.load %arg14[%c21, %c0_63] : memref<98x64xf32, #tpu.memory_space<vmem>>, vector<1x64xf32>
    %c22 = arith.constant 22 : index
    %c0_64 = arith.constant 0 : index
    %53 = vector.load %arg14[%c22, %c0_64] : memref<98x64xf32, #tpu.memory_space<vmem>>, vector<1x64xf32>
    %c23 = arith.constant 23 : index
    %c0_65 = arith.constant 0 : index
    %54 = vector.load %arg14[%c23, %c0_65] : memref<98x64xf32, #tpu.memory_space<vmem>>, vector<1x64xf32>
    %c24 = arith.constant 24 : index
    %c0_66 = arith.constant 0 : index
    %55 = vector.load %arg14[%c24, %c0_66] : memref<98x64xf32, #tpu.memory_space<vmem>>, vector<1x64xf32>
    %56 = tpu.concatenate %40, %41, %42, %43, %44, %45, %46, %47, %48, %49, %50, %51, %52, %53, %54, %55 in 1 : vector<1x64xf32>, vector<1x64xf32>, vector<1x64xf32>, vector<1x64xf32>, vector<1x64xf32>, vector<1x64xf32>, vector<1x64xf32>, vector<1x64xf32>, vector<1x64xf32>, vector<1x64xf32>, vector<1x64xf32>, vector<1x64xf32>, vector<1x64xf32>, vector<1x64xf32>, vector<1x64xf32>, vector<1x64xf32> -> vector<1x1024xf32>
    %c49 = arith.constant 49 : index
    %c0_67 = arith.constant 0 : index
    %57 = vector.load %arg14[%c49, %c0_67] : memref<98x64xf32, #tpu.memory_space<vmem>>, vector<1x64xf32>
    %c50 = arith.constant 50 : index
    %c0_68 = arith.constant 0 : index
    %58 = vector.load %arg14[%c50, %c0_68] : memref<98x64xf32, #tpu.memory_space<vmem>>, vector<1x64xf32>
    %c51 = arith.constant 51 : index
    %c0_69 = arith.constant 0 : index
    %59 = vector.load %arg14[%c51, %c0_69] : memref<98x64xf32, #tpu.memory_space<vmem>>, vector<1x64xf32>
    %c52 = arith.constant 52 : index
    %c0_70 = arith.constant 0 : index
    %60 = vector.load %arg14[%c52, %c0_70] : memref<98x64xf32, #tpu.memory_space<vmem>>, vector<1x64xf32>
    %c56 = arith.constant 56 : index
    %c0_71 = arith.constant 0 : index
    %61 = vector.load %arg14[%c56, %c0_71] : memref<98x64xf32, #tpu.memory_space<vmem>>, vector<1x64xf32>
    %c57 = arith.constant 57 : index
    %c0_72 = arith.constant 0 : index
    %62 = vector.load %arg14[%c57, %c0_72] : memref<98x64xf32, #tpu.memory_space<vmem>>, vector<1x64xf32>
    %c58 = arith.constant 58 : index
    %c0_73 = arith.constant 0 : index
    %63 = vector.load %arg14[%c58, %c0_73] : memref<98x64xf32, #tpu.memory_space<vmem>>, vector<1x64xf32>
    %c59 = arith.constant 59 : index
    %c0_74 = arith.constant 0 : index
    %64 = vector.load %arg14[%c59, %c0_74] : memref<98x64xf32, #tpu.memory_space<vmem>>, vector<1x64xf32>
    %c63 = arith.constant 63 : index
    %c0_75 = arith.constant 0 : index
    %65 = vector.load %arg14[%c63, %c0_75] : memref<98x64xf32, #tpu.memory_space<vmem>>, vector<1x64xf32>
    %c64 = arith.constant 64 : index
    %c0_76 = arith.constant 0 : index
    %66 = vector.load %arg14[%c64, %c0_76] : memref<98x64xf32, #tpu.memory_space<vmem>>, vector<1x64xf32>
    %c65 = arith.constant 65 : index
    %c0_77 = arith.constant 0 : index
    %67 = vector.load %arg14[%c65, %c0_77] : memref<98x64xf32, #tpu.memory_space<vmem>>, vector<1x64xf32>
    %c66 = arith.constant 66 : index
    %c0_78 = arith.constant 0 : index
    %68 = vector.load %arg14[%c66, %c0_78] : memref<98x64xf32, #tpu.memory_space<vmem>>, vector<1x64xf32>
    %c70 = arith.constant 70 : index
    %c0_79 = arith.constant 0 : index
    %69 = vector.load %arg14[%c70, %c0_79] : memref<98x64xf32, #tpu.memory_space<vmem>>, vector<1x64xf32>
    %c71 = arith.constant 71 : index
    %c0_80 = arith.constant 0 : index
    %70 = vector.load %arg14[%c71, %c0_80] : memref<98x64xf32, #tpu.memory_space<vmem>>, vector<1x64xf32>
    %c72 = arith.constant 72 : index
    %c0_81 = arith.constant 0 : index
    %71 = vector.load %arg14[%c72, %c0_81] : memref<98x64xf32, #tpu.memory_space<vmem>>, vector<1x64xf32>
    %c73 = arith.constant 73 : index
    %c0_82 = arith.constant 0 : index
    %72 = vector.load %arg14[%c73, %c0_82] : memref<98x64xf32, #tpu.memory_space<vmem>>, vector<1x64xf32>
    %73 = tpu.concatenate %57, %58, %59, %60, %61, %62, %63, %64, %65, %66, %67, %68, %69, %70, %71, %72 in 1 : vector<1x64xf32>, vector<1x64xf32>, vector<1x64xf32>, vector<1x64xf32>, vector<1x64xf32>, vector<1x64xf32>, vector<1x64xf32>, vector<1x64xf32>, vector<1x64xf32>, vector<1x64xf32>, vector<1x64xf32>, vector<1x64xf32>, vector<1x64xf32>, vector<1x64xf32>, vector<1x64xf32>, vector<1x64xf32> -> vector<1x1024xf32>
    %74 = tpu.concatenate %56, %73 in 0 : vector<1x1024xf32>, vector<1x1024xf32> -> vector<2x1024xf32>
    %c0_83 = arith.constant 0 : index
    %c0_84 = arith.constant 0 : index
    %75 = vector.load %arg7[%c0_83, %c0_84] : memref<1024x512xf32, #tpu.memory_space<vmem>>, vector<1024x512xf32>
    %cst_85 = arith.constant dense<0.000000e+00> : vector<2x512xf32>
    %76 = tpu.matmul %74, %75, %cst_85 {dimension_numbers = #tpu.dot_dimension_numbers<[1], [0], [0], [1], [0, 0, 1, 1], [], []>} : vector<2x1024xf32>, vector<1024x512xf32>, vector<2x512xf32> -> vector<2x512xf32>
    %c0_86 = arith.constant 0 : index
    %c0_87 = arith.constant 0 : index
    %77 = vector.load %arg8[%c0_86, %c0_87] : memref<1x512xf32, #tpu.memory_space<vmem>>, vector<1x512xf32>
    %78 = vector.broadcast %77 : vector<1x512xf32> to vector<2x512xf32>
    %79 = arith.addf %76, %78 : vector<2x512xf32>
    %cst_88 = arith.constant 0.000000e+00 : f32
    %80 = vector.broadcast %cst_88 : f32 to vector<2x512xf32>
    %81 = arith.maximumf %79, %80 : vector<2x512xf32>
    %c0_89 = arith.constant 0 : index
    %c0_90 = arith.constant 0 : index
    %82 = vector.load %arg9[%c0_89, %c0_90] : memref<512x128xf32, #tpu.memory_space<vmem>>, vector<512x128xf32>
    %cst_91 = arith.constant dense<0.000000e+00> : vector<2x128xf32>
    %83 = tpu.matmul %81, %82, %cst_91 {dimension_numbers = #tpu.dot_dimension_numbers<[1], [0], [0], [1], [0, 0, 1, 1], [], []>} : vector<2x512xf32>, vector<512x128xf32>, vector<2x128xf32> -> vector<2x128xf32>
    %c0_92 = arith.constant 0 : index
    %c0_93 = arith.constant 0 : index
    %84 = vector.load %arg10[%c0_92, %c0_93] : memref<1x128xf32, #tpu.memory_space<vmem>>, vector<1x128xf32>
    %85 = vector.broadcast %84 : vector<1x128xf32> to vector<2x128xf32>
    %86 = arith.addf %83, %85 : vector<2x128xf32>
    %c0_94 = arith.constant 0 : index
    %c0_95 = arith.constant 0 : index
    %87 = vector.load %arg11[%c0_94, %c0_95] : memref<2x128xf32, #tpu.memory_space<vmem>>, vector<2x128xf32>
    tpu.vector_store %arg11[%c0_94, %c0_95], %86 {strides = array<i32>} : memref<2x128xf32, #tpu.memory_space<vmem>>, vector<2x128xf32>,
    return
  }
}

</mosaic_0001>

<llo_original>
// kernel: qnet_forward.1
$region0: #{qnet_forward.1}
  #allocation0 [shape = 'u32[]', space=smem, size = 0x4, offset = 0x4, fixed_abs, tag = 'smem constant byte address 0x4 - core index']
  #allocation1 [shape = 'u32[144,128]{1,0:T(1,128)}', space=vmem, size = 0x12000, scoped, tag = 'internal scratch']
  #allocation2 [shape = 'f32[122,128]{1,0:T(8,128)}', space=vmem, size = 0x10000, scoped, tag = 'scratch operand']
  #allocation3 [shape = 'f32[114,64]{1,0:T(8,128)}', space=vmem, size = 0xf000, scoped, tag = 'scratch operand']
  #allocation4 [shape = 'f32[98,64]{1,0:T(8,128)}', space=vmem, size = 0xd000, scoped, tag = 'scratch operand']
  %s0 = inlined_call_operand.vmem [shape: f32[122,432], index: 0, kind: input, shape index: {}]
  %s1 = inlined_call_operand.vmem [shape: f32[432,128], index: 1, kind: input, shape index: {}]
  %s2 = inlined_call_operand.vmem [shape: f32[1,128], index: 2, kind: input, shape index: {}]
  %s3 = inlined_call_operand.vmem [shape: f32[512,64], index: 3, kind: input, shape index: {}]
  %s4 = inlined_call_operand.vmem [shape: f32[1,64], index: 4, kind: input, shape index: {}]
  %s5 = inlined_call_operand.vmem [shape: f32[576,64], index: 5, kind: input, shape index: {}]
  %s6 = inlined_call_operand.vmem [shape: f32[1,64], index: 6, kind: input, shape index: {}]
  %s7 = inlined_call_operand.vmem [shape: f32[1024,512], index: 7, kind: input, shape index: {}]
  %s8 = inlined_call_operand.vmem [shape: f32[1,512], index: 8, kind: input, shape index: {}]
  %s9 = inlined_call_operand.vmem [shape: f32[512,128], index: 9, kind: input, shape index: {}]
  %s10 = inlined_call_operand.vmem [shape: f32[1,128], index: 10, kind: input, shape index: {}]
  %s11 = inlined_call_operand.hbm [shape: f32[2,128], index: 11, kind: output, shape index: {}]
  %s12 = sld [smem:[#allocation0]]
  $region54: #{qnet_forward.1} parent=0
    _
  %s14 = ssub.s32 1, %s12
  %s15 = scalar_select 0, %s14, %s12
  $region1: #{qnet_forward.1} parent=0
    #allocation5 [shape = 'u8[1024]{0}', space=vmem, size = 0x400, scoped, tag = 'output window, operand 0, single buffered']
    #allocation6 [shape = 's32[1]{0}', space=sflag, size = 0x4, scoped, tag = 'scoped memory for qnet_forward.1']
    %16 = vsyncpa [#allocation6], 0
    // Predicated region
    $region2: #{qnet_forward.1} parent=1 // pred_check
      _
    $region3: #{qnet_forward.1} parent=1 // pred_check_branch
      %18 = sbr.rel (0) target = $region5
    $region4: #{qnet_forward.1} parent=1 // pred_region
      _
    $region5: #{qnet_forward.1} parent=1 // pred_fallthru
      _
    // Predicated region
    $region6: #{qnet_forward.1} parent=1 // pred_check
      _
    $region7: #{qnet_forward.1} parent=1 // pred_check_branch
      %20 = sbr.rel (0) target = $region9
    $region8: #{qnet_forward.1} parent=1 // pred_region
      _
    $region9: #{qnet_forward.1} parent=1 // pred_fallthru
      _
    // Predicated region
    $region10: #{qnet_forward.1} parent=1 // pred_check
      _
    $region11: #{qnet_forward.1} parent=1 // pred_check_branch
      %22 = sbr.rel (0) target = $region13
    $region12: #{qnet_forward.1} parent=1 // pred_region
      _
    $region13: #{qnet_forward.1} parent=1 // pred_fallthru
      _
    // Predicated region
    $region14: #{qnet_forward.1} parent=1 // pred_check
      _
    $region15: #{qnet_forward.1} parent=1 // pred_check_branch
      %24 = sbr.rel (0) target = $region17
    $region16: #{qnet_forward.1} parent=1 // pred_region
      _
    $region17: #{qnet_forward.1} parent=1 // pred_fallthru
      _
    // Predicated region
    $region18: #{qnet_forward.1} parent=1 // pred_check
      _
    $region19: #{qnet_forward.1} parent=1 // pred_check_branch
      %26 = sbr.rel (0) target = $region21
    $region20: #{qnet_forward.1} parent=1 // pred_region
      _
    $region21: #{qnet_forward.1} parent=1 // pred_fallthru
      _
    // Predicated region
    $region22: #{qnet_forward.1} parent=1 // pred_check
      _
    $region23: #{qnet_forward.1} parent=1 // pred_check_branch
      %28 = sbr.rel (0) target = $region25
    $region24: #{qnet_forward.1} parent=1 // pred_region
      _
    $region25: #{qnet_forward.1} parent=1 // pred_fallthru
      _
    // Predicated region
    $region26: #{qnet_forward.1} parent=1 // pred_check
      _
    $region27: #{qnet_forward.1} parent=1 // pred_check_branch
      %30 = sbr.rel (0) target = $region29
    $region28: #{qnet_forward.1} parent=1 // pred_region
      _
    $region29: #{qnet_forward.1} parent=1 // pred_fallthru
      _
    // Predicated region
    $region30: #{qnet_forward.1} parent=1 // pred_check
      _
    $region31: #{qnet_forward.1} parent=1 // pred_check_branch
      %32 = sbr.rel (0) target = $region33
    $region32: #{qnet_forward.1} parent=1 // pred_region
      _
    $region33: #{qnet_forward.1} parent=1 // pred_fallthru
      _
    // Predicated region
    $region34: #{qnet_forward.1} parent=1 // pred_check
      _
    $region35: #{qnet_forward.1} parent=1 // pred_check_branch
      %34 = sbr.rel (0) target = $region37
    $region36: #{qnet_forward.1} parent=1 // pred_region
      _
    $region37: #{qnet_forward.1} parent=1 // pred_fallthru
      _
    // Predicated region
    $region38: #{qnet_forward.1} parent=1 // pred_check
      _
    $region39: #{qnet_forward.1} parent=1 // pred_check_branch
      %36 = sbr.rel (0) target = $region41
    $region40: #{qnet_forward.1} parent=1 // pred_region
      _
    $region41: #{qnet_forward.1} parent=1 // pred_fallthru
      _
    // Predicated region
    $region42: #{qnet_forward.1} parent=1 // pred_check
      _
    $region43: #{qnet_forward.1} parent=1 // pred_check_branch
      %38 = sbr.rel (0) target = $region45
    $region44: #{qnet_forward.1} parent=1 // pred_region
      _
    $region45: #{qnet_forward.1} parent=1 // pred_fallthru
      _
    %v39 = vld [vmem:[%s0] sm:$0xff]
    %v40 = vld [vmem:[%s0 + $0x8] sm:$0xff]
    %v41 = vld [vmem:[%s0 + $0x10] sm:$0xff]
    %v42 = vld [vmem:[%s0 + $0x18] sm:$0xff]
    %v43 = vld [vmem:[%s0 + $0x20] sm:$0xff]
    %v44 = vld [vmem:[%s0 + $0x28] sm:$0xff]
    %v45 = vld [vmem:[%s0 + $0x30] sm:$0xff]
    %v46 = vld [vmem:[%s0 + $0x38] sm:$0xff]
    %v47 = vld [vmem:[%s0 + $0x40] sm:$0xff]
    %v48 = vld [vmem:[%s0 + $0x48] sm:$0xff]
    %v49 = vld [vmem:[%s0 + $0x50] sm:$0xff]
    %v50 = vld [vmem:[%s0 + $0x58] sm:$0xff]
    %v51 = vld [vmem:[%s0 + $0x60] sm:$0xff]
    %v52 = vld [vmem:[%s0 + $0x68] sm:$0xff]
    %v53 = vld [vmem:[%s0 + $0x70] sm:$0xff]
    %v54 = vld [vmem:[%s0 + $0x78] sm:$0xff]
    %v55 = vld [vmem:[%s0 + $0x80] sm:$0xff]
    %v56 = vld [vmem:[%s0 + $0x88] sm:$0xff]
    %v57 = vld [vmem:[%s0 + $0x90] sm:$0xff]
    %v58 = vld [vmem:[%s0 + $0x98] sm:$0xff]
    %v59 = vld [vmem:[%s0 + $0xa0] sm:$0xff]
    %v60 = vld [vmem:[%s0 + $0xa8] sm:$0xff]
    %v61 = vld [vmem:[%s0 + $0xb0] sm:$0xff]
    %v62 = vld [vmem:[%s0 + $0xb8] sm:$0xff]
    %v63 = vld [vmem:[%s0 + $0xc0] sm:$0xff]
    %v64 = vld [vmem:[%s0 + $0xc8] sm:$0xff]
    %v65 = vld [vmem:[%s0 + $0xd0] sm:$0xff]
    %v66 = vld [vmem:[%s0 + $0xd8] sm:$0xff]
    %v67 = vld [vmem:[%s0 + $0xe0] sm:$0xff]
    %v68 = vld [vmem:[%s0 + $0xe8] sm:$0xff]
    %v69 = vld [vmem:[%s0 + $0xf0] sm:$0xff]
    %v70 = vld [vmem:[%s0 + $0xf8] sm:$0xff]
    %v71 = vld [vmem:[%s0 + $0x100] sm:$0xff]
    %v72 = vld [vmem:[%s0 + $0x108] sm:$0xff]
    %v73 = vld [vmem:[%s0 + $0x110] sm:$0xff]
    %v74 = vld [vmem:[%s0 + $0x118] sm:$0xff]
    %v75 = vld [vmem:[%s0 + $0x120] sm:$0xff]
    %v76 = vld [vmem:[%s0 + $0x128] sm:$0xff]
    %v77 = vld [vmem:[%s0 + $0x130] sm:$0xff]
    %v78 = vld [vmem:[%s0 + $0x138] sm:$0xff]
    %v79 = vld [vmem:[%s0 + $0x140] sm:$0xff]
    %v80 = vld [vmem:[%s0 + $0x148] sm:$0xff]
    %v81 = vld [vmem:[%s0 + $0x150] sm:$0xff]
    %v82 = vld [vmem:[%s0 + $0x158] sm:$0xff]
    %v83 = vld [vmem:[%s0 + $0x160] sm:$0xff]
    %v84 = vld [vmem:[%s0 + $0x168] sm:$0xff]
    %v85 = vld [vmem:[%s0 + $0x170] sm:$0xff]
    %v86 = vld [vmem:[%s0 + $0x178] sm:$0xff]
    %v87 = vld [vmem:[%s0 + $0x180] sm:$0xff]
    %v88 = vld [vmem:[%s0 + $0x188] sm:$0xff]
    %v89 = vld [vmem:[%s0 + $0x190] sm:$0xff]
    %v90 = vld [vmem:[%s0 + $0x198] sm:$0xff]
    %v91 = vld [vmem:[%s0 + $0x1a0] sm:$0xff]
    %v92 = vld [vmem:[%s0 + $0x1a8] sm:$0xff]
    %v93 = vld [vmem:[%s0 + $0x1b0] sm:$0xff]
    %v94 = vld [vmem:[%s0 + $0x1b8] sm:$0xff]
    %v95 = vld [vmem:[%s0 + $0x1c0] sm:$0xff]
    %v96 = vld [vmem:[%s0 + $0x1c8] sm:$0xff]
    %v97 = vld [vmem:[%s0 + $0x1d0] sm:$0xff]
    %v98 = vld [vmem:[%s0 + $0x1d8] sm:$0xff]
    %v99 = vld [vmem:[%s0 + $0x1e0] sm:$0x3]
    %v100 = vld [vmem:[%s0 + $0x1e8] sm:$0x3]
    %v101 = vld [vmem:[%s0 + $0x1f0] sm:$0x3]
    %v102 = vld [vmem:[%s0 + $0x1f8] sm:$0x3]
    %v103 = vld [vmem:[%s1] sm:$0xff]
    %v104 = vld [vmem:[%s1 + $0x8] sm:$0xff]
    %v105 = vld [vmem:[%s1 + $0x10] sm:$0xff]
    %v106 = vld [vmem:[%s1 + $0x18] sm:$0xff]
    %v107 = vld [vmem:[%s1 + $0x20] sm:$0xff]
    %v108 = vld [vmem:[%s1 + $0x28] sm:$0xff]
    %v109 = vld [vmem:[%s1 + $0x30] sm:$0xff]
    %v110 = vld [vmem:[%s1 + $0x38] sm:$0xff]
    %v111 = vld [vmem:[%s1 + $0x40] sm:$0xff]
    %v112 = vld [vmem:[%s1 + $0x48] sm:$0xff]
    %v113 = vld [vmem:[%s1 + $0x50] sm:$0xff]
    %v114 = vld [vmem:[%s1 + $0x58] sm:$0xff]
    %v115 = vld [vmem:[%s1 + $0x60] sm:$0xff]
    %v116 = vld [vmem:[%s1 + $0x68] sm:$0xff]
    %v117 = vld [vmem:[%s1 + $0x70] sm:$0xff]
    %v118 = vld [vmem:[%s1 + $0x78] sm:$0xff]
    %v119 = vld [vmem:[%s1 + $0x80] sm:$0xff]
    %v120 = vld [vmem:[%s1 + $0x88] sm:$0xff]
    %v121 = vld [vmem:[%s1 + $0x90] sm:$0xff]
    %v122 = vld [vmem:[%s1 + $0x98] sm:$0xff]
    %v123 = vld [vmem:[%s1 + $0xa0] sm:$0xff]
    %v124 = vld [vmem:[%s1 + $0xa8] sm:$0xff]
    %v125 = vld [vmem:[%s1 + $0xb0] sm:$0xff]
    %v126 = vld [vmem:[%s1 + $0xb8] sm:$0xff]
    %v127 = vld [vmem:[%s1 + $0xc0] sm:$0xff]
    %v128 = vld [vmem:[%s1 + $0xc8] sm:$0xff]
    %v129 = vld [vmem:[%s1 + $0xd0] sm:$0xff]
    %v130 = vld [vmem:[%s1 + $0xd8] sm:$0xff]
    %v131 = vld [vmem:[%s1 + $0xe0] sm:$0xff]
    %v132 = vld [vmem:[%s1 + $0xe8] sm:$0xff]
    %v133 = vld [vmem:[%s1 + $0xf0] sm:$0xff]
    %v134 = vld [vmem:[%s1 + $0xf8] sm:$0xff]
    %v135 = vld [vmem:[%s1 + $0x100] sm:$0xff]
    %v136 = vld [vmem:[%s1 + $0x108] sm:$0xff]
    %v137 = vld [vmem:[%s1 + $0x110] sm:$0xff]
    %v138 = vld [vmem:[%s1 + $0x118] sm:$0xff]
    %v139 = vld [vmem:[%s1 + $0x120] sm:$0xff]
    %v140 = vld [vmem:[%s1 + $0x128] sm:$0xff]
    %v141 = vld [vmem:[%s1 + $0x130] sm:$0xff]
    %v142 = vld [vmem:[%s1 + $0x138] sm:$0xff]
    %v143 = vld [vmem:[%s1 + $0x140] sm:$0xff]
    %v144 = vld [vmem:[%s1 + $0x148] sm:$0xff]
    %v145 = vld [vmem:[%s1 + $0x150] sm:$0xff]
    %v146 = vld [vmem:[%s1 + $0x158] sm:$0xff]
    %v147 = vld [vmem:[%s1 + $0x160] sm:$0xff]
    %v148 = vld [vmem:[%s1 + $0x168] sm:$0xff]
    %v149 = vld [vmem:[%s1 + $0x170] sm:$0xff]
    %v150 = vld [vmem:[%s1 + $0x178] sm:$0xff]
    %v151 = vld [vmem:[%s1 + $0x180] sm:$0xff]
    %v152 = vld [vmem:[%s1 + $0x188] sm:$0xff]
    %v153 = vld [vmem:[%s1 + $0x190] sm:$0xff]
    %v154 = vld [vmem:[%s1 + $0x198] sm:$0xff]
    %v155 = vld [vmem:[%s1 + $0x1a0] sm:$0xff]
    %v156 = vld [vmem:[%s1 + $0x1a8] sm:$0xff]
    %v157 = vld [vmem:[%s2] sm:$0x1]
    %v159 = vlaneseq
    %v160 = vshrl.u32 %v159, 7
    %v161 = vsub.s32 0, %v160
    %v162 = vrot.slane %v157, %v161
    %vm164 = vcmask 392192
    %v166 = vsel %vm164, %v42, 0
    %v169 = vsel %vm164, %v46, 0
    %v172 = vsel %vm164, %v50, 0
    %v175 = vsel %vm164, %v54, 0
    %v178 = vsel %vm164, %v58, 0
    %v181 = vsel %vm164, %v62, 0
    %v184 = vsel %vm164, %v66, 0
    %v187 = vsel %vm164, %v70, 0
    %v190 = vsel %vm164, %v74, 0
    %v193 = vsel %vm164, %v78, 0
    %v196 = vsel %vm164, %v82, 0
    %v199 = vsel %vm164, %v86, 0
    %v202 = vsel %vm164, %v90, 0
    %v205 = vsel %vm164, %v94, 0
    %v208 = vsel %vm164, %v98, 0
    %v211 = vsel %vm164, %v102, 0
    %213 = vmatprep.subr.mxu0 0.0
    %214 = vmatpush1.msra.mxu0 %v118
    %215 = vmatprep.subr.mxu0 0.0
    %216 = vmatpush1.msra.mxu0 %v117
    %217 = vmatprep.subr.mxu0 0.0
    %218 = vmatpush1.msra.mxu0 %v116
    %219 = vmatprep.subr.mxu0 0.0
    %220 = vmatpush1.msra.mxu0 %v115
    %221 = vmatprep.subr.mxu0 0.0
    %222 = vmatpush1.msra.mxu0 %v114
    %223 = vmatprep.subr.mxu0 0.0
    %224 = vmatpush1.msra.mxu0 %v113
    %225 = vmatprep.subr.mxu0 0.0
    %226 = vmatpush1.msra.mxu0 %v112
    %227 = vmatprep.subr.mxu0 0.0
    %228 = vmatpush1.msra.mxu0 %v111
    %229 = vmatprep.subr.mxu0 0.0
    %230 = vmatpush1.msra.mxu0 %v110
    %231 = vmatprep.subr.mxu0 0.0
    %232 = vmatpush1.msra.mxu0 %v109
    %233 = vmatprep.subr.mxu0 0.0
    %234 = vmatpush1.msra.mxu0 %v108
    %235 = vmatprep.subr.mxu0 0.0
    %236 = vmatpush1.msra.mxu0 %v107
    %237 = vmatprep.subr.mxu0 0.0
    %238 = vmatpush1.msra.mxu0 %v106
    %239 = vmatprep.subr.mxu0 0.0
    %240 = vmatpush1.msra.mxu0 %v105
    %241 = vmatprep.subr.mxu0 0.0
    %242 = vmatpush1.msra.mxu0 %v104
    %243 = vmatprep.subr.mxu0 0.0
    %244 = vmatpush1.msra.mxu0 %v103
    %245 = vmatprep.subr.mxu0 0.0
    %246 = vmatpush2.msra.mxu0 %v134
    %247 = vmatprep.subr.mxu0 0.0
    %248 = vmatpush2.msra.mxu0 %v133
    %249 = vmatprep.subr.mxu0 0.0
    %250 = vmatpush2.msra.mxu0 %v132
    %251 = vmatprep.subr.mxu0 0.0
    %252 = vmatpush2.msra.mxu0 %v131
    %253 = vmatprep.subr.mxu0 0.0
    %254 = vmatpush2.msra.mxu0 %v130
    %255 = vmatprep.subr.mxu0 0.0
    %256 = vmatpush2.msra.mxu0 %v129
    %257 = vmatprep.subr.mxu0 0.0
    %258 = vmatpush2.msra.mxu0 %v128
    %259 = vmatprep.subr.mxu0 0.0
    %260 = vmatpush2.msra.mxu0 %v127
    %261 = vmatprep.subr.mxu0 0.0
    %262 = vmatpush2.msra.mxu0 %v126
    %263 = vmatprep.subr.mxu0 0.0
    %264 = vmatpush2.msra.mxu0 %v125
    %265 = vmatprep.subr.mxu0 0.0
    %266 = vmatpush2.msra.mxu0 %v124
    %267 = vmatprep.subr.mxu0 0.0
    %268 = vmatpush2.msra.mxu0 %v123
    %269 = vmatprep.subr.mxu0 0.0
    %270 = vmatpush2.msra.mxu0 %v122
    %271 = vmatprep.subr.mxu0 0.0
    %272 = vmatpush2.msra.mxu0 %v121
    %273 = vmatprep.subr.mxu0 0.0
    %274 = vmatpush2.msra.mxu0 %v120
    %275 = vmatprep.subr.mxu0 0.0
    %276 = vmatpush2.msra.mxu0 %v119
    %277 = vmatprep.mubr.f32.mxu0 %v40
    %278 = vmatmul.mubr.f32.gmra.mxu0 %v39
    %v279 = vpop.f32.mrf.mxu0
    %v280 = vadd.f32 %v162, %v279
    %v281 = vpop.f32.mrf.mxu0
    %282 = vmatprep.mubr.f32.mxu0 %v44
    %283 = vmatmul.mubr.f32.gmra.mxu0 %v43
    %v284 = vpop.f32.mrf.mxu0
    %v285 = vadd.f32 %v162, %v284
    %v286 = vpop.f32.mrf.mxu0
    %287 = vmatprep.mubr.f32.mxu0 %v48
    %288 = vmatmul.mubr.f32.gmra.mxu0 %v47
    %v289 = vpop.f32.mrf.mxu0
    %v290 = vadd.f32 %v162, %v289
    %v291 = vpop.f32.mrf.mxu0
    %292 = vmatprep.mubr.f32.mxu0 %v52
    %293 = vmatmul.mubr.f32.gmra.mxu0 %v51
    %v294 = vpop.f32.mrf.mxu0
    %v295 = vadd.f32 %v162, %v294
    %v296 = vpop.f32.mrf.mxu0
    %297 = vmatprep.mubr.f32.mxu0 %v56
    %298 = vmatmul.mubr.f32.gmra.mxu0 %v55
    %v299 = vpop.f32.mrf.mxu0
    %v300 = vadd.f32 %v162, %v299
    %v301 = vpop.f32.mrf.mxu0
    %302 = vmatprep.mubr.f32.mxu0 %v60
    %303 = vmatmul.mubr.f32.gmra.mxu0 %v59
    %v304 = vpop.f32.mrf.mxu0
    %v305 = vadd.f32 %v162, %v304
    %v306 = vpop.f32.mrf.mxu0
    %307 = vmatprep.mubr.f32.mxu0 %v64
    %308 = vmatmul.mubr.f32.gmra.mxu0 %v63
    %v309 = vpop.f32.mrf.mxu0
    %v310 = vadd.f32 %v162, %v309
    %v311 = vpop.f32.mrf.mxu0
    %312 = vmatprep.mubr.f32.mxu0 %v68
    %313 = vmatmul.mubr.f32.gmra.mxu0 %v67
    %v314 = vpop.f32.mrf.mxu0
    %v315 = vadd.f32 %v162, %v314
    %v316 = vpop.f32.mrf.mxu0
    %317 = vmatprep.mubr.f32.mxu0 %v72
    %318 = vmatmul.mubr.f32.gmra.mxu0 %v71
    %v319 = vpop.f32.mrf.mxu0
    %v320 = vadd.f32 %v162, %v319
    %v321 = vpop.f32.mrf.mxu0
    %322 = vmatprep.mubr.f32.mxu0 %v76
    %323 = vmatmul.mubr.f32.gmra.mxu0 %v75
    %v324 = vpop.f32.mrf.mxu0
    %v325 = vadd.f32 %v162, %v324
    %v326 = vpop.f32.mrf.mxu0
    %327 = vmatprep.mubr.f32.mxu0 %v80
    %328 = vmatmul.mubr.f32.gmra.mxu0 %v79
    %v329 = vpop.f32.mrf.mxu0
    %v330 = vadd.f32 %v162, %v329
    %v331 = vpop.f32.mrf.mxu0
    %332 = vmatprep.mubr.f32.mxu0 %v84
    %333 = vmatmul.mubr.f32.gmra.mxu0 %v83
    %v334 = vpop.f32.mrf.mxu0
    %v335 = vadd.f32 %v162, %v334
    %v336 = vpop.f32.mrf.mxu0
    %337 = vmatprep.mubr.f32.mxu0 %v88
    %338 = vmatmul.mubr.f32.gmra.mxu0 %v87
    %v339 = vpop.f32.mrf.mxu0
    %v340 = vadd.f32 %v162, %v339
    %v341 = vpop.f32.mrf.mxu0
    %342 = vmatprep.mubr.f32.mxu0 %v92
    %343 = vmatmul.mubr.f32.gmra.mxu0 %v91
    %v344 = vpop.f32.mrf.mxu0
    %v345 = vadd.f32 %v162, %v344
    %v346 = vpop.f32.mrf.mxu0
    %347 = vmatprep.mubr.f32.mxu0 %v96
    %348 = vmatmul.mubr.f32.gmra.mxu0 %v95
    %v349 = vpop.f32.mrf.mxu0
    %v350 = vadd.f32 %v162, %v349
    %v351 = vpop.f32.mrf.mxu0
    %352 = vmatprep.mubr.f32.mxu0 %v100
    %353 = vmatmul.mubr.f32.gmra.mxu0 %v99
    %v354 = vpop.f32.mrf.mxu0
    %v355 = vadd.f32 %v162, %v354
    %v356 = vpop.f32.mrf.mxu0
    %357 = vdwg.mxu0
    %358 = vmatprep.subr.mxu0 0.0
    %359 = vmatpush1.msra.mxu0 %v150
    %360 = vmatprep.subr.mxu0 0.0
    %361 = vmatpush1.msra.mxu0 %v149
    %362 = vmatprep.subr.mxu0 0.0
    %363 = vmatpush1.msra.mxu0 %v148
    %364 = vmatprep.subr.mxu0 0.0
    %365 = vmatpush1.msra.mxu0 %v147
    %366 = vmatprep.subr.mxu0 0.0
    %367 = vmatpush1.msra.mxu0 %v146
    %368 = vmatprep.subr.mxu0 0.0
    %369 = vmatpush1.msra.mxu0 %v145
    %370 = vmatprep.subr.mxu0 0.0
    %371 = vmatpush1.msra.mxu0 %v144
    %372 = vmatprep.subr.mxu0 0.0
    %373 = vmatpush1.msra.mxu0 %v143
    %374 = vmatprep.subr.mxu0 0.0
    %375 = vmatpush1.msra.mxu0 %v142
    %376 = vmatprep.subr.mxu0 0.0
    %377 = vmatpush1.msra.mxu0 %v141
    %378 = vmatprep.subr.mxu0 0.0
    %379 = vmatpush1.msra.mxu0 %v140
    %380 = vmatprep.subr.mxu0 0.0
    %381 = vmatpush1.msra.mxu0 %v139
    %382 = vmatprep.subr.mxu0 0.0
    %383 = vmatpush1.msra.mxu0 %v138
    %384 = vmatprep.subr.mxu0 0.0
    %385 = vmatpush1.msra.mxu0 %v137
    %386 = vmatprep.subr.mxu0 0.0
    %387 = vmatpush1.msra.mxu0 %v136
    %388 = vmatprep.subr.mxu0 0.0
    %389 = vmatpush1.msra.mxu0 %v135
    %390 = vmatprep.subr.mxu0 0.0
    %391 = vmatpush2.msra.mxu0 0.0
    %392 = vmatprep.subr.mxu0 0.0
    %393 = vmatpush2.msra.mxu0 0.0
    %394 = vmatprep.subr.mxu0 0.0
    %395 = vmatpush2.msra.mxu0 0.0
    %396 = vmatprep.subr.mxu0 0.0
    %397 = vmatpush2.msra.mxu0 0.0
    %398 = vmatprep.subr.mxu0 0.0
    %399 = vmatpush2.msra.mxu0 0.0
    %400 = vmatprep.subr.mxu0 0.0
    %401 = vmatpush2.msra.mxu0 0.0
    %402 = vmatprep.subr.mxu0 0.0
    %403 = vmatpush2.msra.mxu0 0.0
    %404 = vmatprep.subr.mxu0 0.0
    %405 = vmatpush2.msra.mxu0 0.0
    %406 = vmatprep.subr.mxu0 0.0
    %407 = vmatpush2.msra.mxu0 0.0
    %408 = vmatprep.subr.mxu0 0.0
    %409 = vmatpush2.msra.mxu0 0.0
    %410 = vmatprep.subr.mxu0 0.0
    %411 = vmatpush2.msra.mxu0 %v156
    %412 = vmatprep.subr.mxu0 0.0
    %413 = vmatpush2.msra.mxu0 %v155
    %414 = vmatprep.subr.mxu0 0.0
    %415 = vmatpush2.msra.mxu0 %v154
    %416 = vmatprep.subr.mxu0 0.0
    %417 = vmatpush2.msra.mxu0 %v153
    %418 = vmatprep.subr.mxu0 0.0
    %419 = vmatpush2.msra.mxu0 %v152
    %420 = vmatprep.subr.mxu0 0.0
    %421 = vmatpush2.msra.mxu0 %v151
    %422 = vmatprep.mubr.f32.mxu0 %v166
    %423 = vmatmul.mubr.f32.gmra.mxu0 %v41
    %v424 = vpop.f32.mrf.mxu0
    %v425 = vadd.f32 %v280, %v424
    %v426 = vpop.f32.mrf.mxu0
    %427 = vmatprep.mubr.f32.mxu0 %v169
    %428 = vmatmul.mubr.f32.gmra.mxu0 %v45
    %v429 = vpop.f32.mrf.mxu0
    %v430 = vadd.f32 %v285, %v429
    %v431 = vpop.f32.mrf.mxu0
    %432 = vmatprep.mubr.f32.mxu0 %v172
    %433 = vmatmul.mubr.f32.gmra.mxu0 %v49
    %v434 = vpop.f32.mrf.mxu0
    %v435 = vadd.f32 %v290, %v434
    %v436 = vpop.f32.mrf.mxu0
    %437 = vmatprep.mubr.f32.mxu0 %v175
    %438 = vmatmul.mubr.f32.gmra.mxu0 %v53
    %v439 = vpop.f32.mrf.mxu0
    %v440 = vadd.f32 %v295, %v439
    %v441 = vpop.f32.mrf.mxu0
    %442 = vmatprep.mubr.f32.mxu0 %v178
    %443 = vmatmul.mubr.f32.gmra.mxu0 %v57
    %v444 = vpop.f32.mrf.mxu0
    %v445 = vadd.f32 %v300, %v444
    %v446 = vpop.f32.mrf.mxu0
    %447 = vmatprep.mubr.f32.mxu0 %v181
    %448 = vmatmul.mubr.f32.gmra.mxu0 %v61
    %v449 = vpop.f32.mrf.mxu0
    %v450 = vadd.f32 %v305, %v449
    %v451 = vpop.f32.mrf.mxu0
    %452 = vmatprep.mubr.f32.mxu0 %v184
    %453 = vmatmul.mubr.f32.gmra.mxu0 %v65
    %v454 = vpop.f32.mrf.mxu0
    %v455 = vadd.f32 %v310, %v454
    %v456 = vpop.f32.mrf.mxu0
    %457 = vmatprep.mubr.f32.mxu0 %v187
    %458 = vmatmul.mubr.f32.gmra.mxu0 %v69
    %v459 = vpop.f32.mrf.mxu0
    %v460 = vadd.f32 %v315, %v459
    %v461 = vpop.f32.mrf.mxu0
    %462 = vmatprep.mubr.f32.mxu0 %v190
    %463 = vmatmul.mubr.f32.gmra.mxu0 %v73
    %v464 = vpop.f32.mrf.mxu0
    %v465 = vadd.f32 %v320, %v464
    %v466 = vpop.f32.mrf.mxu0
    %467 = vmatprep.mubr.f32.mxu0 %v193
    %468 = vmatmul.mubr.f32.gmra.mxu0 %v77
    %v469 = vpop.f32.mrf.mxu0
    %v470 = vadd.f32 %v325, %v469
    %v471 = vpop.f32.mrf.mxu0
    %472 = vmatprep.mubr.f32.mxu0 %v196
    %473 = vmatmul.mubr.f32.gmra.mxu0 %v81
    %v474 = vpop.f32.mrf.mxu0
    %v475 = vadd.f32 %v330, %v474
    %v476 = vpop.f32.mrf.mxu0
    %477 = vmatprep.mubr.f32.mxu0 %v199
    %478 = vmatmul.mubr.f32.gmra.mxu0 %v85
    %v479 = vpop.f32.mrf.mxu0
    %v480 = vadd.f32 %v335, %v479
    %v481 = vpop.f32.mrf.mxu0
    %482 = vmatprep.mubr.f32.mxu0 %v202
    %483 = vmatmul.mubr.f32.gmra.mxu0 %v89
    %v484 = vpop.f32.mrf.mxu0
    %v485 = vadd.f32 %v340, %v484
    %v486 = vpop.f32.mrf.mxu0
    %487 = vmatprep.mubr.f32.mxu0 %v205
    %488 = vmatmul.mubr.f32.gmra.mxu0 %v93
    %v489 = vpop.f32.mrf.mxu0
    %v490 = vadd.f32 %v345, %v489
    %v491 = vpop.f32.mrf.mxu0
    %492 = vmatprep.mubr.f32.mxu0 %v208
    %493 = vmatmul.mubr.f32.gmra.mxu0 %v97
    %v494 = vpop.f32.mrf.mxu0
    %v495 = vadd.f32 %v350, %v494
    %v496 = vpop.f32.mrf.mxu0
    %497 = vmatprep.mubr.f32.mxu0 %v211
    %498 = vmatmul.mubr.f32.gmra.mxu0 %v101
    %v499 = vpop.f32.mrf.mxu0
    %v500 = vadd.f32 %v355, %v499
    %v501 = vpop.f32.mrf.mxu0
    %502 = vdwg.mxu0
    %v503 = vmax.f32 %v425, 0.0
    %v504 = vmax.f32 %v430, 0.0
    %v505 = vmax.f32 %v435, 0.0
    %v506 = vmax.f32 %v440, 0.0
    %v507 = vmax.f32 %v445, 0.0
    %v508 = vmax.f32 %v450, 0.0
    %v509 = vmax.f32 %v455, 0.0
    %v510 = vmax.f32 %v460, 0.0
    %v511 = vmax.f32 %v465, 0.0
    %v512 = vmax.f32 %v470, 0.0
    %v513 = vmax.f32 %v475, 0.0
    %v514 = vmax.f32 %v480, 0.0
    %v515 = vmax.f32 %v485, 0.0
    %v516 = vmax.f32 %v490, 0.0
    %v517 = vmax.f32 %v495, 0.0
    %v518 = vmax.f32 %v500, 0.0
    %519 = vst [vmem:[#allocation2] sm:$0xff] %v503
    %520 = vst [vmem:[#allocation2 + $0x8] sm:$0xff] %v504
    %521 = vst [vmem:[#allocation2 + $0x10] sm:$0xff] %v505
    %522 = vst [vmem:[#allocation2 + $0x18] sm:$0xff] %v506
    %523 = vst [vmem:[#allocation2 + $0x20] sm:$0xff] %v507
    %524 = vst [vmem:[#allocation2 + $0x28] sm:$0xff] %v508
    %525 = vst [vmem:[#allocation2 + $0x30] sm:$0xff] %v509
    %526 = vst [vmem:[#allocation2 + $0x38] sm:$0xff] %v510
    %527 = vst [vmem:[#allocation2 + $0x40] sm:$0xff] %v511
    %528 = vst [vmem:[#allocation2 + $0x48] sm:$0xff] %v512
    %529 = vst [vmem:[#allocation2 + $0x50] sm:$0xff] %v513
    %530 = vst [vmem:[#allocation2 + $0x58] sm:$0xff] %v514
    %531 = vst [vmem:[#allocation2 + $0x60] sm:$0xff] %v515
    %532 = vst [vmem:[#allocation2 + $0x68] sm:$0xff] %v516
    %533 = vst [vmem:[#allocation2 + $0x70] sm:$0xff] %v517
    %534 = vst [vmem:[#allocation2 + $0x78] sm:$0x3] %v518
    %v535 = vld [vmem:[#allocation2] sm:$0xff]
    %v536 = vld [vmem:[#allocation2 + $0x8] sm:$0xff]
    %v537 = vld [vmem:[#allocation2 + $0x10] sm:$0xff]
    %v538 = vld [vmem:[#allocation2 + $0x18] sm:$0xff]
    %v539 = vld [vmem:[#allocation2 + $0x20] sm:$0xff]
    %v540 = vld [vmem:[#allocation2 + $0x28] sm:$0xff]
    %v541 = vld [vmem:[#allocation2 + $0x30] sm:$0xff]
    %v542 = vld [vmem:[#allocation2 + $0x38] sm:$0xff]
    %v543 = vld [vmem:[#allocation2 + $0x40] sm:$0xff]
    %v544 = vld [vmem:[#allocation2 + $0x48] sm:$0xff]
    %v545 = vld [vmem:[#allocation2 + $0x50] sm:$0xff]
    %v546 = vld [vmem:[#allocation2 + $0x58] sm:$0xff]
    %v547 = vld [vmem:[#allocation2 + $0x60] sm:$0xff]
    %v548 = vld [vmem:[#allocation2 + $0x68] sm:$0xff]
    %v549 = vld [vmem:[#allocation2 + $0x70] sm:$0x3]
    %v550 = vld [vmem:[#allocation2 + $0x1] sm:$0xff]
    %v551 = vld [vmem:[#allocation2 + $0x9] sm:$0xff]
    %v552 = vld [vmem:[#allocation2 + $0x11] sm:$0xff]
    %v553 = vld [vmem:[#allocation2 + $0x19] sm:$0xff]
    %v554 = vld [vmem:[#allocation2 + $0x21] sm:$0xff]
    %v555 = vld [vmem:[#allocation2 + $0x29] sm:$0xff]
    %v556 = vld [vmem:[#allocation2 + $0x31] sm:$0xff]
    %v557 = vld [vmem:[#allocation2 + $0x39] sm:$0xff]
    %v558 = vld [vmem:[#allocation2 + $0x41] sm:$0xff]
    %v559 = vld [vmem:[#allocation2 + $0x49] sm:$0xff]
    %v560 = vld [vmem:[#allocation2 + $0x51] sm:$0xff]
    %v561 = vld [vmem:[#allocation2 + $0x59] sm:$0xff]
    %v562 = vld [vmem:[#allocation2 + $0x61] sm:$0xff]
    %v563 = vld [vmem:[#allocation2 + $0x69] sm:$0xff]
    %v564 = vld [vmem:[#allocation2 + $0x71] sm:$0x3]
    %v565 = vld [vmem:[#allocation2 + $0x7] sm:$0xff]
    %v566 = vld [vmem:[#allocation2 + $0xf] sm:$0xff]
    %v567 = vld [vmem:[#allocation2 + $0x17] sm:$0xff]
    %v568 = vld [vmem:[#allocation2 + $0x1f] sm:$0xff]
    %v569 = vld [vmem:[#allocation2 + $0x27] sm:$0xff]
    %v570 = vld [vmem:[#allocation2 + $0x2f] sm:$0xff]
    %v571 = vld [vmem:[#allocation2 + $0x37] sm:$0xff]
    %v572 = vld [vmem:[#allocation2 + $0x3f] sm:$0xff]
    %v573 = vld [vmem:[#allocation2 + $0x47] sm:$0xff]
    %v574 = vld [vmem:[#allocation2 + $0x4f] sm:$0xff]
    %v575 = vld [vmem:[#allocation2 + $0x57] sm:$0xff]
    %v576 = vld [vmem:[#allocation2 + $0x5f] sm:$0xff]
    %v577 = vld [vmem:[#allocation2 + $0x67] sm:$0xff]
    %v578 = vld [vmem:[#allocation2 + $0x6f] sm:$0xff]
    %v579 = vld [vmem:[#allocation2 + $0x77] sm:$0x3]
    %v580 = vld [vmem:[#allocation2 + $0x8] sm:$0xff]
    %v581 = vld [vmem:[#allocation2 + $0x10] sm:$0xff]
    %v582 = vld [vmem:[#allocation2 + $0x18] sm:$0xff]
    %v583 = vld [vmem:[#allocation2 + $0x20] sm:$0xff]
    %v584 = vld [vmem:[#allocation2 + $0x28] sm:$0xff]
    %v585 = vld [vmem:[#allocation2 + $0x30] sm:$0xff]
    %v586 = vld [vmem:[#allocation2 + $0x38] sm:$0xff]
    %v587 = vld [vmem:[#allocation2 + $0x40] sm:$0xff]
    %v588 = vld [vmem:[#allocation2 + $0x48] sm:$0xff]
    %v589 = vld [vmem:[#allocation2 + $0x50] sm:$0xff]
    %v590 = vld [vmem:[#allocation2 + $0x58] sm:$0xff]
    %v591 = vld [vmem:[#allocation2 + $0x60] sm:$0xff]
    %v592 = vld [vmem:[#allocation2 + $0x68] sm:$0xff]
    %v593 = vld [vmem:[#allocation2 + $0x70] sm:$0xff]
    %v594 = vld [vmem:[#allocation2 + $0x78] sm:$0x3]
    %v595 = vld [vmem:[%s3] sm:$0xff]
    %v596 = vld [vmem:[%s3 + $0x8] sm:$0xff]
    %v597 = vld [vmem:[%s3 + $0x10] sm:$0xff]
    %v598 = vld [vmem:[%s3 + $0x18] sm:$0xff]
    %v599 = vld [vmem:[%s3 + $0x20] sm:$0xff]
    %v600 = vld [vmem:[%s3 + $0x28] sm:$0xff]
    %v601 = vld [vmem:[%s3 + $0x30] sm:$0xff]
    %v602 = vld [vmem:[%s3 + $0x38] sm:$0xff]
    %v603 = vld [vmem:[%s3 + $0x40] sm:$0xff]
    %v604 = vld [vmem:[%s3 + $0x48] sm:$0xff]
    %v605 = vld [vmem:[%s3 + $0x50] sm:$0xff]
    %v606 = vld [vmem:[%s3 + $0x58] sm:$0xff]
    %v607 = vld [vmem:[%s3 + $0x60] sm:$0xff]
    %v608 = vld [vmem:[%s3 + $0x68] sm:$0xff]
    %v609 = vld [vmem:[%s3 + $0x70] sm:$0xff]
    %v610 = vld [vmem:[%s3 + $0x78] sm:$0xff]
    %v611 = vld [vmem:[%s3 + $0x80] sm:$0xff]
    %v612 = vld [vmem:[%s3 + $0x88] sm:$0xff]
    %v613 = vld [vmem:[%s3 + $0x90] sm:$0xff]
    %v614 = vld [vmem:[%s3 + $0x98] sm:$0xff]
    %v615 = vld [vmem:[%s3 + $0xa0] sm:$0xff]
    %v616 = vld [vmem:[%s3 + $0xa8] sm:$0xff]
    %v617 = vld [vmem:[%s3 + $0xb0] sm:$0xff]
    %v618 = vld [vmem:[%s3 + $0xb8] sm:$0xff]
    %v619 = vld [vmem:[%s3 + $0xc0] sm:$0xff]
    %v620 = vld [vmem:[%s3 + $0xc8] sm:$0xff]
    %v621 = vld [vmem:[%s3 + $0xd0] sm:$0xff]
    %v622 = vld [vmem:[%s3 + $0xd8] sm:$0xff]
    %v623 = vld [vmem:[%s3 + $0xe0] sm:$0xff]
    %v624 = vld [vmem:[%s3 + $0xe8] sm:$0xff]
    %v625 = vld [vmem:[%s3 + $0xf0] sm:$0xff]
    %v626 = vld [vmem:[%s3 + $0xf8] sm:$0xff]
    %v627 = vld [vmem:[%s3 + $0x100] sm:$0xff]
    %v628 = vld [vmem:[%s3 + $0x108] sm:$0xff]
    %v629 = vld [vmem:[%s3 + $0x110] sm:$0xff]
    %v630 = vld [vmem:[%s3 + $0x118] sm:$0xff]
    %v631 = vld [vmem:[%s3 + $0x120] sm:$0xff]
    %v632 = vld [vmem:[%s3 + $0x128] sm:$0xff]
    %v633 = vld [vmem:[%s3 + $0x130] sm:$0xff]
    %v634 = vld [vmem:[%s3 + $0x138] sm:$0xff]
    %v635 = vld [vmem:[%s3 + $0x140] sm:$0xff]
    %v636 = vld [vmem:[%s3 + $0x148] sm:$0xff]
    %v637 = vld [vmem:[%s3 + $0x150] sm:$0xff]
    %v638 = vld [vmem:[%s3 + $0x158] sm:$0xff]
    %v639 = vld [vmem:[%s3 + $0x160] sm:$0xff]
    %v640 = vld [vmem:[%s3 + $0x168] sm:$0xff]
    %v641 = vld [vmem:[%s3 + $0x170] sm:$0xff]
    %v642 = vld [vmem:[%s3 + $0x178] sm:$0xff]
    %v643 = vld [vmem:[%s3 + $0x180] sm:$0xff]
    %v644 = vld [vmem:[%s3 + $0x188] sm:$0xff]
    %v645 = vld [vmem:[%s3 + $0x190] sm:$0xff]
    %v646 = vld [vmem:[%s3 + $0x198] sm:$0xff]
    %v647 = vld [vmem:[%s3 + $0x1a0] sm:$0xff]
    %v648 = vld [vmem:[%s3 + $0x1a8] sm:$0xff]
    %v649 = vld [vmem:[%s3 + $0x1b0] sm:$0xff]
    %v650 = vld [vmem:[%s3 + $0x1b8] sm:$0xff]
    %v651 = vld [vmem:[%s3 + $0x1c0] sm:$0xff]
    %v652 = vld [vmem:[%s3 + $0x1c8] sm:$0xff]
    %v653 = vld [vmem:[%s3 + $0x1d0] sm:$0xff]
    %v654 = vld [vmem:[%s3 + $0x1d8] sm:$0xff]
    %v655 = vld [vmem:[%s3 + $0x1e0] sm:$0xff]
    %v656 = vld [vmem:[%s3 + $0x1e8] sm:$0xff]
    %v657 = vld [vmem:[%s3 + $0x1f0] sm:$0xff]
    %v658 = vld [vmem:[%s3 + $0x1f8] sm:$0xff]
    %v659 = vld [vmem:[%s4] sm:$0x1]
    %v661 = vlaneseq
    %v662 = vshrl.u32 %v661, 7
    %v663 = vsub.s32 0, %v662
    %v664 = vrot.slane %v659, %v663
    %666 = vmatprep.subr.mxu0 0.0
    %667 = vmatpush1.msra.mxu0 %v610
    %668 = vmatprep.subr.mxu0 0.0
    %669 = vmatpush1.msra.mxu0 %v609
    %670 = vmatprep.subr.mxu0 0.0
    %671 = vmatpush1.msra.mxu0 %v608
    %672 = vmatprep.subr.mxu0 0.0
    %673 = vmatpush1.msra.mxu0 %v607
    %674 = vmatprep.subr.mxu0 0.0
    %675 = vmatpush1.msra.mxu0 %v606
    %676 = vmatprep.subr.mxu0 0.0
    %677 = vmatpush1.msra.mxu0 %v605
    %678 = vmatprep.subr.mxu0 0.0
    %679 = vmatpush1.msra.mxu0 %v604
    %680 = vmatprep.subr.mxu0 0.0
    %681 = vmatpush1.msra.mxu0 %v603
    %682 = vmatprep.subr.mxu0 0.0
    %683 = vmatpush1.msra.mxu0 %v602
    %684 = vmatprep.subr.mxu0 0.0
    %685 = vmatpush1.msra.mxu0 %v601
    %686 = vmatprep.subr.mxu0 0.0
    %687 = vmatpush1.msra.mxu0 %v600
    %688 = vmatprep.subr.mxu0 0.0
    %689 = vmatpush1.msra.mxu0 %v599
    %690 = vmatprep.subr.mxu0 0.0
    %691 = vmatpush1.msra.mxu0 %v598
    %692 = vmatprep.subr.mxu0 0.0
    %693 = vmatpush1.msra.mxu0 %v597
    %694 = vmatprep.subr.mxu0 0.0
    %695 = vmatpush1.msra.mxu0 %v596
    %696 = vmatprep.subr.mxu0 0.0
    %697 = vmatpush1.msra.mxu0 %v595
    %698 = vmatprep.subr.mxu0 0.0
    %699 = vmatpush2.msra.mxu0 %v626
    %700 = vmatprep.subr.mxu0 0.0
    %701 = vmatpush2.msra.mxu0 %v625
    %702 = vmatprep.subr.mxu0 0.0
    %703 = vmatpush2.msra.mxu0 %v624
    %704 = vmatprep.subr.mxu0 0.0
    %705 = vmatpush2.msra.mxu0 %v623
    %706 = vmatprep.subr.mxu0 0.0
    %707 = vmatpush2.msra.mxu0 %v622
    %708 = vmatprep.subr.mxu0 0.0
    %709 = vmatpush2.msra.mxu0 %v621
    %710 = vmatprep.subr.mxu0 0.0
    %711 = vmatpush2.msra.mxu0 %v620
    %712 = vmatprep.subr.mxu0 0.0
    %713 = vmatpush2.msra.mxu0 %v619
    %714 = vmatprep.subr.mxu0 0.0
    %715 = vmatpush2.msra.mxu0 %v618
    %716 = vmatprep.subr.mxu0 0.0
    %717 = vmatpush2.msra.mxu0 %v617
    %718 = vmatprep.subr.mxu0 0.0
    %719 = vmatpush2.msra.mxu0 %v616
    %720 = vmatprep.subr.mxu0 0.0
    %721 = vmatpush2.msra.mxu0 %v615
    %722 = vmatprep.subr.mxu0 0.0
    %723 = vmatpush2.msra.mxu0 %v614
    %724 = vmatprep.subr.mxu0 0.0
    %725 = vmatpush2.msra.mxu0 %v613
    %726 = vmatprep.subr.mxu0 0.0
    %727 = vmatpush2.msra.mxu0 %v612
    %728 = vmatprep.subr.mxu0 0.0
    %729 = vmatpush2.msra.mxu0 %v611
    %730 = vmatprep.mubr.f32.mxu0 %v550
    %731 = vmatmul.mubr.f32.gmra.mxu0 %v535
    %v732 = vpop.f32.mrf.mxu0
    %v733 = vadd.f32 %v664, %v732
    %v734 = vpop.f32.mrf.mxu0
    %735 = vmatprep.mubr.f32.mxu0 %v551
    %736 = vmatmul.mubr.f32.gmra.mxu0 %v536
    %v737 = vpop.f32.mrf.mxu0
    %v738 = vadd.f32 %v664, %v737
    %v739 = vpop.f32.mrf.mxu0
    %740 = vmatprep.mubr.f32.mxu0 %v552
    %741 = vmatmul.mubr.f32.gmra.mxu0 %v537
    %v742 = vpop.f32.mrf.mxu0
    %v743 = vadd.f32 %v664, %v742
    %v744 = vpop.f32.mrf.mxu0
    %745 = vmatprep.mubr.f32.mxu0 %v553
    %746 = vmatmul.mubr.f32.gmra.mxu0 %v538
    %v747 = vpop.f32.mrf.mxu0
    %v748 = vadd.f32 %v664, %v747
    %v749 = vpop.f32.mrf.mxu0
    %750 = vmatprep.mubr.f32.mxu0 %v554
    %751 = vmatmul.mubr.f32.gmra.mxu0 %v539
    %v752 = vpop.f32.mrf.mxu0
    %v753 = vadd.f32 %v664, %v752
    %v754 = vpop.f32.mrf.mxu0
    %755 = vmatprep.mubr.f32.mxu0 %v555
    %756 = vmatmul.mubr.f32.gmra.mxu0 %v540
    %v757 = vpop.f32.mrf.mxu0
    %v758 = vadd.f32 %v664, %v757
    %v759 = vpop.f32.mrf.mxu0
    %760 = vmatprep.mubr.f32.mxu0 %v556
    %761 = vmatmul.mubr.f32.gmra.mxu0 %v541
    %v762 = vpop.f32.mrf.mxu0
    %v763 = vadd.f32 %v664, %v762
    %v764 = vpop.f32.mrf.mxu0
    %765 = vmatprep.mubr.f32.mxu0 %v557
    %766 = vmatmul.mubr.f32.gmra.mxu0 %v542
    %v767 = vpop.f32.mrf.mxu0
    %v768 = vadd.f32 %v664, %v767
    %v769 = vpop.f32.mrf.mxu0
    %770 = vmatprep.mubr.f32.mxu0 %v558
    %771 = vmatmul.mubr.f32.gmra.mxu0 %v543
    %v772 = vpop.f32.mrf.mxu0
    %v773 = vadd.f32 %v664, %v772
    %v774 = vpop.f32.mrf.mxu0
    %775 = vmatprep.mubr.f32.mxu0 %v559
    %776 = vmatmul.mubr.f32.gmra.mxu0 %v544
    %v777 = vpop.f32.mrf.mxu0
    %v778 = vadd.f32 %v664, %v777
    %v779 = vpop.f32.mrf.mxu0
    %780 = vmatprep.mubr.f32.mxu0 %v560
    %781 = vmatmul.mubr.f32.gmra.mxu0 %v545
    %v782 = vpop.f32.mrf.mxu0
    %v783 = vadd.f32 %v664, %v782
    %v784 = vpop.f32.mrf.mxu0
    %785 = vmatprep.mubr.f32.mxu0 %v561
    %786 = vmatmul.mubr.f32.gmra.mxu0 %v546
    %v787 = vpop.f32.mrf.mxu0
    %v788 = vadd.f32 %v664, %v787
    %v789 = vpop.f32.mrf.mxu0
    %790 = vmatprep.mubr.f32.mxu0 %v562
    %791 = vmatmul.mubr.f32.gmra.mxu0 %v547
    %v792 = vpop.f32.mrf.mxu0
    %v793 = vadd.f32 %v664, %v792
    %v794 = vpop.f32.mrf.mxu0
    %795 = vmatprep.mubr.f32.mxu0 %v563
    %796 = vmatmul.mubr.f32.gmra.mxu0 %v548
    %v797 = vpop.f32.mrf.mxu0
    %v798 = vadd.f32 %v664, %v797
    %v799 = vpop.f32.mrf.mxu0
    %800 = vmatprep.mubr.f32.mxu0 %v564
    %801 = vmatmul.mubr.f32.gmra.mxu0 %v549
    %v802 = vpop.f32.mrf.mxu0
    %v803 = vadd.f32 %v664, %v802
    %v804 = vpop.f32.mrf.mxu0
    %805 = vdwg.mxu0
    %806 = vmatprep.subr.mxu0 0.0
    %807 = vmatpush1.msra.mxu0 %v642
    %808 = vmatprep.subr.mxu0 0.0
    %809 = vmatpush1.msra.mxu0 %v641
    %810 = vmatprep.subr.mxu0 0.0
    %811 = vmatpush1.msra.mxu0 %v640
    %812 = vmatprep.subr.mxu0 0.0
    %813 = vmatpush1.msra.mxu0 %v639
    %814 = vmatprep.subr.mxu0 0.0
    %815 = vmatpush1.msra.mxu0 %v638
    %816 = vmatprep.subr.mxu0 0.0
    %817 = vmatpush1.msra.mxu0 %v637
    %818 = vmatprep.subr.mxu0 0.0
    %819 = vmatpush1.msra.mxu0 %v636
    %820 = vmatprep.subr.mxu0 0.0
    %821 = vmatpush1.msra.mxu0 %v635
    %822 = vmatprep.subr.mxu0 0.0
    %823 = vmatpush1.msra.mxu0 %v634
    %824 = vmatprep.subr.mxu0 0.0
    %825 = vmatpush1.msra.mxu0 %v633
    %826 = vmatprep.subr.mxu0 0.0
    %827 = vmatpush1.msra.mxu0 %v632
    %828 = vmatprep.subr.mxu0 0.0
    %829 = vmatpush1.msra.mxu0 %v631
    %830 = vmatprep.subr.mxu0 0.0
    %831 = vmatpush1.msra.mxu0 %v630
    %832 = vmatprep.subr.mxu0 0.0
    %833 = vmatpush1.msra.mxu0 %v629
    %834 = vmatprep.subr.mxu0 0.0
    %835 = vmatpush1.msra.mxu0 %v628
    %836 = vmatprep.subr.mxu0 0.0
    %837 = vmatpush1.msra.mxu0 %v627
    %838 = vmatprep.subr.mxu0 0.0
    %839 = vmatpush2.msra.mxu0 %v658
    %840 = vmatprep.subr.mxu0 0.0
    %841 = vmatpush2.msra.mxu0 %v657
    %842 = vmatprep.subr.mxu0 0.0
    %843 = vmatpush2.msra.mxu0 %v656
    %844 = vmatprep.subr.mxu0 0.0
    %845 = vmatpush2.msra.mxu0 %v655
    %846 = vmatprep.subr.mxu0 0.0
    %847 = vmatpush2.msra.mxu0 %v654
    %848 = vmatprep.subr.mxu0 0.0
    %849 = vmatpush2.msra.mxu0 %v653
    %850 = vmatprep.subr.mxu0 0.0
    %851 = vmatpush2.msra.mxu0 %v652
    %852 = vmatprep.subr.mxu0 0.0
    %853 = vmatpush2.msra.mxu0 %v651
    %854 = vmatprep.subr.mxu0 0.0
    %855 = vmatpush2.msra.mxu0 %v650
    %856 = vmatprep.subr.mxu0 0.0
    %857 = vmatpush2.msra.mxu0 %v649
    %858 = vmatprep.subr.mxu0 0.0
    %859 = vmatpush2.msra.mxu0 %v648
    %860 = vmatprep.subr.mxu0 0.0
    %861 = vmatpush2.msra.mxu0 %v647
    %862 = vmatprep.subr.mxu0 0.0
    %863 = vmatpush2.msra.mxu0 %v646
    %864 = vmatprep.subr.mxu0 0.0
    %865 = vmatpush2.msra.mxu0 %v645
    %866 = vmatprep.subr.mxu0 0.0
    %867 = vmatpush2.msra.mxu0 %v644
    %868 = vmatprep.subr.mxu0 0.0
    %869 = vmatpush2.msra.mxu0 %v643
    %870 = vmatprep.mubr.f32.mxu0 %v580
    %871 = vmatmul.mubr.f32.gmra.mxu0 %v565
    %v872 = vpop.f32.mrf.mxu0
    %v873 = vadd.f32 %v733, %v872
    %v874 = vpop.f32.mrf.mxu0
    %875 = vmatprep.mubr.f32.mxu0 %v581
    %876 = vmatmul.mubr.f32.gmra.mxu0 %v566
    %v877 = vpop.f32.mrf.mxu0
    %v878 = vadd.f32 %v738, %v877
    %v879 = vpop.f32.mrf.mxu0
    %880 = vmatprep.mubr.f32.mxu0 %v582
    %881 = vmatmul.mubr.f32.gmra.mxu0 %v567
    %v882 = vpop.f32.mrf.mxu0
    %v883 = vadd.f32 %v743, %v882
    %v884 = vpop.f32.mrf.mxu0
    %885 = vmatprep.mubr.f32.mxu0 %v583
    %886 = vmatmul.mubr.f32.gmra.mxu0 %v568
    %v887 = vpop.f32.mrf.mxu0
    %v888 = vadd.f32 %v748, %v887
    %v889 = vpop.f32.mrf.mxu0
    %890 = vmatprep.mubr.f32.mxu0 %v584
    %891 = vmatmul.mubr.f32.gmra.mxu0 %v569
    %v892 = vpop.f32.mrf.mxu0
    %v893 = vadd.f32 %v753, %v892
    %v894 = vpop.f32.mrf.mxu0
    %895 = vmatprep.mubr.f32.mxu0 %v585
    %896 = vmatmul.mubr.f32.gmra.mxu0 %v570
    %v897 = vpop.f32.mrf.mxu0
    %v898 = vadd.f32 %v758, %v897
    %v899 = vpop.f32.mrf.mxu0
    %900 = vmatprep.mubr.f32.mxu0 %v586
    %901 = vmatmul.mubr.f32.gmra.mxu0 %v571
    %v902 = vpop.f32.mrf.mxu0
    %v903 = vadd.f32 %v763, %v902
    %v904 = vpop.f32.mrf.mxu0
    %905 = vmatprep.mubr.f32.mxu0 %v587
    %906 = vmatmul.mubr.f32.gmra.mxu0 %v572
    %v907 = vpop.f32.mrf.mxu0
    %v908 = vadd.f32 %v768, %v907
    %v909 = vpop.f32.mrf.mxu0
    %910 = vmatprep.mubr.f32.mxu0 %v588
    %911 = vmatmul.mubr.f32.gmra.mxu0 %v573
    %v912 = vpop.f32.mrf.mxu0
    %v913 = vadd.f32 %v773, %v912
    %v914 = vpop.f32.mrf.mxu0
    %915 = vmatprep.mubr.f32.mxu0 %v589
    %916 = vmatmul.mubr.f32.gmra.mxu0 %v574
    %v917 = vpop.f32.mrf.mxu0
    %v918 = vadd.f32 %v778, %v917
    %v919 = vpop.f32.mrf.mxu0
    %920 = vmatprep.mubr.f32.mxu0 %v590
    %921 = vmatmul.mubr.f32.gmra.mxu0 %v575
    %v922 = vpop.f32.mrf.mxu0
    %v923 = vadd.f32 %v783, %v922
    %v924 = vpop.f32.mrf.mxu0
    %925 = vmatprep.mubr.f32.mxu0 %v591
    %926 = vmatmul.mubr.f32.gmra.mxu0 %v576
    %v927 = vpop.f32.mrf.mxu0
    %v928 = vadd.f32 %v788, %v927
    %v929 = vpop.f32.mrf.mxu0
    %930 = vmatprep.mubr.f32.mxu0 %v592
    %931 = vmatmul.mubr.f32.gmra.mxu0 %v577
    %v932 = vpop.f32.mrf.mxu0
    %v933 = vadd.f32 %v793, %v932
    %v934 = vpop.f32.mrf.mxu0
    %935 = vmatprep.mubr.f32.mxu0 %v593
    %936 = vmatmul.mubr.f32.gmra.mxu0 %v578
    %v937 = vpop.f32.mrf.mxu0
    %v938 = vadd.f32 %v798, %v937
    %v939 = vpop.f32.mrf.mxu0
    %940 = vmatprep.mubr.f32.mxu0 %v594
    %941 = vmatmul.mubr.f32.gmra.mxu0 %v579
    %v942 = vpop.f32.mrf.mxu0
    %v943 = vadd.f32 %v803, %v942
    %v944 = vpop.f32.mrf.mxu0
    %945 = vdwg.mxu0
    %v946 = vmax.f32 %v873, 0.0
    %v947 = vmax.f32 %v878, 0.0
    %v948 = vmax.f32 %v883, 0.0
    %v949 = vmax.f32 %v888, 0.0
    %v950 = vmax.f32 %v893, 0.0
    %v951 = vmax.f32 %v898, 0.0
    %v952 = vmax.f32 %v903, 0.0
    %v953 = vmax.f32 %v908, 0.0
    %v954 = vmax.f32 %v913, 0.0
    %v955 = vmax.f32 %v918, 0.0
    %v956 = vmax.f32 %v923, 0.0
    %v957 = vmax.f32 %v928, 0.0
    %v958 = vmax.f32 %v933, 0.0
    %v959 = vmax.f32 %v938, 0.0
    %v960 = vmax.f32 %v943, 0.0
    %vm961 = vcmask 523264
    %962 = vst.msk [vmem:[#allocation3] sm:$0xff] %vm961, %v946
    %963 = vst.msk [vmem:[#allocation3 + $0x8] sm:$0xff] %vm961, %v947
    %964 = vst.msk [vmem:[#allocation3 + $0x10] sm:$0xff] %vm961, %v948
    %965 = vst.msk [vmem:[#allocation3 + $0x18] sm:$0xff] %vm961, %v949
    %966 = vst.msk [vmem:[#allocation3 + $0x20] sm:$0xff] %vm961, %v950
    %967 = vst.msk [vmem:[#allocation3 + $0x28] sm:$0xff] %vm961, %v951
    %968 = vst.msk [vmem:[#allocation3 + $0x30] sm:$0xff] %vm961, %v952
    %969 = vst.msk [vmem:[#allocation3 + $0x38] sm:$0xff] %vm961, %v953
    %970 = vst.msk [vmem:[#allocation3 + $0x40] sm:$0xff] %vm961, %v954
    %971 = vst.msk [vmem:[#allocation3 + $0x48] sm:$0xff] %vm961, %v955
    %972 = vst.msk [vmem:[#allocation3 + $0x50] sm:$0xff] %vm961, %v956
    %973 = vst.msk [vmem:[#allocation3 + $0x58] sm:$0xff] %vm961, %v957
    %974 = vst.msk [vmem:[#allocation3 + $0x60] sm:$0xff] %vm961, %v958
    %975 = vst.msk [vmem:[#allocation3 + $0x68] sm:$0xff] %vm961, %v959
    %vm976 = vcmask 517120
    %977 = vst.msk [vmem:[#allocation3 + $0x70] sm:$0x3] %vm976, %v960
    %v978 = vld [vmem:[#allocation3] sm:$0xff]
    %v979 = vld [vmem:[#allocation3 + $0x8] sm:$0xff]
    %v980 = vld [vmem:[#allocation3 + $0x10] sm:$0xff]
    %v981 = vld [vmem:[#allocation3 + $0x18] sm:$0xff]
    %v982 = vld [vmem:[#allocation3 + $0x20] sm:$0xff]
    %v983 = vld [vmem:[#allocation3 + $0x28] sm:$0xff]
    %v984 = vld [vmem:[#allocation3 + $0x30] sm:$0xff]
    %v985 = vld [vmem:[#allocation3 + $0x38] sm:$0xff]
    %v986 = vld [vmem:[#allocation3 + $0x40] sm:$0xff]
    %v987 = vld [vmem:[#allocation3 + $0x48] sm:$0xff]
    %v988 = vld [vmem:[#allocation3 + $0x50] sm:$0xff]
    %v989 = vld [vmem:[#allocation3 + $0x58] sm:$0xff]
    %v990 = vld [vmem:[#allocation3 + $0x60] sm:$0x3]
    %v991 = vld [vmem:[#allocation3 + $0x1] sm:$0xff]
    %v992 = vld [vmem:[#allocation3 + $0x9] sm:$0xff]
    %v993 = vld [vmem:[#allocation3 + $0x11] sm:$0xff]
    %v994 = vld [vmem:[#allocation3 + $0x19] sm:$0xff]
    %v995 = vld [vmem:[#allocation3 + $0x21] sm:$0xff]
    %v996 = vld [vmem:[#allocation3 + $0x29] sm:$0xff]
    %v997 = vld [vmem:[#allocation3 + $0x31] sm:$0xff]
    %v998 = vld [vmem:[#allocation3 + $0x39] sm:$0xff]
    %v999 = vld [vmem:[#allocation3 + $0x41] sm:$0xff]
    %v1000 = vld [vmem:[#allocation3 + $0x49] sm:$0xff]
    %v1001 = vld [vmem:[#allocation3 + $0x51] sm:$0xff]
    %v1002 = vld [vmem:[#allocation3 + $0x59] sm:$0xff]
    %v1003 = vld [vmem:[#allocation3 + $0x61] sm:$0x3]
    %v1004 = vld [vmem:[#allocation3 + $0x2] sm:$0xff]
    %v1005 = vld [vmem:[#allocation3 + $0xa] sm:$0xff]
    %v1006 = vld [vmem:[#allocation3 + $0x12] sm:$0xff]
    %v1007 = vld [vmem:[#allocation3 + $0x1a] sm:$0xff]
    %v1008 = vld [vmem:[#allocation3 + $0x22] sm:$0xff]
    %v1009 = vld [vmem:[#allocation3 + $0x2a] sm:$0xff]
    %v1010 = vld [vmem:[#allocation3 + $0x32] sm:$0xff]
    %v1011 = vld [vmem:[#allocation3 + $0x3a] sm:$0xff]
    %v1012 = vld [vmem:[#allocation3 + $0x42] sm:$0xff]
    %v1013 = vld [vmem:[#allocation3 + $0x4a] sm:$0xff]
    %v1014 = vld [vmem:[#allocation3 + $0x52] sm:$0xff]
    %v1015 = vld [vmem:[#allocation3 + $0x5a] sm:$0xff]
    %v1016 = vld [vmem:[#allocation3 + $0x62] sm:$0x3]
    %v1017 = vld [vmem:[#allocation3 + $0x7] sm:$0xff]
    %v1018 = vld [vmem:[#allocation3 + $0xf] sm:$0xff]
    %v1019 = vld [vmem:[#allocation3 + $0x17] sm:$0xff]
    %v1020 = vld [vmem:[#allocation3 + $0x1f] sm:$0xff]
    %v1021 = vld [vmem:[#allocation3 + $0x27] sm:$0xff]
    %v1022 = vld [vmem:[#allocation3 + $0x2f] sm:$0xff]
    %v1023 = vld [vmem:[#allocation3 + $0x37] sm:$0xff]
    %v1024 = vld [vmem:[#allocation3 + $0x3f] sm:$0xff]
    %v1025 = vld [vmem:[#allocation3 + $0x47] sm:$0xff]
    %v1026 = vld [vmem:[#allocation3 + $0x4f] sm:$0xff]
    %v1027 = vld [vmem:[#allocation3 + $0x57] sm:$0xff]
    %v1028 = vld [vmem:[#allocation3 + $0x5f] sm:$0xff]
    %v1029 = vld [vmem:[#allocation3 + $0x67] sm:$0x3]
    %v1030 = vld [vmem:[#allocation3 + $0x60] sm:$0xff]
    %v1031 = vld [vmem:[#allocation3 + $0x68] sm:$0x3]
    %v1032 = vld [vmem:[#allocation3 + $0x61] sm:$0xff]
    %v1033 = vld [vmem:[#allocation3 + $0x69] sm:$0x3]
    %v1034 = vld [vmem:[#allocation3 + $0xe] sm:$0xff]
    %v1035 = vld [vmem:[#allocation3 + $0x16] sm:$0xff]
    %v1036 = vld [vmem:[#allocation3 + $0x1e] sm:$0xff]
    %v1037 = vld [vmem:[#allocation3 + $0x26] sm:$0xff]
    %v1038 = vld [vmem:[#allocation3 + $0x2e] sm:$0xff]
    %v1039 = vld [vmem:[#allocation3 + $0x36] sm:$0xff]
    %v1040 = vld [vmem:[#allocation3 + $0x3e] sm:$0xff]
    %v1041 = vld [vmem:[#allocation3 + $0x46] sm:$0xff]
    %v1042 = vld [vmem:[#allocation3 + $0x4e] sm:$0xff]
    %v1043 = vld [vmem:[#allocation3 + $0x56] sm:$0xff]
    %v1044 = vld [vmem:[#allocation3 + $0x5e] sm:$0xff]
    %v1045 = vld [vmem:[#allocation3 + $0x66] sm:$0xff]
    %v1046 = vld [vmem:[#allocation3 + $0x6e] sm:$0x3]
    %v1047 = vld [vmem:[#allocation3 + $0x67] sm:$0xff]
    %v1048 = vld [vmem:[#allocation3 + $0x6f] sm:$0x3]
    %v1049 = vld [vmem:[#allocation3 + $0x68] sm:$0xff]
    %v1050 = vld [vmem:[#allocation3 + $0x70] sm:$0x3]
    %1064 = vrot.lane.b32.xlu0 %v991, 64
    %v1065 = vpop.permute.xlu0 %1064
    %1066 = vrot.lane.b32.xlu0 %v992, 64
    %v1067 = vpop.permute.xlu0 %1066
    %1068 = vrot.lane.b32.xlu0 %v993, 64
    %v1069 = vpop.permute.xlu0 %1068
    %1070 = vrot.lane.b32.xlu0 %v994, 64
    %v1071 = vpop.permute.xlu0 %1070
    %1072 = vrot.lane.b32.xlu0 %v995, 64
    %v1073 = vpop.permute.xlu0 %1072
    %1074 = vrot.lane.b32.xlu0 %v996, 64
    %v1075 = vpop.permute.xlu0 %1074
    %1076 = vrot.lane.b32.xlu0 %v997, 64
    %v1077 = vpop.permute.xlu0 %1076
    %1078 = vrot.lane.b32.xlu0 %v998, 64
    %v1079 = vpop.permute.xlu0 %1078
    %1080 = vrot.lane.b32.xlu0 %v999, 64
    %v1081 = vpop.permute.xlu0 %1080
    %1082 = vrot.lane.b32.xlu0 %v1000, 64
    %v1083 = vpop.permute.xlu0 %1082
    %1084 = vrot.lane.b32.xlu0 %v1001, 64
    %v1085 = vpop.permute.xlu0 %1084
    %1086 = vrot.lane.b32.xlu0 %v1002, 64
    %v1087 = vpop.permute.xlu0 %1086
    %1088 = vrot.lane.b32.xlu0 %v1003, 64
    %v1089 = vpop.permute.xlu0 %1088
    %1116 = vrot.lane.b32.xlu0 %v1017, 64
    %v1117 = vpop.permute.xlu0 %1116
    %1118 = vrot.lane.b32.xlu0 %v1018, 64
    %v1119 = vpop.permute.xlu0 %1118
    %1120 = vrot.lane.b32.xlu0 %v1019, 64
    %v1121 = vpop.permute.xlu0 %1120
    %1122 = vrot.lane.b32.xlu0 %v1020, 64
    %v1123 = vpop.permute.xlu0 %1122
    %1124 = vrot.lane.b32.xlu0 %v1021, 64
    %v1125 = vpop.permute.xlu0 %1124
    %1126 = vrot.lane.b32.xlu0 %v1022, 64
    %v1127 = vpop.permute.xlu0 %1126
    %1128 = vrot.lane.b32.xlu0 %v1023, 64
    %v1129 = vpop.permute.xlu0 %1128
    %1130 = vrot.lane.b32.xlu0 %v1024, 64
    %v1131 = vpop.permute.xlu0 %1130
    %1132 = vrot.lane.b32.xlu0 %v1025, 64
    %v1133 = vpop.permute.xlu0 %1132
    %1134 = vrot.lane.b32.xlu0 %v1026, 64
    %v1135 = vpop.permute.xlu0 %1134
    %1136 = vrot.lane.b32.xlu0 %v1027, 64
    %v1137 = vpop.permute.xlu0 %1136
    %1138 = vrot.lane.b32.xlu0 %v1028, 64
    %v1139 = vpop.permute.xlu0 %1138
    %1140 = vrot.lane.b32.xlu0 %v1029, 64
    %v1141 = vpop.permute.xlu0 %1140
    %1157 = vrot.lane.b32.xlu0 %v1032, 64
    %v1158 = vpop.permute.xlu0 %1157
    %1159 = vrot.lane.b32.xlu0 %v1033, 64
    %v1160 = vpop.permute.xlu0 %1159
    %1165 = vrot.lane.b32.xlu0 %v1047, 64
    %v1166 = vpop.permute.xlu0 %1165
    %1167 = vrot.lane.b32.xlu0 %v1048, 64
    %v1168 = vpop.permute.xlu0 %1167
    %v1171 = vsel %vm961, %v978, %v1065
    %v1172 = vsel %vm961, %v979, %v1067
    %v1173 = vsel %vm961, %v980, %v1069
    %v1174 = vsel %vm961, %v981, %v1071
    %v1175 = vsel %vm961, %v982, %v1073
    %v1176 = vsel %vm961, %v983, %v1075
    %v1177 = vsel %vm961, %v984, %v1077
    %v1178 = vsel %vm961, %v985, %v1079
    %v1179 = vsel %vm961, %v986, %v1081
    %v1180 = vsel %vm961, %v987, %v1083
    %v1181 = vsel %vm961, %v988, %v1085
    %v1182 = vsel %vm961, %v989, %v1087
    %v1183 = vsel %vm961, %v990, %v1089
    %v1184 = vsel %vm961, %v1004, %v1117
    %v1185 = vsel %vm961, %v1005, %v1119
    %v1186 = vsel %vm961, %v1006, %v1121
    %v1187 = vsel %vm961, %v1007, %v1123
    %v1188 = vsel %vm961, %v1008, %v1125
    %v1189 = vsel %vm961, %v1009, %v1127
    %v1190 = vsel %vm961, %v1010, %v1129
    %v1191 = vsel %vm961, %v1011, %v1131
    %v1192 = vsel %vm961, %v1012, %v1133
    %v1193 = vsel %vm961, %v1013, %v1135
    %v1194 = vsel %vm961, %v1014, %v1137
    %v1195 = vsel %vm961, %v1015, %v1139
    %v1196 = vsel %vm961, %v1016, %v1141
    %v1197 = vsel %vm961, %v1030, %v1158
    %v1198 = vsel %vm961, %v1031, %v1160
    %v1199 = vsel %vm961, %v1034, %v1119
    %v1200 = vsel %vm961, %v1035, %v1121
    %v1201 = vsel %vm961, %v1036, %v1123
    %v1202 = vsel %vm961, %v1037, %v1125
    %v1203 = vsel %vm961, %v1038, %v1127
    %v1204 = vsel %vm961, %v1039, %v1129
    %v1205 = vsel %vm961, %v1040, %v1131
    %v1206 = vsel %vm961, %v1041, %v1133
    %v1207 = vsel %vm961, %v1042, %v1135
    %v1208 = vsel %vm961, %v1043, %v1137
    %v1209 = vsel %vm961, %v1044, %v1139
    %v1210 = vsel %vm961, %v1045, %v1166
    %v1211 = vsel %vm961, %v1046, %v1168
    %v1212 = vld [vmem:[%s5] sm:$0xff]
    %v1213 = vld [vmem:[%s5 + $0x8] sm:$0xff]
    %v1214 = vld [vmem:[%s5 + $0x10] sm:$0xff]
    %v1215 = vld [vmem:[%s5 + $0x18] sm:$0xff]
    %v1216 = vld [vmem:[%s5 + $0x20] sm:$0xff]
    %v1217 = vld [vmem:[%s5 + $0x28] sm:$0xff]
    %v1218 = vld [vmem:[%s5 + $0x30] sm:$0xff]
    %v1219 = vld [vmem:[%s5 + $0x38] sm:$0xff]
    %v1220 = vld [vmem:[%s5 + $0x40] sm:$0xff]
    %v1221 = vld [vmem:[%s5 + $0x48] sm:$0xff]
    %v1222 = vld [vmem:[%s5 + $0x50] sm:$0xff]
    %v1223 = vld [vmem:[%s5 + $0x58] sm:$0xff]
    %v1224 = vld [vmem:[%s5 + $0x60] sm:$0xff]
    %v1225 = vld [vmem:[%s5 + $0x68] sm:$0xff]
    %v1226 = vld [vmem:[%s5 + $0x70] sm:$0xff]
    %v1227 = vld [vmem:[%s5 + $0x78] sm:$0xff]
    %v1228 = vld [vmem:[%s5 + $0x80] sm:$0xff]
    %v1229 = vld [vmem:[%s5 + $0x88] sm:$0xff]
    %v1230 = vld [vmem:[%s5 + $0x90] sm:$0xff]
    %v1231 = vld [vmem:[%s5 + $0x98] sm:$0xff]
    %v1232 = vld [vmem:[%s5 + $0xa0] sm:$0xff]
    %v1233 = vld [vmem:[%s5 + $0xa8] sm:$0xff]
    %v1234 = vld [vmem:[%s5 + $0xb0] sm:$0xff]
    %v1235 = vld [vmem:[%s5 + $0xb8] sm:$0xff]
    %v1236 = vld [vmem:[%s5 + $0xc0] sm:$0xff]
    %v1237 = vld [vmem:[%s5 + $0xc8] sm:$0xff]
    %v1238 = vld [vmem:[%s5 + $0xd0] sm:$0xff]
    %v1239 = vld [vmem:[%s5 + $0xd8] sm:$0xff]
    %v1240 = vld [vmem:[%s5 + $0xe0] sm:$0xff]
    %v1241 = vld [vmem:[%s5 + $0xe8] sm:$0xff]
    %v1242 = vld [vmem:[%s5 + $0xf0] sm:$0xff]
    %v1243 = vld [vmem:[%s5 + $0xf8] sm:$0xff]
    %v1244 = vld [vmem:[%s5 + $0x100] sm:$0xff]
    %v1245 = vld [vmem:[%s5 + $0x108] sm:$0xff]
    %v1246 = vld [vmem:[%s5 + $0x110] sm:$0xff]
    %v1247 = vld [vmem:[%s5 + $0x118] sm:$0xff]
    %v1248 = vld [vmem:[%s5 + $0x120] sm:$0xff]
    %v1249 = vld [vmem:[%s5 + $0x128] sm:$0xff]
    %v1250 = vld [vmem:[%s5 + $0x130] sm:$0xff]
    %v1251 = vld [vmem:[%s5 + $0x138] sm:$0xff]
    %v1252 = vld [vmem:[%s5 + $0x140] sm:$0xff]
    %v1253 = vld [vmem:[%s5 + $0x148] sm:$0xff]
    %v1254 = vld [vmem:[%s5 + $0x150] sm:$0xff]
    %v1255 = vld [vmem:[%s5 + $0x158] sm:$0xff]
    %v1256 = vld [vmem:[%s5 + $0x160] sm:$0xff]
    %v1257 = vld [vmem:[%s5 + $0x168] sm:$0xff]
    %v1258 = vld [vmem:[%s5 + $0x170] sm:$0xff]
    %v1259 = vld [vmem:[%s5 + $0x178] sm:$0xff]
    %v1260 = vld [vmem:[%s5 + $0x180] sm:$0xff]
    %v1261 = vld [vmem:[%s5 + $0x188] sm:$0xff]
    %v1262 = vld [vmem:[%s5 + $0x190] sm:$0xff]
    %v1263 = vld [vmem:[%s5 + $0x198] sm:$0xff]
    %v1264 = vld [vmem:[%s5 + $0x1a0] sm:$0xff]
    %v1265 = vld [vmem:[%s5 + $0x1a8] sm:$0xff]
    %v1266 = vld [vmem:[%s5 + $0x1b0] sm:$0xff]
    %v1267 = vld [vmem:[%s5 + $0x1b8] sm:$0xff]
    %v1268 = vld [vmem:[%s5 + $0x1c0] sm:$0xff]
    %v1269 = vld [vmem:[%s5 + $0x1c8] sm:$0xff]
    %v1270 = vld [vmem:[%s5 + $0x1d0] sm:$0xff]
    %v1271 = vld [vmem:[%s5 + $0x1d8] sm:$0xff]
    %v1272 = vld [vmem:[%s5 + $0x1e0] sm:$0xff]
    %v1273 = vld [vmem:[%s5 + $0x1e8] sm:$0xff]
    %v1274 = vld [vmem:[%s5 + $0x1f0] sm:$0xff]
    %v1275 = vld [vmem:[%s5 + $0x1f8] sm:$0xff]
    %v1276 = vld [vmem:[%s5 + $0x200] sm:$0xff]
    %v1277 = vld [vmem:[%s5 + $0x208] sm:$0xff]
    %v1278 = vld [vmem:[%s5 + $0x210] sm:$0xff]
    %v1279 = vld [vmem:[%s5 + $0x218] sm:$0xff]
    %v1280 = vld [vmem:[%s5 + $0x220] sm:$0xff]
    %v1281 = vld [vmem:[%s5 + $0x228] sm:$0xff]
    %v1282 = vld [vmem:[%s5 + $0x230] sm:$0xff]
    %v1283 = vld [vmem:[%s5 + $0x238] sm:$0xff]
    %v1284 = vld [vmem:[%s6] sm:$0x1]
    %v1286 = vlaneseq
    %v1287 = vshrl.u32 %v1286, 7
    %v1288 = vsub.s32 0, %v1287
    %v1289 = vrot.slane %v1284, %v1288
    %v1292 = vsel %vm961, %v980, 0
    %v1295 = vsel %vm961, %v981, 0
    %v1298 = vsel %vm961, %v982, 0
    %v1301 = vsel %vm961, %v983, 0
    %v1304 = vsel %vm961, %v984, 0
    %v1307 = vsel %vm961, %v985, 0
    %v1310 = vsel %vm961, %v986, 0
    %v1313 = vsel %vm961, %v987, 0
    %v1316 = vsel %vm961, %v988, 0
    %v1319 = vsel %vm961, %v989, 0
    %v1322 = vsel %vm961, %v1030, 0
    %v1325 = vsel %vm961, %v1049, 0
    %v1328 = vsel %vm961, %v1050, 0
    %1330 = vmatprep.subr.mxu0 0.0
    %1331 = vmatpush1.msra.mxu0 %v1227
    %1332 = vmatprep.subr.mxu0 0.0
    %1333 = vmatpush1.msra.mxu0 %v1226
    %1334 = vmatprep.subr.mxu0 0.0
    %1335 = vmatpush1.msra.mxu0 %v1225
    %1336 = vmatprep.subr.mxu0 0.0
    %1337 = vmatpush1.msra.mxu0 %v1224
    %1338 = vmatprep.subr.mxu0 0.0
    %1339 = vmatpush1.msra.mxu0 %v1223
    %1340 = vmatprep.subr.mxu0 0.0
    %1341 = vmatpush1.msra.mxu0 %v1222
    %1342 = vmatprep.subr.mxu0 0.0
    %1343 = vmatpush1.msra.mxu0 %v1221
    %1344 = vmatprep.subr.mxu0 0.0
    %1345 = vmatpush1.msra.mxu0 %v1220
    %1346 = vmatprep.subr.mxu0 0.0
    %1347 = vmatpush1.msra.mxu0 %v1219
    %1348 = vmatprep.subr.mxu0 0.0
    %1349 = vmatpush1.msra.mxu0 %v1218
    %1350 = vmatprep.subr.mxu0 0.0
    %1351 = vmatpush1.msra.mxu0 %v1217
    %1352 = vmatprep.subr.mxu0 0.0
    %1353 = vmatpush1.msra.mxu0 %v1216
    %1354 = vmatprep.subr.mxu0 0.0
    %1355 = vmatpush1.msra.mxu0 %v1215
    %1356 = vmatprep.subr.mxu0 0.0
    %1357 = vmatpush1.msra.mxu0 %v1214
    %1358 = vmatprep.subr.mxu0 0.0
    %1359 = vmatpush1.msra.mxu0 %v1213
    %1360 = vmatprep.subr.mxu0 0.0
    %1361 = vmatpush1.msra.mxu0 %v1212
    %1362 = vmatprep.subr.mxu0 0.0
    %1363 = vmatpush2.msra.mxu0 %v1243
    %1364 = vmatprep.subr.mxu0 0.0
    %1365 = vmatpush2.msra.mxu0 %v1242
    %1366 = vmatprep.subr.mxu0 0.0
    %1367 = vmatpush2.msra.mxu0 %v1241
    %1368 = vmatprep.subr.mxu0 0.0
    %1369 = vmatpush2.msra.mxu0 %v1240
    %1370 = vmatprep.subr.mxu0 0.0
    %1371 = vmatpush2.msra.mxu0 %v1239
    %1372 = vmatprep.subr.mxu0 0.0
    %1373 = vmatpush2.msra.mxu0 %v1238
    %1374 = vmatprep.subr.mxu0 0.0
    %1375 = vmatpush2.msra.mxu0 %v1237
    %1376 = vmatprep.subr.mxu0 0.0
    %1377 = vmatpush2.msra.mxu0 %v1236
    %1378 = vmatprep.subr.mxu0 0.0
    %1379 = vmatpush2.msra.mxu0 %v1235
    %1380 = vmatprep.subr.mxu0 0.0
    %1381 = vmatpush2.msra.mxu0 %v1234
    %1382 = vmatprep.subr.mxu0 0.0
    %1383 = vmatpush2.msra.mxu0 %v1233
    %1384 = vmatprep.subr.mxu0 0.0
    %1385 = vmatpush2.msra.mxu0 %v1232
    %1386 = vmatprep.subr.mxu0 0.0
    %1387 = vmatpush2.msra.mxu0 %v1231
    %1388 = vmatprep.subr.mxu0 0.0
    %1389 = vmatpush2.msra.mxu0 %v1230
    %1390 = vmatprep.subr.mxu0 0.0
    %1391 = vmatpush2.msra.mxu0 %v1229
    %1392 = vmatprep.subr.mxu0 0.0
    %1393 = vmatpush2.msra.mxu0 %v1228
    %1394 = vmatprep.mubr.f32.mxu0 %v1184
    %1395 = vmatmul.mubr.f32.gmra.mxu0 %v1171
    %v1396 = vpop.f32.mrf.mxu0
    %v1397 = vadd.f32 %v1289, %v1396
    %v1398 = vpop.f32.mrf.mxu0
    %1399 = vmatprep.mubr.f32.mxu0 %v1185
    %1400 = vmatmul.mubr.f32.gmra.mxu0 %v1172
    %v1401 = vpop.f32.mrf.mxu0
    %v1402 = vadd.f32 %v1289, %v1401
    %v1403 = vpop.f32.mrf.mxu0
    %1404 = vmatprep.mubr.f32.mxu0 %v1186
    %1405 = vmatmul.mubr.f32.gmra.mxu0 %v1173
    %v1406 = vpop.f32.mrf.mxu0
    %v1407 = vadd.f32 %v1289, %v1406
    %v1408 = vpop.f32.mrf.mxu0
    %1409 = vmatprep.mubr.f32.mxu0 %v1187
    %1410 = vmatmul.mubr.f32.gmra.mxu0 %v1174
    %v1411 = vpop.f32.mrf.mxu0
    %v1412 = vadd.f32 %v1289, %v1411
    %v1413 = vpop.f32.mrf.mxu0
    %1414 = vmatprep.mubr.f32.mxu0 %v1188
    %1415 = vmatmul.mubr.f32.gmra.mxu0 %v1175
    %v1416 = vpop.f32.mrf.mxu0
    %v1417 = vadd.f32 %v1289, %v1416
    %v1418 = vpop.f32.mrf.mxu0
    %1419 = vmatprep.mubr.f32.mxu0 %v1189
    %1420 = vmatmul.mubr.f32.gmra.mxu0 %v1176
    %v1421 = vpop.f32.mrf.mxu0
    %v1422 = vadd.f32 %v1289, %v1421
    %v1423 = vpop.f32.mrf.mxu0
    %1424 = vmatprep.mubr.f32.mxu0 %v1190
    %1425 = vmatmul.mubr.f32.gmra.mxu0 %v1177
    %v1426 = vpop.f32.mrf.mxu0
    %v1427 = vadd.f32 %v1289, %v1426
    %v1428 = vpop.f32.mrf.mxu0
    %1429 = vmatprep.mubr.f32.mxu0 %v1191
    %1430 = vmatmul.mubr.f32.gmra.mxu0 %v1178
    %v1431 = vpop.f32.mrf.mxu0
    %v1432 = vadd.f32 %v1289, %v1431
    %v1433 = vpop.f32.mrf.mxu0
    %1434 = vmatprep.mubr.f32.mxu0 %v1192
    %1435 = vmatmul.mubr.f32.gmra.mxu0 %v1179
    %v1436 = vpop.f32.mrf.mxu0
    %v1437 = vadd.f32 %v1289, %v1436
    %v1438 = vpop.f32.mrf.mxu0
    %1439 = vmatprep.mubr.f32.mxu0 %v1193
    %1440 = vmatmul.mubr.f32.gmra.mxu0 %v1180
    %v1441 = vpop.f32.mrf.mxu0
    %v1442 = vadd.f32 %v1289, %v1441
    %v1443 = vpop.f32.mrf.mxu0
    %1444 = vmatprep.mubr.f32.mxu0 %v1194
    %1445 = vmatmul.mubr.f32.gmra.mxu0 %v1181
    %v1446 = vpop.f32.mrf.mxu0
    %v1447 = vadd.f32 %v1289, %v1446
    %v1448 = vpop.f32.mrf.mxu0
    %1449 = vmatprep.mubr.f32.mxu0 %v1195
    %1450 = vmatmul.mubr.f32.gmra.mxu0 %v1182
    %v1451 = vpop.f32.mrf.mxu0
    %v1452 = vadd.f32 %v1289, %v1451
    %v1453 = vpop.f32.mrf.mxu0
    %1454 = vmatprep.mubr.f32.mxu0 %v1196
    %1455 = vmatmul.mubr.f32.gmra.mxu0 %v1183
    %v1456 = vpop.f32.mrf.mxu0
    %v1457 = vadd.f32 %v1289, %v1456
    %v1458 = vpop.f32.mrf.mxu0
    %1459 = vdwg.mxu0
    %1460 = vmatprep.subr.mxu0 0.0
    %1461 = vmatpush1.msra.mxu0 %v1259
    %1462 = vmatprep.subr.mxu0 0.0
    %1463 = vmatpush1.msra.mxu0 %v1258
    %1464 = vmatprep.subr.mxu0 0.0
    %1465 = vmatpush1.msra.mxu0 %v1257
    %1466 = vmatprep.subr.mxu0 0.0
    %1467 = vmatpush1.msra.mxu0 %v1256
    %1468 = vmatprep.subr.mxu0 0.0
    %1469 = vmatpush1.msra.mxu0 %v1255
    %1470 = vmatprep.subr.mxu0 0.0
    %1471 = vmatpush1.msra.mxu0 %v1254
    %1472 = vmatprep.subr.mxu0 0.0
    %1473 = vmatpush1.msra.mxu0 %v1253
    %1474 = vmatprep.subr.mxu0 0.0
    %1475 = vmatpush1.msra.mxu0 %v1252
    %1476 = vmatprep.subr.mxu0 0.0
    %1477 = vmatpush1.msra.mxu0 %v1251
    %1478 = vmatprep.subr.mxu0 0.0
    %1479 = vmatpush1.msra.mxu0 %v1250
    %1480 = vmatprep.subr.mxu0 0.0
    %1481 = vmatpush1.msra.mxu0 %v1249
    %1482 = vmatprep.subr.mxu0 0.0
    %1483 = vmatpush1.msra.mxu0 %v1248
    %1484 = vmatprep.subr.mxu0 0.0
    %1485 = vmatpush1.msra.mxu0 %v1247
    %1486 = vmatprep.subr.mxu0 0.0
    %1487 = vmatpush1.msra.mxu0 %v1246
    %1488 = vmatprep.subr.mxu0 0.0
    %1489 = vmatpush1.msra.mxu0 %v1245
    %1490 = vmatprep.subr.mxu0 0.0
    %1491 = vmatpush1.msra.mxu0 %v1244
    %1492 = vmatprep.subr.mxu0 0.0
    %1493 = vmatpush2.msra.mxu0 %v1275
    %1494 = vmatprep.subr.mxu0 0.0
    %1495 = vmatpush2.msra.mxu0 %v1274
    %1496 = vmatprep.subr.mxu0 0.0
    %1497 = vmatpush2.msra.mxu0 %v1273
    %1498 = vmatprep.subr.mxu0 0.0
    %1499 = vmatpush2.msra.mxu0 %v1272
    %1500 = vmatprep.subr.mxu0 0.0
    %1501 = vmatpush2.msra.mxu0 %v1271
    %1502 = vmatprep.subr.mxu0 0.0
    %1503 = vmatpush2.msra.mxu0 %v1270
    %1504 = vmatprep.subr.mxu0 0.0
    %1505 = vmatpush2.msra.mxu0 %v1269
    %1506 = vmatprep.subr.mxu0 0.0
    %1507 = vmatpush2.msra.mxu0 %v1268
    %1508 = vmatprep.subr.mxu0 0.0
    %1509 = vmatpush2.msra.mxu0 %v1267
    %1510 = vmatprep.subr.mxu0 0.0
    %1511 = vmatpush2.msra.mxu0 %v1266
    %1512 = vmatprep.subr.mxu0 0.0
    %1513 = vmatpush2.msra.mxu0 %v1265
    %1514 = vmatprep.subr.mxu0 0.0
    %1515 = vmatpush2.msra.mxu0 %v1264
    %1516 = vmatprep.subr.mxu0 0.0
    %1517 = vmatpush2.msra.mxu0 %v1263
    %1518 = vmatprep.subr.mxu0 0.0
    %1519 = vmatpush2.msra.mxu0 %v1262
    %1520 = vmatprep.subr.mxu0 0.0
    %1521 = vmatpush2.msra.mxu0 %v1261
    %1522 = vmatprep.subr.mxu0 0.0
    %1523 = vmatpush2.msra.mxu0 %v1260
    %1524 = vmatprep.mubr.f32.mxu0 %v1199
    %1525 = vmatmul.mubr.f32.gmra.mxu0 %v1172
    %v1526 = vpop.f32.mrf.mxu0
    %v1527 = vadd.f32 %v1397, %v1526
    %v1528 = vpop.f32.mrf.mxu0
    %1529 = vmatprep.mubr.f32.mxu0 %v1200
    %1530 = vmatmul.mubr.f32.gmra.mxu0 %v1173
    %v1531 = vpop.f32.mrf.mxu0
    %v1532 = vadd.f32 %v1402, %v1531
    %v1533 = vpop.f32.mrf.mxu0
    %1534 = vmatprep.mubr.f32.mxu0 %v1201
    %1535 = vmatmul.mubr.f32.gmra.mxu0 %v1174
    %v1536 = vpop.f32.mrf.mxu0
    %v1537 = vadd.f32 %v1407, %v1536
    %v1538 = vpop.f32.mrf.mxu0
    %1539 = vmatprep.mubr.f32.mxu0 %v1202
    %1540 = vmatmul.mubr.f32.gmra.mxu0 %v1175
    %v1541 = vpop.f32.mrf.mxu0
    %v1542 = vadd.f32 %v1412, %v1541
    %v1543 = vpop.f32.mrf.mxu0
    %1544 = vmatprep.mubr.f32.mxu0 %v1203
    %1545 = vmatmul.mubr.f32.gmra.mxu0 %v1176
    %v1546 = vpop.f32.mrf.mxu0
    %v1547 = vadd.f32 %v1417, %v1546
    %v1548 = vpop.f32.mrf.mxu0
    %1549 = vmatprep.mubr.f32.mxu0 %v1204
    %1550 = vmatmul.mubr.f32.gmra.mxu0 %v1177
    %v1551 = vpop.f32.mrf.mxu0
    %v1552 = vadd.f32 %v1422, %v1551
    %v1553 = vpop.f32.mrf.mxu0
    %1554 = vmatprep.mubr.f32.mxu0 %v1205
    %1555 = vmatmul.mubr.f32.gmra.mxu0 %v1178
    %v1556 = vpop.f32.mrf.mxu0
    %v1557 = vadd.f32 %v1427, %v1556
    %v1558 = vpop.f32.mrf.mxu0
    %1559 = vmatprep.mubr.f32.mxu0 %v1206
    %1560 = vmatmul.mubr.f32.gmra.mxu0 %v1179
    %v1561 = vpop.f32.mrf.mxu0
    %v1562 = vadd.f32 %v1432, %v1561
    %v1563 = vpop.f32.mrf.mxu0
    %1564 = vmatprep.mubr.f32.mxu0 %v1207
    %1565 = vmatmul.mubr.f32.gmra.mxu0 %v1180
    %v1566 = vpop.f32.mrf.mxu0
    %v1567 = vadd.f32 %v1437, %v1566
    %v1568 = vpop.f32.mrf.mxu0
    %1569 = vmatprep.mubr.f32.mxu0 %v1208
    %1570 = vmatmul.mubr.f32.gmra.mxu0 %v1181
    %v1571 = vpop.f32.mrf.mxu0
    %v1572 = vadd.f32 %v1442, %v1571
    %v1573 = vpop.f32.mrf.mxu0
    %1574 = vmatprep.mubr.f32.mxu0 %v1209
    %1575 = vmatmul.mubr.f32.gmra.mxu0 %v1182
    %v1576 = vpop.f32.mrf.mxu0
    %v1577 = vadd.f32 %v1447, %v1576
    %v1578 = vpop.f32.mrf.mxu0
    %1579 = vmatprep.mubr.f32.mxu0 %v1210
    %1580 = vmatmul.mubr.f32.gmra.mxu0 %v1197
    %v1581 = vpop.f32.mrf.mxu0
    %v1582 = vadd.f32 %v1452, %v1581
    %v1583 = vpop.f32.mrf.mxu0
    %1584 = vmatprep.mubr.f32.mxu0 %v1211
    %1585 = vmatmul.mubr.f32.gmra.mxu0 %v1198
    %v1586 = vpop.f32.mrf.mxu0
    %v1587 = vadd.f32 %v1457, %v1586
    %v1588 = vpop.f32.mrf.mxu0
    %1589 = vdwg.mxu0
    %1590 = vmatprep.subr.mxu0 0.0
    %1591 = vmatpush1.msra.mxu0 0.0
    %1592 = vmatprep.subr.mxu0 0.0
    %1593 = vmatpush1.msra.mxu0 0.0
    %1594 = vmatprep.subr.mxu0 0.0
    %1595 = vmatpush1.msra.mxu0 0.0
    %1596 = vmatprep.subr.mxu0 0.0
    %1597 = vmatpush1.msra.mxu0 0.0
    %1598 = vmatprep.subr.mxu0 0.0
    %1599 = vmatpush1.msra.mxu0 0.0
    %1600 = vmatprep.subr.mxu0 0.0
    %1601 = vmatpush1.msra.mxu0 0.0
    %1602 = vmatprep.subr.mxu0 0.0
    %1603 = vmatpush1.msra.mxu0 0.0
    %1604 = vmatprep.subr.mxu0 0.0
    %1605 = vmatpush1.msra.mxu0 0.0
    %1606 = vmatprep.subr.mxu0 0.0
    %1607 = vmatpush1.msra.mxu0 %v1283
    %1608 = vmatprep.subr.mxu0 0.0
    %1609 = vmatpush1.msra.mxu0 %v1282
    %1610 = vmatprep.subr.mxu0 0.0
    %1611 = vmatpush1.msra.mxu0 %v1281
    %1612 = vmatprep.subr.mxu0 0.0
    %1613 = vmatpush1.msra.mxu0 %v1280
    %1614 = vmatprep.subr.mxu0 0.0
    %1615 = vmatpush1.msra.mxu0 %v1279
    %1616 = vmatprep.subr.mxu0 0.0
    %1617 = vmatpush1.msra.mxu0 %v1278
    %1618 = vmatprep.subr.mxu0 0.0
    %1619 = vmatpush1.msra.mxu0 %v1277
    %1620 = vmatprep.subr.mxu0 0.0
    %1621 = vmatpush1.msra.mxu0 %v1276
    %1622 = vmatprep.subr.mxu0 0.0
    %1623 = vmatpush2.msra.mxu0 0.0
    %1624 = vmatprep.subr.mxu0 0.0
    %1625 = vmatpush2.msra.mxu0 0.0
    %1626 = vmatprep.subr.mxu0 0.0
    %1627 = vmatpush2.msra.mxu0 0.0
    %1628 = vmatprep.subr.mxu0 0.0
    %1629 = vmatpush2.msra.mxu0 0.0
    %1630 = vmatprep.subr.mxu0 0.0
    %1631 = vmatpush2.msra.mxu0 0.0
    %1632 = vmatprep.subr.mxu0 0.0
    %1633 = vmatpush2.msra.mxu0 0.0
    %1634 = vmatprep.subr.mxu0 0.0
    %1635 = vmatpush2.msra.mxu0 0.0
    %1636 = vmatprep.subr.mxu0 0.0
    %1637 = vmatpush2.msra.mxu0 0.0
    %1638 = vmatprep.subr.mxu0 0.0
    %1639 = vmatpush2.msra.mxu0 0.0
    %1640 = vmatprep.subr.mxu0 0.0
    %1641 = vmatpush2.msra.mxu0 0.0
    %1642 = vmatprep.subr.mxu0 0.0
    %1643 = vmatpush2.msra.mxu0 0.0
    %1644 = vmatprep.subr.mxu0 0.0
    %1645 = vmatpush2.msra.mxu0 0.0
    %1646 = vmatprep.subr.mxu0 0.0
    %1647 = vmatpush2.msra.mxu0 0.0
    %1648 = vmatprep.subr.mxu0 0.0
    %1649 = vmatpush2.msra.mxu0 0.0
    %1650 = vmatprep.subr.mxu0 0.0
    %1651 = vmatpush2.msra.mxu0 0.0
    %1652 = vmatprep.subr.mxu0 0.0
    %1653 = vmatpush2.msra.mxu0 0.0
    %1654 = vmatprep.mubr.f32.mxu0 0.0
    %1655 = vmatmul.mubr.f32.gmra.mxu0 %v1292
    %v1656 = vpop.f32.mrf.mxu0
    %v1657 = vadd.f32 %v1527, %v1656
    %v1658 = vpop.f32.mrf.mxu0
    %1659 = vmatprep.mubr.f32.mxu0 0.0
    %1660 = vmatmul.mubr.f32.gmra.mxu0 %v1295
    %v1661 = vpop.f32.mrf.mxu0
    %v1662 = vadd.f32 %v1532, %v1661
    %v1663 = vpop.f32.mrf.mxu0
    %1664 = vmatprep.mubr.f32.mxu0 0.0
    %1665 = vmatmul.mubr.f32.gmra.mxu0 %v1298
    %v1666 = vpop.f32.mrf.mxu0
    %v1667 = vadd.f32 %v1537, %v1666
    %v1668 = vpop.f32.mrf.mxu0
    %1669 = vmatprep.mubr.f32.mxu0 0.0
    %1670 = vmatmul.mubr.f32.gmra.mxu0 %v1301
    %v1671 = vpop.f32.mrf.mxu0
    %v1672 = vadd.f32 %v1542, %v1671
    %v1673 = vpop.f32.mrf.mxu0
    %1674 = vmatprep.mubr.f32.mxu0 0.0
    %1675 = vmatmul.mubr.f32.gmra.mxu0 %v1304
    %v1676 = vpop.f32.mrf.mxu0
    %v1677 = vadd.f32 %v1547, %v1676
    %v1678 = vpop.f32.mrf.mxu0
    %1679 = vmatprep.mubr.f32.mxu0 0.0
    %1680 = vmatmul.mubr.f32.gmra.mxu0 %v1307
    %v1681 = vpop.f32.mrf.mxu0
    %v1682 = vadd.f32 %v1552, %v1681
    %v1683 = vpop.f32.mrf.mxu0
    %1684 = vmatprep.mubr.f32.mxu0 0.0
    %1685 = vmatmul.mubr.f32.gmra.mxu0 %v1310
    %v1686 = vpop.f32.mrf.mxu0
    %v1687 = vadd.f32 %v1557, %v1686
    %v1688 = vpop.f32.mrf.mxu0
    %1689 = vmatprep.mubr.f32.mxu0 0.0
    %1690 = vmatmul.mubr.f32.gmra.mxu0 %v1313
    %v1691 = vpop.f32.mrf.mxu0
    %v1692 = vadd.f32 %v1562, %v1691
    %v1693 = vpop.f32.mrf.mxu0
    %1694 = vmatprep.mubr.f32.mxu0 0.0
    %1695 = vmatmul.mubr.f32.gmra.mxu0 %v1316
    %v1696 = vpop.f32.mrf.mxu0
    %v1697 = vadd.f32 %v1567, %v1696
    %v1698 = vpop.f32.mrf.mxu0
    %1699 = vmatprep.mubr.f32.mxu0 0.0
    %1700 = vmatmul.mubr.f32.gmra.mxu0 %v1319
    %v1701 = vpop.f32.mrf.mxu0
    %v1702 = vadd.f32 %v1572, %v1701
    %v1703 = vpop.f32.mrf.mxu0
    %1704 = vmatprep.mubr.f32.mxu0 0.0
    %1705 = vmatmul.mubr.f32.gmra.mxu0 %v1322
    %v1706 = vpop.f32.mrf.mxu0
    %v1707 = vadd.f32 %v1577, %v1706
    %v1708 = vpop.f32.mrf.mxu0
    %1709 = vmatprep.mubr.f32.mxu0 0.0
    %1710 = vmatmul.mubr.f32.gmra.mxu0 %v1325
    %v1711 = vpop.f32.mrf.mxu0
    %v1712 = vadd.f32 %v1582, %v1711
    %v1713 = vpop.f32.mrf.mxu0
    %1714 = vmatprep.mubr.f32.mxu0 0.0
    %1715 = vmatmul.mubr.f32.gmra.mxu0 %v1328
    %v1716 = vpop.f32.mrf.mxu0
    %v1717 = vadd.f32 %v1587, %v1716
    %v1718 = vpop.f32.mrf.mxu0
    %1719 = vdwg.mxu0
    %v1720 = vmax.f32 %v1657, 0.0
    %v1721 = vmax.f32 %v1662, 0.0
    %v1722 = vmax.f32 %v1667, 0.0
    %v1723 = vmax.f32 %v1672, 0.0
    %v1724 = vmax.f32 %v1677, 0.0
    %v1725 = vmax.f32 %v1682, 0.0
    %v1726 = vmax.f32 %v1687, 0.0
    %v1727 = vmax.f32 %v1692, 0.0
    %v1728 = vmax.f32 %v1697, 0.0
    %v1729 = vmax.f32 %v1702, 0.0
    %v1730 = vmax.f32 %v1707, 0.0
    %v1731 = vmax.f32 %v1712, 0.0
    %v1732 = vmax.f32 %v1717, 0.0
    %1733 = vst.msk [vmem:[#allocation4] sm:$0xff] %vm961, %v1720
    %1734 = vst.msk [vmem:[#allocation4 + $0x8] sm:$0xff] %vm961, %v1721
    %1735 = vst.msk [vmem:[#allocation4 + $0x10] sm:$0xff] %vm961, %v1722
    %1736 = vst.msk [vmem:[#allocation4 + $0x18] sm:$0xff] %vm961, %v1723
    %1737 = vst.msk [vmem:[#allocation4 + $0x20] sm:$0xff] %vm961, %v1724
    %1738 = vst.msk [vmem:[#allocation4 + $0x28] sm:$0xff] %vm961, %v1725
    %1739 = vst.msk [vmem:[#allocation4 + $0x30] sm:$0xff] %vm961, %v1726
    %1740 = vst.msk [vmem:[#allocation4 + $0x38] sm:$0xff] %vm961, %v1727
    %1741 = vst.msk [vmem:[#allocation4 + $0x40] sm:$0xff] %vm961, %v1728
    %1742 = vst.msk [vmem:[#allocation4 + $0x48] sm:$0xff] %vm961, %v1729
    %1743 = vst.msk [vmem:[#allocation4 + $0x50] sm:$0xff] %vm961, %v1730
    %1744 = vst.msk [vmem:[#allocation4 + $0x58] sm:$0xff] %vm961, %v1731
    %1745 = vst.msk [vmem:[#allocation4 + $0x60] sm:$0x3] %vm976, %v1732
    %v1746 = vld [vmem:[#allocation4] sm:$0x1]
    %v1747 = vld [vmem:[#allocation4 + $0x1] sm:$0x1]
    %v1748 = vld [vmem:[#allocation4 + $0x2] sm:$0x1]
    %v1749 = vld [vmem:[#allocation4 + $0x3] sm:$0x1]
    %v1750 = vld [vmem:[#allocation4 + $0x7] sm:$0x1]
    %v1751 = vld [vmem:[#allocation4 + $0x8] sm:$0x1]
    %v1752 = vld [vmem:[#allocation4 + $0x9] sm:$0x1]
    %v1753 = vld [vmem:[#allocation4 + $0xa] sm:$0x1]
    %v1754 = vld [vmem:[#allocation4 + $0xe] sm:$0x1]
    %v1755 = vld [vmem:[#allocation4 + $0xf] sm:$0x1]
    %v1756 = vld [vmem:[#allocation4 + $0x10] sm:$0x1]
    %v1757 = vld [vmem:[#allocation4 + $0x11] sm:$0x1]
    %v1758 = vld [vmem:[#allocation4 + $0x15] sm:$0x1]
    %v1759 = vld [vmem:[#allocation4 + $0x16] sm:$0x1]
    %v1760 = vld [vmem:[#allocation4 + $0x17] sm:$0x1]
    %v1761 = vld [vmem:[#allocation4 + $0x18] sm:$0x1]
    %1763 = vrot.lane.b32.xlu0 %v1747, 64
    %v1764 = vpop.permute.xlu0 %1763
    %1767 = vrot.lane.b32.xlu0 %v1749, 64
    %v1768 = vpop.permute.xlu0 %1767
    %1771 = vrot.lane.b32.xlu0 %v1751, 64
    %v1772 = vpop.permute.xlu0 %1771
    %1775 = vrot.lane.b32.xlu0 %v1753, 64
    %v1776 = vpop.permute.xlu0 %1775
    %1779 = vrot.lane.b32.xlu0 %v1755, 64
    %v1780 = vpop.permute.xlu0 %1779
    %1783 = vrot.lane.b32.xlu0 %v1757, 64
    %v1784 = vpop.permute.xlu0 %1783
    %1787 = vrot.lane.b32.xlu0 %v1759, 64
    %v1788 = vpop.permute.xlu0 %1787
    %1791 = vrot.lane.b32.xlu0 %v1761, 64
    %v1792 = vpop.permute.xlu0 %1791
    %v1794 = vsel %vm961, %v1746, %v1764
    %v1795 = vsel %vm961, %v1748, %v1768
    %v1796 = vsel %vm961, %v1750, %v1772
    %v1797 = vsel %vm961, %v1752, %v1776
    %v1798 = vsel %vm961, %v1754, %v1780
    %v1799 = vsel %vm961, %v1756, %v1784
    %v1800 = vsel %vm961, %v1758, %v1788
    %v1801 = vsel %vm961, %v1760, %v1792
    %v1802 = vld [vmem:[#allocation4 + $0x31] sm:$0x1]
    %v1803 = vld [vmem:[#allocation4 + $0x32] sm:$0x1]
    %v1804 = vld [vmem:[#allocation4 + $0x33] sm:$0x1]
    %v1805 = vld [vmem:[#allocation4 + $0x34] sm:$0x1]
    %v1806 = vld [vmem:[#allocation4 + $0x38] sm:$0x1]
    %v1807 = vld [vmem:[#allocation4 + $0x39] sm:$0x1]
    %v1808 = vld [vmem:[#allocation4 + $0x3a] sm:$0x1]
    %v1809 = vld [vmem:[#allocation4 + $0x3b] sm:$0x1]
    %v1810 = vld [vmem:[#allocation4 + $0x3f] sm:$0x1]
    %v1811 = vld [vmem:[#allocation4 + $0x40] sm:$0x1]
    %v1812 = vld [vmem:[#allocation4 + $0x41] sm:$0x1]
    %v1813 = vld [vmem:[#allocation4 + $0x42] sm:$0x1]
    %v1814 = vld [vmem:[#allocation4 + $0x46] sm:$0x1]
    %v1815 = vld [vmem:[#allocation4 + $0x47] sm:$0x1]
    %v1816 = vld [vmem:[#allocation4 + $0x48] sm:$0x1]
    %v1817 = vld [vmem:[#allocation4 + $0x49] sm:$0x1]
    %1819 = vrot.lane.b32.xlu0 %v1803, 64
    %v1820 = vpop.permute.xlu0 %1819
    %1823 = vrot.lane.b32.xlu0 %v1805, 64
    %v1824 = vpop.permute.xlu0 %1823
    %1827 = vrot.lane.b32.xlu0 %v1807, 64
    %v1828 = vpop.permute.xlu0 %1827
    %1831 = vrot.lane.b32.xlu0 %v1809, 64
    %v1832 = vpop.permute.xlu0 %1831
    %1835 = vrot.lane.b32.xlu0 %v1811, 64
    %v1836 = vpop.permute.xlu0 %1835
    %1839 = vrot.lane.b32.xlu0 %v1813, 64
    %v1840 = vpop.permute.xlu0 %1839
    %1843 = vrot.lane.b32.xlu0 %v1815, 64
    %v1844 = vpop.permute.xlu0 %1843
    %1847 = vrot.lane.b32.xlu0 %v1817, 64
    %v1848 = vpop.permute.xlu0 %1847
    %v1850 = vsel %vm961, %v1802, %v1820
    %v1851 = vsel %vm961, %v1804, %v1824
    %v1852 = vsel %vm961, %v1806, %v1828
    %v1853 = vsel %vm961, %v1808, %v1832
    %v1854 = vsel %vm961, %v1810, %v1836
    %v1855 = vsel %vm961, %v1812, %v1840
    %v1856 = vsel %vm961, %v1814, %v1844
    %v1857 = vsel %vm961, %v1816, %v1848
    %v1866 = vrot.slane %v1850, 7
    %v1867 = vrot.slane %v1851, 7
    %v1868 = vrot.slane %v1852, 7
    %v1869 = vrot.slane %v1853, 7
    %v1870 = vrot.slane %v1854, 7
    %v1871 = vrot.slane %v1855, 7
    %v1872 = vrot.slane %v1856, 7
    %v1873 = vrot.slane %v1857, 7
    %vm1882 = vcmask 1040384
    %v1883 = vsel %vm1882, %v1794, %v1866
    %v1884 = vsel %vm1882, %v1795, %v1867
    %v1885 = vsel %vm1882, %v1796, %v1868
    %v1886 = vsel %vm1882, %v1797, %v1869
    %v1887 = vsel %vm1882, %v1798, %v1870
    %v1888 = vsel %vm1882, %v1799, %v1871
    %v1889 = vsel %vm1882, %v1800, %v1872
    %v1890 = vsel %vm1882, %v1801, %v1873
    %v1891 = vld [vmem:[%s7] sm:$0xff]
    %v1892 = vld [vmem:[%s7 + $0x8] sm:$0xff]
    %v1893 = vld [vmem:[%s7 + $0x10] sm:$0xff]
    %v1894 = vld [vmem:[%s7 + $0x18] sm:$0xff]
    %v1895 = vld [vmem:[%s7 + $0x20] sm:$0xff]
    %v1896 = vld [vmem:[%s7 + $0x28] sm:$0xff]
    %v1897 = vld [vmem:[%s7 + $0x30] sm:$0xff]
    %v1898 = vld [vmem:[%s7 + $0x38] sm:$0xff]
    %v1899 = vld [vmem:[%s7 + $0x40] sm:$0xff]
    %v1900 = vld [vmem:[%s7 + $0x48] sm:$0xff]
    %v1901 = vld [vmem:[%s7 + $0x50] sm:$0xff]
    %v1902 = vld [vmem:[%s7 + $0x58] sm:$0xff]
    %v1903 = vld [vmem:[%s7 + $0x60] sm:$0xff]
    %v1904 = vld [vmem:[%s7 + $0x68] sm:$0xff]
    %v1905 = vld [vmem:[%s7 + $0x70] sm:$0xff]
    %v1906 = vld [vmem:[%s7 + $0x78] sm:$0xff]
    %v1907 = vld [vmem:[%s7 + $0x80] sm:$0xff]
    %v1908 = vld [vmem:[%s7 + $0x88] sm:$0xff]
    %v1909 = vld [vmem:[%s7 + $0x90] sm:$0xff]
    %v1910 = vld [vmem:[%s7 + $0x98] sm:$0xff]
    %v1911 = vld [vmem:[%s7 + $0xa0] sm:$0xff]
    %v1912 = vld [vmem:[%s7 + $0xa8] sm:$0xff]
    %v1913 = vld [vmem:[%s7 + $0xb0] sm:$0xff]
    %v1914 = vld [vmem:[%s7 + $0xb8] sm:$0xff]
    %v1915 = vld [vmem:[%s7 + $0xc0] sm:$0xff]
    %v1916 = vld [vmem:[%s7 + $0xc8] sm:$0xff]
    %v1917 = vld [vmem:[%s7 + $0xd0] sm:$0xff]
    %v1918 = vld [vmem:[%s7 + $0xd8] sm:$0xff]
    %v1919 = vld [vmem:[%s7 + $0xe0] sm:$0xff]
    %v1920 = vld [vmem:[%s7 + $0xe8] sm:$0xff]
    %v1921 = vld [vmem:[%s7 + $0xf0] sm:$0xff]
    %v1922 = vld [vmem:[%s7 + $0xf8] sm:$0xff]
    %v1923 = vld [vmem:[%s7 + $0x100] sm:$0xff]
    %v1924 = vld [vmem:[%s7 + $0x108] sm:$0xff]
    %v1925 = vld [vmem:[%s7 + $0x110] sm:$0xff]
    %v1926 = vld [vmem:[%s7 + $0x118] sm:$0xff]
    %v1927 = vld [vmem:[%s7 + $0x120] sm:$0xff]
    %v1928 = vld [vmem:[%s7 + $0x128] sm:$0xff]
    %v1929 = vld [vmem:[%s7 + $0x130] sm:$0xff]
    %v1930 = vld [vmem:[%s7 + $0x138] sm:$0xff]
    %v1931 = vld [vmem:[%s7 + $0x140] sm:$0xff]
    %v1932 = vld [vmem:[%s7 + $0x148] sm:$0xff]
    %v1933 = vld [vmem:[%s7 + $0x150] sm:$0xff]
    %v1934 = vld [vmem:[%s7 + $0x158] sm:$0xff]
    %v1935 = vld [vmem:[%s7 + $0x160] sm:$0xff]
    %v1936 = vld [vmem:[%s7 + $0x168] sm:$0xff]
    %v1937 = vld [vmem:[%s7 + $0x170] sm:$0xff]
    %v1938 = vld [vmem:[%s7 + $0x178] sm:$0xff]
    %v1939 = vld [vmem:[%s7 + $0x180] sm:$0xff]
    %v1940 = vld [vmem:[%s7 + $0x188] sm:$0xff]
    %v1941 = vld [vmem:[%s7 + $0x190] sm:$0xff]
    %v1942 = vld [vmem:[%s7 + $0x198] sm:$0xff]
    %v1943 = vld [vmem:[%s7 + $0x1a0] sm:$0xff]
    %v1944 = vld [vmem:[%s7 + $0x1a8] sm:$0xff]
    %v1945 = vld [vmem:[%s7 + $0x1b0] sm:$0xff]
    %v1946 = vld [vmem:[%s7 + $0x1b8] sm:$0xff]
    %v1947 = vld [vmem:[%s7 + $0x1c0] sm:$0xff]
    %v1948 = vld [vmem:[%s7 + $0x1c8] sm:$0xff]
    %v1949 = vld [vmem:[%s7 + $0x1d0] sm:$0xff]
    %v1950 = vld [vmem:[%s7 + $0x1d8] sm:$0xff]
    %v1951 = vld [vmem:[%s7 + $0x1e0] sm:$0xff]
    %v1952 = vld [vmem:[%s7 + $0x1e8] sm:$0xff]
    %v1953 = vld [vmem:[%s7 + $0x1f0] sm:$0xff]
    %v1954 = vld [vmem:[%s7 + $0x1f8] sm:$0xff]
    %v1955 = vld [vmem:[%s7 + $0x200] sm:$0xff]
    %v1956 = vld [vmem:[%s7 + $0x208] sm:$0xff]
    %v1957 = vld [vmem:[%s7 + $0x210] sm:$0xff]
    %v1958 = vld [vmem:[%s7 + $0x218] sm:$0xff]
    %v1959 = vld [vmem:[%s7 + $0x220] sm:$0xff]
    %v1960 = vld [vmem:[%s7 + $0x228] sm:$0xff]
    %v1961 = vld [vmem:[%s7 + $0x230] sm:$0xff]
    %v1962 = vld [vmem:[%s7 + $0x238] sm:$0xff]
    %v1963 = vld [vmem:[%s7 + $0x240] sm:$0xff]
    %v1964 = vld [vmem:[%s7 + $0x248] sm:$0xff]
    %v1965 = vld [vmem:[%s7 + $0x250] sm:$0xff]
    %v1966 = vld [vmem:[%s7 + $0x258] sm:$0xff]
    %v1967 = vld [vmem:[%s7 + $0x260] sm:$0xff]
    %v1968 = vld [vmem:[%s7 + $0x268] sm:$0xff]
    %v1969 = vld [vmem:[%s7 + $0x270] sm:$0xff]
    %v1970 = vld [vmem:[%s7 + $0x278] sm:$0xff]
    %v1971 = vld [vmem:[%s7 + $0x280] sm:$0xff]
    %v1972 = vld [vmem:[%s7 + $0x288] sm:$0xff]
    %v1973 = vld [vmem:[%s7 + $0x290] sm:$0xff]
    %v1974 = vld [vmem:[%s7 + $0x298] sm:$0xff]
    %v1975 = vld [vmem:[%s7 + $0x2a0] sm:$0xff]
    %v1976 = vld [vmem:[%s7 + $0x2a8] sm:$0xff]
    %v1977 = vld [vmem:[%s7 + $0x2b0] sm:$0xff]
    %v1978 = vld [vmem:[%s7 + $0x2b8] sm:$0xff]
    %v1979 = vld [vmem:[%s7 + $0x2c0] sm:$0xff]
    %v1980 = vld [vmem:[%s7 + $0x2c8] sm:$0xff]
    %v1981 = vld [vmem:[%s7 + $0x2d0] sm:$0xff]
    %v1982 = vld [vmem:[%s7 + $0x2d8] sm:$0xff]
    %v1983 = vld [vmem:[%s7 + $0x2e0] sm:$0xff]
    %v1984 = vld [vmem:[%s7 + $0x2e8] sm:$0xff]
    %v1985 = vld [vmem:[%s7 + $0x2f0] sm:$0xff]
    %v1986 = vld [vmem:[%s7 + $0x2f8] sm:$0xff]
    %v1987 = vld [vmem:[%s7 + $0x300] sm:$0xff]
    %v1988 = vld [vmem:[%s7 + $0x308] sm:$0xff]
    %v1989 = vld [vmem:[%s7 + $0x310] sm:$0xff]
    %v1990 = vld [vmem:[%s7 + $0x318] sm:$0xff]
    %v1991 = vld [vmem:[%s7 + $0x320] sm:$0xff]
    %v1992 = vld [vmem:[%s7 + $0x328] sm:$0xff]
    %v1993 = vld [vmem:[%s7 + $0x330] sm:$0xff]
    %v1994 = vld [vmem:[%s7 + $0x338] sm:$0xff]
    %v1995 = vld [vmem:[%s7 + $0x340] sm:$0xff]
    %v1996 = vld [vmem:[%s7 + $0x348] sm:$0xff]
    %v1997 = vld [vmem:[%s7 + $0x350] sm:$0xff]
    %v1998 = vld [vmem:[%s7 + $0x358] sm:$0xff]
    %v1999 = vld [vmem:[%s7 + $0x360] sm:$0xff]
    %v2000 = vld [vmem:[%s7 + $0x368] sm:$0xff]
    %v2001 = vld [vmem:[%s7 + $0x370] sm:$0xff]
    %v2002 = vld [vmem:[%s7 + $0x378] sm:$0xff]
    %v2003 = vld [vmem:[%s7 + $0x380] sm:$0xff]
    %v2004 = vld [vmem:[%s7 + $0x388] sm:$0xff]
    %v2005 = vld [vmem:[%s7 + $0x390] sm:$0xff]
    %v2006 = vld [vmem:[%s7 + $0x398] sm:$0xff]
    %v2007 = vld [vmem:[%s7 + $0x3a0] sm:$0xff]
    %v2008 = vld [vmem:[%s7 + $0x3a8] sm:$0xff]
    %v2009 = vld [vmem:[%s7 + $0x3b0] sm:$0xff]
    %v2010 = vld [vmem:[%s7 + $0x3b8] sm:$0xff]
    %v2011 = vld [vmem:[%s7 + $0x3c0] sm:$0xff]
    %v2012 = vld [vmem:[%s7 + $0x3c8] sm:$0xff]
    %v2013 = vld [vmem:[%s7 + $0x3d0] sm:$0xff]
    %v2014 = vld [vmem:[%s7 + $0x3d8] sm:$0xff]
    %v2015 = vld [vmem:[%s7 + $0x3e0] sm:$0xff]
    %v2016 = vld [vmem:[%s7 + $0x3e8] sm:$0xff]
    %v2017 = vld [vmem:[%s7 + $0x3f0] sm:$0xff]
    %v2018 = vld [vmem:[%s7 + $0x3f8] sm:$0xff]
    %v2019 = vld [vmem:[%s7 + $0x400] sm:$0xff]
    %v2020 = vld [vmem:[%s7 + $0x408] sm:$0xff]
    %v2021 = vld [vmem:[%s7 + $0x410] sm:$0xff]
    %v2022 = vld [vmem:[%s7 + $0x418] sm:$0xff]
    %v2023 = vld [vmem:[%s7 + $0x420] sm:$0xff]
    %v2024 = vld [vmem:[%s7 + $0x428] sm:$0xff]
    %v2025 = vld [vmem:[%s7 + $0x430] sm:$0xff]
    %v2026 = vld [vmem:[%s7 + $0x438] sm:$0xff]
    %v2027 = vld [vmem:[%s7 + $0x440] sm:$0xff]
    %v2028 = vld [vmem:[%s7 + $0x448] sm:$0xff]
    %v2029 = vld [vmem:[%s7 + $0x450] sm:$0xff]
    %v2030 = vld [vmem:[%s7 + $0x458] sm:$0xff]
    %v2031 = vld [vmem:[%s7 + $0x460] sm:$0xff]
    %v2032 = vld [vmem:[%s7 + $0x468] sm:$0xff]
    %v2033 = vld [vmem:[%s7 + $0x470] sm:$0xff]
    %v2034 = vld [vmem:[%s7 + $0x478] sm:$0xff]
    %v2035 = vld [vmem:[%s7 + $0x480] sm:$0xff]
    %v2036 = vld [vmem:[%s7 + $0x488] sm:$0xff]
    %v2037 = vld [vmem:[%s7 + $0x490] sm:$0xff]
    %v2038 = vld [vmem:[%s7 + $0x498] sm:$0xff]
    %v2039 = vld [vmem:[%s7 + $0x4a0] sm:$0xff]
    %v2040 = vld [vmem:[%s7 + $0x4a8] sm:$0xff]
    %v2041 = vld [vmem:[%s7 + $0x4b0] sm:$0xff]
    %v2042 = vld [vmem:[%s7 + $0x4b8] sm:$0xff]
    %v2043 = vld [vmem:[%s7 + $0x4c0] sm:$0xff]
    %v2044 = vld [vmem:[%s7 + $0x4c8] sm:$0xff]
    %v2045 = vld [vmem:[%s7 + $0x4d0] sm:$0xff]
    %v2046 = vld [vmem:[%s7 + $0x4d8] sm:$0xff]
    %v2047 = vld [vmem:[%s7 + $0x4e0] sm:$0xff]
    %v2048 = vld [vmem:[%s7 + $0x4e8] sm:$0xff]
    %v2049 = vld [vmem:[%s7 + $0x4f0] sm:$0xff]
    %v2050 = vld [vmem:[%s7 + $0x4f8] sm:$0xff]
    %v2051 = vld [vmem:[%s7 + $0x500] sm:$0xff]
    %v2052 = vld [vmem:[%s7 + $0x508] sm:$0xff]
    %v2053 = vld [vmem:[%s7 + $0x510] sm:$0xff]
    %v2054 = vld [vmem:[%s7 + $0x518] sm:$0xff]
    %v2055 = vld [vmem:[%s7 + $0x520] sm:$0xff]
    %v2056 = vld [vmem:[%s7 + $0x528] sm:$0xff]
    %v2057 = vld [vmem:[%s7 + $0x530] sm:$0xff]
    %v2058 = vld [vmem:[%s7 + $0x538] sm:$0xff]
    %v2059 = vld [vmem:[%s7 + $0x540] sm:$0xff]
    %v2060 = vld [vmem:[%s7 + $0x548] sm:$0xff]
    %v2061 = vld [vmem:[%s7 + $0x550] sm:$0xff]
    %v2062 = vld [vmem:[%s7 + $0x558] sm:$0xff]
    %v2063 = vld [vmem:[%s7 + $0x560] sm:$0xff]
    %v2064 = vld [vmem:[%s7 + $0x568] sm:$0xff]
    %v2065 = vld [vmem:[%s7 + $0x570] sm:$0xff]
    %v2066 = vld [vmem:[%s7 + $0x578] sm:$0xff]
    %v2067 = vld [vmem:[%s7 + $0x580] sm:$0xff]
    %v2068 = vld [vmem:[%s7 + $0x588] sm:$0xff]
    %v2069 = vld [vmem:[%s7 + $0x590] sm:$0xff]
    %v2070 = vld [vmem:[%s7 + $0x598] sm:$0xff]
    %v2071 = vld [vmem:[%s7 + $0x5a0] sm:$0xff]
    %v2072 = vld [vmem:[%s7 + $0x5a8] sm:$0xff]
    %v2073 = vld [vmem:[%s7 + $0x5b0] sm:$0xff]
    %v2074 = vld [vmem:[%s7 + $0x5b8] sm:$0xff]
    %v2075 = vld [vmem:[%s7 + $0x5c0] sm:$0xff]
    %v2076 = vld [vmem:[%s7 + $0x5c8] sm:$0xff]
    %v2077 = vld [vmem:[%s7 + $0x5d0] sm:$0xff]
    %v2078 = vld [vmem:[%s7 + $0x5d8] sm:$0xff]
    %v2079 = vld [vmem:[%s7 + $0x5e0] sm:$0xff]
    %v2080 = vld [vmem:[%s7 + $0x5e8] sm:$0xff]
    %v2081 = vld [vmem:[%s7 + $0x5f0] sm:$0xff]
    %v2082 = vld [vmem:[%s7 + $0x5f8] sm:$0xff]
    %v2083 = vld [vmem:[%s7 + $0x600] sm:$0xff]
    %v2084 = vld [vmem:[%s7 + $0x608] sm:$0xff]
    %v2085 = vld [vmem:[%s7 + $0x610] sm:$0xff]
    %v2086 = vld [vmem:[%s7 + $0x618] sm:$0xff]
    %v2087 = vld [vmem:[%s7 + $0x620] sm:$0xff]
    %v2088 = vld [vmem:[%s7 + $0x628] sm:$0xff]
    %v2089 = vld [vmem:[%s7 + $0x630] sm:$0xff]
    %v2090 = vld [vmem:[%s7 + $0x638] sm:$0xff]
    %v2091 = vld [vmem:[%s7 + $0x640] sm:$0xff]
    %v2092 = vld [vmem:[%s7 + $0x648] sm:$0xff]
    %v2093 = vld [vmem:[%s7 + $0x650] sm:$0xff]
    %v2094 = vld [vmem:[%s7 + $0x658] sm:$0xff]
    %v2095 = vld [vmem:[%s7 + $0x660] sm:$0xff]
    %v2096 = vld [vmem:[%s7 + $0x668] sm:$0xff]
    %v2097 = vld [vmem:[%s7 + $0x670] sm:$0xff]
    %v2098 = vld [vmem:[%s7 + $0x678] sm:$0xff]
    %v2099 = vld [vmem:[%s7 + $0x680] sm:$0xff]
    %v2100 = vld [vmem:[%s7 + $0x688] sm:$0xff]
    %v2101 = vld [vmem:[%s7 + $0x690] sm:$0xff]
    %v2102 = vld [vmem:[%s7 + $0x698] sm:$0xff]
    %v2103 = vld [vmem:[%s7 + $0x6a0] sm:$0xff]
    %v2104 = vld [vmem:[%s7 + $0x6a8] sm:$0xff]
    %v2105 = vld [vmem:[%s7 + $0x6b0] sm:$0xff]
    %v2106 = vld [vmem:[%s7 + $0x6b8] sm:$0xff]
    %v2107 = vld [vmem:[%s7 + $0x6c0] sm:$0xff]
    %v2108 = vld [vmem:[%s7 + $0x6c8] sm:$0xff]
    %v2109 = vld [vmem:[%s7 + $0x6d0] sm:$0xff]
    %v2110 = vld [vmem:[%s7 + $0x6d8] sm:$0xff]
    %v2111 = vld [vmem:[%s7 + $0x6e0] sm:$0xff]
    %v2112 = vld [vmem:[%s7 + $0x6e8] sm:$0xff]
    %v2113 = vld [vmem:[%s7 + $0x6f0] sm:$0xff]
    %v2114 = vld [vmem:[%s7 + $0x6f8] sm:$0xff]
    %v2115 = vld [vmem:[%s7 + $0x700] sm:$0xff]
    %v2116 = vld [vmem:[%s7 + $0x708] sm:$0xff]
    %v2117 = vld [vmem:[%s7 + $0x710] sm:$0xff]
    %v2118 = vld [vmem:[%s7 + $0x718] sm:$0xff]
    %v2119 = vld [vmem:[%s7 + $0x720] sm:$0xff]
    %v2120 = vld [vmem:[%s7 + $0x728] sm:$0xff]
    %v2121 = vld [vmem:[%s7 + $0x730] sm:$0xff]
    %v2122 = vld [vmem:[%s7 + $0x738] sm:$0xff]
    %v2123 = vld [vmem:[%s7 + $0x740] sm:$0xff]
    %v2124 = vld [vmem:[%s7 + $0x748] sm:$0xff]
    %v2125 = vld [vmem:[%s7 + $0x750] sm:$0xff]
    %v2126 = vld [vmem:[%s7 + $0x758] sm:$0xff]
    %v2127 = vld [vmem:[%s7 + $0x760] sm:$0xff]
    %v2128 = vld [vmem:[%s7 + $0x768] sm:$0xff]
    %v2129 = vld [vmem:[%s7 + $0x770] sm:$0xff]
    %v2130 = vld [vmem:[%s7 + $0x778] sm:$0xff]
    %v2131 = vld [vmem:[%s7 + $0x780] sm:$0xff]
    %v2132 = vld [vmem:[%s7 + $0x788] sm:$0xff]
    %v2133 = vld [vmem:[%s7 + $0x790] sm:$0xff]
    %v2134 = vld [vmem:[%s7 + $0x798] sm:$0xff]
    %v2135 = vld [vmem:[%s7 + $0x7a0] sm:$0xff]
    %v2136 = vld [vmem:[%s7 + $0x7a8] sm:$0xff]
    %v2137 = vld [vmem:[%s7 + $0x7b0] sm:$0xff]
    %v2138 = vld [vmem:[%s7 + $0x7b8] sm:$0xff]
    %v2139 = vld [vmem:[%s7 + $0x7c0] sm:$0xff]
    %v2140 = vld [vmem:[%s7 + $0x7c8] sm:$0xff]
    %v2141 = vld [vmem:[%s7 + $0x7d0] sm:$0xff]
    %v2142 = vld [vmem:[%s7 + $0x7d8] sm:$0xff]
    %v2143 = vld [vmem:[%s7 + $0x7e0] sm:$0xff]
    %v2144 = vld [vmem:[%s7 + $0x7e8] sm:$0xff]
    %v2145 = vld [vmem:[%s7 + $0x7f0] sm:$0xff]
    %v2146 = vld [vmem:[%s7 + $0x7f8] sm:$0xff]
    %v2147 = vld [vmem:[%s7 + $0x800] sm:$0xff]
    %v2148 = vld [vmem:[%s7 + $0x808] sm:$0xff]
    %v2149 = vld [vmem:[%s7 + $0x810] sm:$0xff]
    %v2150 = vld [vmem:[%s7 + $0x818] sm:$0xff]
    %v2151 = vld [vmem:[%s7 + $0x820] sm:$0xff]
    %v2152 = vld [vmem:[%s7 + $0x828] sm:$0xff]
    %v2153 = vld [vmem:[%s7 + $0x830] sm:$0xff]
    %v2154 = vld [vmem:[%s7 + $0x838] sm:$0xff]
    %v2155 = vld [vmem:[%s7 + $0x840] sm:$0xff]
    %v2156 = vld [vmem:[%s7 + $0x848] sm:$0xff]
    %v2157 = vld [vmem:[%s7 + $0x850] sm:$0xff]
    %v2158 = vld [vmem:[%s7 + $0x858] sm:$0xff]
    %v2159 = vld [vmem:[%s7 + $0x860] sm:$0xff]
    %v2160 = vld [vmem:[%s7 + $0x868] sm:$0xff]
    %v2161 = vld [vmem:[%s7 + $0x870] sm:$0xff]
    %v2162 = vld [vmem:[%s7 + $0x878] sm:$0xff]
    %v2163 = vld [vmem:[%s7 + $0x880] sm:$0xff]
    %v2164 = vld [vmem:[%s7 + $0x888] sm:$0xff]
    %v2165 = vld [vmem:[%s7 + $0x890] sm:$0xff]
    %v2166 = vld [vmem:[%s7 + $0x898] sm:$0xff]
    %v2167 = vld [vmem:[%s7 + $0x8a0] sm:$0xff]
    %v2168 = vld [vmem:[%s7 + $0x8a8] sm:$0xff]
    %v2169 = vld [vmem:[%s7 + $0x8b0] sm:$0xff]
    %v2170 = vld [vmem:[%s7 + $0x8b8] sm:$0xff]
    %v2171 = vld [vmem:[%s7 + $0x8c0] sm:$0xff]
    %v2172 = vld [vmem:[%s7 + $0x8c8] sm:$0xff]
    %v2173 = vld [vmem:[%s7 + $0x8d0] sm:$0xff]
    %v2174 = vld [vmem:[%s7 + $0x8d8] sm:$0xff]
    %v2175 = vld [vmem:[%s7 + $0x8e0] sm:$0xff]
    %v2176 = vld [vmem:[%s7 + $0x8e8] sm:$0xff]
    %v2177 = vld [vmem:[%s7 + $0x8f0] sm:$0xff]
    %v2178 = vld [vmem:[%s7 + $0x8f8] sm:$0xff]
    %v2179 = vld [vmem:[%s7 + $0x900] sm:$0xff]
    %v2180 = vld [vmem:[%s7 + $0x908] sm:$0xff]
    %v2181 = vld [vmem:[%s7 + $0x910] sm:$0xff]
    %v2182 = vld [vmem:[%s7 + $0x918] sm:$0xff]
    %v2183 = vld [vmem:[%s7 + $0x920] sm:$0xff]
    %v2184 = vld [vmem:[%s7 + $0x928] sm:$0xff]
    %v2185 = vld [vmem:[%s7 + $0x930] sm:$0xff]
    %v2186 = vld [vmem:[%s7 + $0x938] sm:$0xff]
    %v2187 = vld [vmem:[%s7 + $0x940] sm:$0xff]
    %v2188 = vld [vmem:[%s7 + $0x948] sm:$0xff]
    %v2189 = vld [vmem:[%s7 + $0x950] sm:$0xff]
    %v2190 = vld [vmem:[%s7 + $0x958] sm:$0xff]
    %v2191 = vld [vmem:[%s7 + $0x960] sm:$0xff]
    %v2192 = vld [vmem:[%s7 + $0x968] sm:$0xff]
    %v2193 = vld [vmem:[%s7 + $0x970] sm:$0xff]
    %v2194 = vld [vmem:[%s7 + $0x978] sm:$0xff]
    %v2195 = vld [vmem:[%s7 + $0x980] sm:$0xff]
    %v2196 = vld [vmem:[%s7 + $0x988] sm:$0xff]
    %v2197 = vld [vmem:[%s7 + $0x990] sm:$0xff]
    %v2198 = vld [vmem:[%s7 + $0x998] sm:$0xff]
    %v2199 = vld [vmem:[%s7 + $0x9a0] sm:$0xff]
    %v2200 = vld [vmem:[%s7 + $0x9a8] sm:$0xff]
    %v2201 = vld [vmem:[%s7 + $0x9b0] sm:$0xff]
    %v2202 = vld [vmem:[%s7 + $0x9b8] sm:$0xff]
    %v2203 = vld [vmem:[%s7 + $0x9c0] sm:$0xff]
    %v2204 = vld [vmem:[%s7 + $0x9c8] sm:$0xff]
    %v2205 = vld [vmem:[%s7 + $0x9d0] sm:$0xff]
    %v2206 = vld [vmem:[%s7 + $0x9d8] sm:$0xff]
    %v2207 = vld [vmem:[%s7 + $0x9e0] sm:$0xff]
    %v2208 = vld [vmem:[%s7 + $0x9e8] sm:$0xff]
    %v2209 = vld [vmem:[%s7 + $0x9f0] sm:$0xff]
    %v2210 = vld [vmem:[%s7 + $0x9f8] sm:$0xff]
    %v2211 = vld [vmem:[%s7 + $0xa00] sm:$0xff]
    %v2212 = vld [vmem:[%s7 + $0xa08] sm:$0xff]
    %v2213 = vld [vmem:[%s7 + $0xa10] sm:$0xff]
    %v2214 = vld [vmem:[%s7 + $0xa18] sm:$0xff]
    %v2215 = vld [vmem:[%s7 + $0xa20] sm:$0xff]
    %v2216 = vld [vmem:[%s7 + $0xa28] sm:$0xff]
    %v2217 = vld [vmem:[%s7 + $0xa30] sm:$0xff]
    %v2218 = vld [vmem:[%s7 + $0xa38] sm:$0xff]
    %v2219 = vld [vmem:[%s7 + $0xa40] sm:$0xff]
    %v2220 = vld [vmem:[%s7 + $0xa48] sm:$0xff]
    %v2221 = vld [vmem:[%s7 + $0xa50] sm:$0xff]
    %v2222 = vld [vmem:[%s7 + $0xa58] sm:$0xff]
    %v2223 = vld [vmem:[%s7 + $0xa60] sm:$0xff]
    %v2224 = vld [vmem:[%s7 + $0xa68] sm:$0xff]
    %v2225 = vld [vmem:[%s7 + $0xa70] sm:$0xff]
    %v2226 = vld [vmem:[%s7 + $0xa78] sm:$0xff]
    %v2227 = vld [vmem:[%s7 + $0xa80] sm:$0xff]
    %v2228 = vld [vmem:[%s7 + $0xa88] sm:$0xff]
    %v2229 = vld [vmem:[%s7 + $0xa90] sm:$0xff]
    %v2230 = vld [vmem:[%s7 + $0xa98] sm:$0xff]
    %v2231 = vld [vmem:[%s7 + $0xaa0] sm:$0xff]
    %v2232 = vld [vmem:[%s7 + $0xaa8] sm:$0xff]
    %v2233 = vld [vmem:[%s7 + $0xab0] sm:$0xff]
    %v2234 = vld [vmem:[%s7 + $0xab8] sm:$0xff]
    %v2235 = vld [vmem:[%s7 + $0xac0] sm:$0xff]
    %v2236 = vld [vmem:[%s7 + $0xac8] sm:$0xff]
    %v2237 = vld [vmem:[%s7 + $0xad0] sm:$0xff]
    %v2238 = vld [vmem:[%s7 + $0xad8] sm:$0xff]
    %v2239 = vld [vmem:[%s7 + $0xae0] sm:$0xff]
    %v2240 = vld [vmem:[%s7 + $0xae8] sm:$0xff]
    %v2241 = vld [vmem:[%s7 + $0xaf0] sm:$0xff]
    %v2242 = vld [vmem:[%s7 + $0xaf8] sm:$0xff]
    %v2243 = vld [vmem:[%s7 + $0xb00] sm:$0xff]
    %v2244 = vld [vmem:[%s7 + $0xb08] sm:$0xff]
    %v2245 = vld [vmem:[%s7 + $0xb10] sm:$0xff]
    %v2246 = vld [vmem:[%s7 + $0xb18] sm:$0xff]
    %v2247 = vld [vmem:[%s7 + $0xb20] sm:$0xff]
    %v2248 = vld [vmem:[%s7 + $0xb28] sm:$0xff]
    %v2249 = vld [vmem:[%s7 + $0xb30] sm:$0xff]
    %v2250 = vld [vmem:[%s7 + $0xb38] sm:$0xff]
    %v2251 = vld [vmem:[%s7 + $0xb40] sm:$0xff]
    %v2252 = vld [vmem:[%s7 + $0xb48] sm:$0xff]
    %v2253 = vld [vmem:[%s7 + $0xb50] sm:$0xff]
    %v2254 = vld [vmem:[%s7 + $0xb58] sm:$0xff]
    %v2255 = vld [vmem:[%s7 + $0xb60] sm:$0xff]
    %v2256 = vld [vmem:[%s7 + $0xb68] sm:$0xff]
    %v2257 = vld [vmem:[%s7 + $0xb70] sm:$0xff]
    %v2258 = vld [vmem:[%s7 + $0xb78] sm:$0xff]
    %v2259 = vld [vmem:[%s7 + $0xb80] sm:$0xff]
    %v2260 = vld [vmem:[%s7 + $0xb88] sm:$0xff]
    %v2261 = vld [vmem:[%s7 + $0xb90] sm:$0xff]
    %v2262 = vld [vmem:[%s7 + $0xb98] sm:$0xff]
    %v2263 = vld [vmem:[%s7 + $0xba0] sm:$0xff]
    %v2264 = vld [vmem:[%s7 + $0xba8] sm:$0xff]
    %v2265 = vld [vmem:[%s7 + $0xbb0] sm:$0xff]
    %v2266 = vld [vmem:[%s7 + $0xbb8] sm:$0xff]
    %v2267 = vld [vmem:[%s7 + $0xbc0] sm:$0xff]
    %v2268 = vld [vmem:[%s7 + $0xbc8] sm:$0xff]
    %v2269 = vld [vmem:[%s7 + $0xbd0] sm:$0xff]
    %v2270 = vld [vmem:[%s7 + $0xbd8] sm:$0xff]
    %v2271 = vld [vmem:[%s7 + $0xbe0] sm:$0xff]
    %v2272 = vld [vmem:[%s7 + $0xbe8] sm:$0xff]
    %v2273 = vld [vmem:[%s7 + $0xbf0] sm:$0xff]
    %v2274 = vld [vmem:[%s7 + $0xbf8] sm:$0xff]
    %v2275 = vld [vmem:[%s7 + $0xc00] sm:$0xff]
    %v2276 = vld [vmem:[%s7 + $0xc08] sm:$0xff]
    %v2277 = vld [vmem:[%s7 + $0xc10] sm:$0xff]
    %v2278 = vld [vmem:[%s7 + $0xc18] sm:$0xff]
    %v2279 = vld [vmem:[%s7 + $0xc20] sm:$0xff]
    %v2280 = vld [vmem:[%s7 + $0xc28] sm:$0xff]
    %v2281 = vld [vmem:[%s7 + $0xc30] sm:$0xff]
    %v2282 = vld [vmem:[%s7 + $0xc38] sm:$0xff]
    %v2283 = vld [vmem:[%s7 + $0xc40] sm:$0xff]
    %v2284 = vld [vmem:[%s7 + $0xc48] sm:$0xff]
    %v2285 = vld [vmem:[%s7 + $0xc50] sm:$0xff]
    %v2286 = vld [vmem:[%s7 + $0xc58] sm:$0xff]
    %v2287 = vld [vmem:[%s7 + $0xc60] sm:$0xff]
    %v2288 = vld [vmem:[%s7 + $0xc68] sm:$0xff]
    %v2289 = vld [vmem:[%s7 + $0xc70] sm:$0xff]
    %v2290 = vld [vmem:[%s7 + $0xc78] sm:$0xff]
    %v2291 = vld [vmem:[%s7 + $0xc80] sm:$0xff]
    %v2292 = vld [vmem:[%s7 + $0xc88] sm:$0xff]
    %v2293 = vld [vmem:[%s7 + $0xc90] sm:$0xff]
    %v2294 = vld [vmem:[%s7 + $0xc98] sm:$0xff]
    %v2295 = vld [vmem:[%s7 + $0xca0] sm:$0xff]
    %v2296 = vld [vmem:[%s7 + $0xca8] sm:$0xff]
    %v2297 = vld [vmem:[%s7 + $0xcb0] sm:$0xff]
    %v2298 = vld [vmem:[%s7 + $0xcb8] sm:$0xff]
    %v2299 = vld [vmem:[%s7 + $0xcc0] sm:$0xff]
    %v2300 = vld [vmem:[%s7 + $0xcc8] sm:$0xff]
    %v2301 = vld [vmem:[%s7 + $0xcd0] sm:$0xff]
    %v2302 = vld [vmem:[%s7 + $0xcd8] sm:$0xff]
    %v2303 = vld [vmem:[%s7 + $0xce0] sm:$0xff]
    %v2304 = vld [vmem:[%s7 + $0xce8] sm:$0xff]
    %v2305 = vld [vmem:[%s7 + $0xcf0] sm:$0xff]
    %v2306 = vld [vmem:[%s7 + $0xcf8] sm:$0xff]
    %v2307 = vld [vmem:[%s7 + $0xd00] sm:$0xff]
    %v2308 = vld [vmem:[%s7 + $0xd08] sm:$0xff]
    %v2309 = vld [vmem:[%s7 + $0xd10] sm:$0xff]
    %v2310 = vld [vmem:[%s7 + $0xd18] sm:$0xff]
    %v2311 = vld [vmem:[%s7 + $0xd20] sm:$0xff]
    %v2312 = vld [vmem:[%s7 + $0xd28] sm:$0xff]
    %v2313 = vld [vmem:[%s7 + $0xd30] sm:$0xff]
    %v2314 = vld [vmem:[%s7 + $0xd38] sm:$0xff]
    %v2315 = vld [vmem:[%s7 + $0xd40] sm:$0xff]
    %v2316 = vld [vmem:[%s7 + $0xd48] sm:$0xff]
    %v2317 = vld [vmem:[%s7 + $0xd50] sm:$0xff]
    %v2318 = vld [vmem:[%s7 + $0xd58] sm:$0xff]
    %v2319 = vld [vmem:[%s7 + $0xd60] sm:$0xff]
    %v2320 = vld [vmem:[%s7 + $0xd68] sm:$0xff]
    %v2321 = vld [vmem:[%s7 + $0xd70] sm:$0xff]
    %v2322 = vld [vmem:[%s7 + $0xd78] sm:$0xff]
    %v2323 = vld [vmem:[%s7 + $0xd80] sm:$0xff]
    %v2324 = vld [vmem:[%s7 + $0xd88] sm:$0xff]
    %v2325 = vld [vmem:[%s7 + $0xd90] sm:$0xff]
    %v2326 = vld [vmem:[%s7 + $0xd98] sm:$0xff]
    %v2327 = vld [vmem:[%s7 + $0xda0] sm:$0xff]
    %v2328 = vld [vmem:[%s7 + $0xda8] sm:$0xff]
    %v2329 = vld [vmem:[%s7 + $0xdb0] sm:$0xff]
    %v2330 = vld [vmem:[%s7 + $0xdb8] sm:$0xff]
    %v2331 = vld [vmem:[%s7 + $0xdc0] sm:$0xff]
    %v2332 = vld [vmem:[%s7 + $0xdc8] sm:$0xff]
    %v2333 = vld [vmem:[%s7 + $0xdd0] sm:$0xff]
    %v2334 = vld [vmem:[%s7 + $0xdd8] sm:$0xff]
    %v2335 = vld [vmem:[%s7 + $0xde0] sm:$0xff]
    %v2336 = vld [vmem:[%s7 + $0xde8] sm:$0xff]
    %v2337 = vld [vmem:[%s7 + $0xdf0] sm:$0xff]
    %v2338 = vld [vmem:[%s7 + $0xdf8] sm:$0xff]
    %v2339 = vld [vmem:[%s7 + $0xe00] sm:$0xff]
    %v2340 = vld [vmem:[%s7 + $0xe08] sm:$0xff]
    %v2341 = vld [vmem:[%s7 + $0xe10] sm:$0xff]
    %v2342 = vld [vmem:[%s7 + $0xe18] sm:$0xff]
    %v2343 = vld [vmem:[%s7 + $0xe20] sm:$0xff]
    %v2344 = vld [vmem:[%s7 + $0xe28] sm:$0xff]
    %v2345 = vld [vmem:[%s7 + $0xe30] sm:$0xff]
    %v2346 = vld [vmem:[%s7 + $0xe38] sm:$0xff]
    %v2347 = vld [vmem:[%s7 + $0xe40] sm:$0xff]
    %v2348 = vld [vmem:[%s7 + $0xe48] sm:$0xff]
    %v2349 = vld [vmem:[%s7 + $0xe50] sm:$0xff]
    %v2350 = vld [vmem:[%s7 + $0xe58] sm:$0xff]
    %v2351 = vld [vmem:[%s7 + $0xe60] sm:$0xff]
    %v2352 = vld [vmem:[%s7 + $0xe68] sm:$0xff]
    %v2353 = vld [vmem:[%s7 + $0xe70] sm:$0xff]
    %v2354 = vld [vmem:[%s7 + $0xe78] sm:$0xff]
    %v2355 = vld [vmem:[%s7 + $0xe80] sm:$0xff]
    %v2356 = vld [vmem:[%s7 + $0xe88] sm:$0xff]
    %v2357 = vld [vmem:[%s7 + $0xe90] sm:$0xff]
    %v2358 = vld [vmem:[%s7 + $0xe98] sm:$0xff]
    %v2359 = vld [vmem:[%s7 + $0xea0] sm:$0xff]
    %v2360 = vld [vmem:[%s7 + $0xea8] sm:$0xff]
    %v2361 = vld [vmem:[%s7 + $0xeb0] sm:$0xff]
    %v2362 = vld [vmem:[%s7 + $0xeb8] sm:$0xff]
    %v2363 = vld [vmem:[%s7 + $0xec0] sm:$0xff]
    %v2364 = vld [vmem:[%s7 + $0xec8] sm:$0xff]
    %v2365 = vld [vmem:[%s7 + $0xed0] sm:$0xff]
    %v2366 = vld [vmem:[%s7 + $0xed8] sm:$0xff]
    %v2367 = vld [vmem:[%s7 + $0xee0] sm:$0xff]
    %v2368 = vld [vmem:[%s7 + $0xee8] sm:$0xff]
    %v2369 = vld [vmem:[%s7 + $0xef0] sm:$0xff]
    %v2370 = vld [vmem:[%s7 + $0xef8] sm:$0xff]
    %v2371 = vld [vmem:[%s7 + $0xf00] sm:$0xff]
    %v2372 = vld [vmem:[%s7 + $0xf08] sm:$0xff]
    %v2373 = vld [vmem:[%s7 + $0xf10] sm:$0xff]
    %v2374 = vld [vmem:[%s7 + $0xf18] sm:$0xff]
    %v2375 = vld [vmem:[%s7 + $0xf20] sm:$0xff]
    %v2376 = vld [vmem:[%s7 + $0xf28] sm:$0xff]
    %v2377 = vld [vmem:[%s7 + $0xf30] sm:$0xff]
    %v2378 = vld [vmem:[%s7 + $0xf38] sm:$0xff]
    %v2379 = vld [vmem:[%s7 + $0xf40] sm:$0xff]
    %v2380 = vld [vmem:[%s7 + $0xf48] sm:$0xff]
    %v2381 = vld [vmem:[%s7 + $0xf50] sm:$0xff]
    %v2382 = vld [vmem:[%s7 + $0xf58] sm:$0xff]
    %v2383 = vld [vmem:[%s7 + $0xf60] sm:$0xff]
    %v2384 = vld [vmem:[%s7 + $0xf68] sm:$0xff]
    %v2385 = vld [vmem:[%s7 + $0xf70] sm:$0xff]
    %v2386 = vld [vmem:[%s7 + $0xf78] sm:$0xff]
    %v2387 = vld [vmem:[%s7 + $0xf80] sm:$0xff]
    %v2388 = vld [vmem:[%s7 + $0xf88] sm:$0xff]
    %v2389 = vld [vmem:[%s7 + $0xf90] sm:$0xff]
    %v2390 = vld [vmem:[%s7 + $0xf98] sm:$0xff]
    %v2391 = vld [vmem:[%s7 + $0xfa0] sm:$0xff]
    %v2392 = vld [vmem:[%s7 + $0xfa8] sm:$0xff]
    %v2393 = vld [vmem:[%s7 + $0xfb0] sm:$0xff]
    %v2394 = vld [vmem:[%s7 + $0xfb8] sm:$0xff]
    %v2395 = vld [vmem:[%s7 + $0xfc0] sm:$0xff]
    %v2396 = vld [vmem:[%s7 + $0xfc8] sm:$0xff]
    %v2397 = vld [vmem:[%s7 + $0xfd0] sm:$0xff]
    %v2398 = vld [vmem:[%s7 + $0xfd8] sm:$0xff]
    %v2399 = vld [vmem:[%s7 + $0xfe0] sm:$0xff]
    %v2400 = vld [vmem:[%s7 + $0xfe8] sm:$0xff]
    %v2401 = vld [vmem:[%s7 + $0xff0] sm:$0xff]
    %v2402 = vld [vmem:[%s7 + $0xff8] sm:$0xff]
    %v2403 = vld [vmem:[%s8] sm:$0xf]
    %v2405 = vlaneseq
    %v2406 = vshrl.u32 %v2405, 7
    %v2407 = vsub.s32 0, %v2406
    %v2408 = vrot.slane %v2403, %v2407
    %v2409 = vlaneseq
    %v2410 = vshrl.u32 %v2409, 7
    %v2411 = vsub.s32 1, %v2410
    %v2412 = vrot.slane %v2403, %v2411
    %v2413 = vlaneseq
    %v2414 = vshrl.u32 %v2413, 7
    %v2415 = vsub.s32 2, %v2414
    %v2416 = vrot.slane %v2403, %v2415
    %v2417 = vlaneseq
    %v2418 = vshrl.u32 %v2417, 7
    %v2419 = vsub.s32 3, %v2418
    %v2420 = vrot.slane %v2403, %v2419
    %2425 = vmatprep.subr.mxu0 %v1952
    %2426 = vmatpush1.msra.mxu0 %v1951
    %2427 = vmatprep.subr.mxu0 %v1948
    %2428 = vmatpush1.msra.mxu0 %v1947
    %2429 = vmatprep.subr.mxu0 %v1944
    %2430 = vmatpush1.msra.mxu0 %v1943
    %2431 = vmatprep.subr.mxu0 %v1940
    %2432 = vmatpush1.msra.mxu0 %v1939
    %2433 = vmatprep.subr.mxu0 %v1936
    %2434 = vmatpush1.msra.mxu0 %v1935
    %2435 = vmatprep.subr.mxu0 %v1932
    %2436 = vmatpush1.msra.mxu0 %v1931
    %2437 = vmatprep.subr.mxu0 %v1928
    %2438 = vmatpush1.msra.mxu0 %v1927
    %2439 = vmatprep.subr.mxu0 %v1924
    %2440 = vmatpush1.msra.mxu0 %v1923
    %2441 = vmatprep.subr.mxu0 %v1920
    %2442 = vmatpush1.msra.mxu0 %v1919
    %2443 = vmatprep.subr.mxu0 %v1916
    %2444 = vmatpush1.msra.mxu0 %v1915
    %2445 = vmatprep.subr.mxu0 %v1912
    %2446 = vmatpush1.msra.mxu0 %v1911
    %2447 = vmatprep.subr.mxu0 %v1908
    %2448 = vmatpush1.msra.mxu0 %v1907
    %2449 = vmatprep.subr.mxu0 %v1904
    %2450 = vmatpush1.msra.mxu0 %v1903
    %2451 = vmatprep.subr.mxu0 %v1900
    %2452 = vmatpush1.msra.mxu0 %v1899
    %2453 = vmatprep.subr.mxu0 %v1896
    %2454 = vmatpush1.msra.mxu0 %v1895
    %2455 = vmatprep.subr.mxu0 %v1892
    %2456 = vmatpush1.msra.mxu0 %v1891
    %2457 = vmatprep.subr.mxu0 %v2016
    %2458 = vmatpush2.msra.mxu0 %v2015
    %2459 = vmatprep.subr.mxu0 %v2012
    %2460 = vmatpush2.msra.mxu0 %v2011
    %2461 = vmatprep.subr.mxu0 %v2008
    %2462 = vmatpush2.msra.mxu0 %v2007
    %2463 = vmatprep.subr.mxu0 %v2004
    %2464 = vmatpush2.msra.mxu0 %v2003
    %2465 = vmatprep.subr.mxu0 %v2000
    %2466 = vmatpush2.msra.mxu0 %v1999
    %2467 = vmatprep.subr.mxu0 %v1996
    %2468 = vmatpush2.msra.mxu0 %v1995
    %2469 = vmatprep.subr.mxu0 %v1992
    %2470 = vmatpush2.msra.mxu0 %v1991
    %2471 = vmatprep.subr.mxu0 %v1988
    %2472 = vmatpush2.msra.mxu0 %v1987
    %2473 = vmatprep.subr.mxu0 %v1984
    %2474 = vmatpush2.msra.mxu0 %v1983
    %2475 = vmatprep.subr.mxu0 %v1980
    %2476 = vmatpush2.msra.mxu0 %v1979
    %2477 = vmatprep.subr.mxu0 %v1976
    %2478 = vmatpush2.msra.mxu0 %v1975
    %2479 = vmatprep.subr.mxu0 %v1972
    %2480 = vmatpush2.msra.mxu0 %v1971
    %2481 = vmatprep.subr.mxu0 %v1968
    %2482 = vmatpush2.msra.mxu0 %v1967
    %2483 = vmatprep.subr.mxu0 %v1964
    %2484 = vmatpush2.msra.mxu0 %v1963
    %2485 = vmatprep.subr.mxu0 %v1960
    %2486 = vmatpush2.msra.mxu0 %v1959
    %2487 = vmatprep.subr.mxu0 %v1956
    %2488 = vmatpush2.msra.mxu0 %v1955
    %2489 = vmatprep.mubr.f32.mxu0 %v1884
    %2490 = vmatmul.mubr.f32.gmra.mxu0 %v1883
    %v2491 = vpop.f32.mrf.mxu0
    %v2492 = vadd.f32 %v2408, %v2491
    %v2493 = vpop.f32.mrf.mxu0
    %v2494 = vadd.f32 %v2412, %v2493
    %2495 = vdwg.mxu0
    %2496 = vmatprep.subr.mxu0 %v2080
    %2497 = vmatpush1.msra.mxu0 %v2079
    %2498 = vmatprep.subr.mxu0 %v2076
    %2499 = vmatpush1.msra.mxu0 %v2075
    %2500 = vmatprep.subr.mxu0 %v2072
    %2501 = vmatpush1.msra.mxu0 %v2071
    %2502 = vmatprep.subr.mxu0 %v2068
    %2503 = vmatpush1.msra.mxu0 %v2067
    %2504 = vmatprep.subr.mxu0 %v2064
    %2505 = vmatpush1.msra.mxu0 %v2063
    %2506 = vmatprep.subr.mxu0 %v2060
    %2507 = vmatpush1.msra.mxu0 %v2059
    %2508 = vmatprep.subr.mxu0 %v2056
    %2509 = vmatpush1.msra.mxu0 %v2055
    %2510 = vmatprep.subr.mxu0 %v2052
    %2511 = vmatpush1.msra.mxu0 %v2051
    %2512 = vmatprep.subr.mxu0 %v2048
    %2513 = vmatpush1.msra.mxu0 %v2047
    %2514 = vmatprep.subr.mxu0 %v2044
    %2515 = vmatpush1.msra.mxu0 %v2043
    %2516 = vmatprep.subr.mxu0 %v2040
    %2517 = vmatpush1.msra.mxu0 %v2039
    %2518 = vmatprep.subr.mxu0 %v2036
    %2519 = vmatpush1.msra.mxu0 %v2035
    %2520 = vmatprep.subr.mxu0 %v2032
    %2521 = vmatpush1.msra.mxu0 %v2031
    %2522 = vmatprep.subr.mxu0 %v2028
    %2523 = vmatpush1.msra.mxu0 %v2027
    %2524 = vmatprep.subr.mxu0 %v2024
    %2525 = vmatpush1.msra.mxu0 %v2023
    %2526 = vmatprep.subr.mxu0 %v2020
    %2527 = vmatpush1.msra.mxu0 %v2019
    %2528 = vmatprep.subr.mxu0 %v2144
    %2529 = vmatpush2.msra.mxu0 %v2143
    %2530 = vmatprep.subr.mxu0 %v2140
    %2531 = vmatpush2.msra.mxu0 %v2139
    %2532 = vmatprep.subr.mxu0 %v2136
    %2533 = vmatpush2.msra.mxu0 %v2135
    %2534 = vmatprep.subr.mxu0 %v2132
    %2535 = vmatpush2.msra.mxu0 %v2131
    %2536 = vmatprep.subr.mxu0 %v2128
    %2537 = vmatpush2.msra.mxu0 %v2127
    %2538 = vmatprep.subr.mxu0 %v2124
    %2539 = vmatpush2.msra.mxu0 %v2123
    %2540 = vmatprep.subr.mxu0 %v2120
    %2541 = vmatpush2.msra.mxu0 %v2119
    %2542 = vmatprep.subr.mxu0 %v2116
    %2543 = vmatpush2.msra.mxu0 %v2115
    %2544 = vmatprep.subr.mxu0 %v2112
    %2545 = vmatpush2.msra.mxu0 %v2111
    %2546 = vmatprep.subr.mxu0 %v2108
    %2547 = vmatpush2.msra.mxu0 %v2107
    %2548 = vmatprep.subr.mxu0 %v2104
    %2549 = vmatpush2.msra.mxu0 %v2103
    %2550 = vmatprep.subr.mxu0 %v2100
    %2551 = vmatpush2.msra.mxu0 %v2099
    %2552 = vmatprep.subr.mxu0 %v2096
    %2553 = vmatpush2.msra.mxu0 %v2095
    %2554 = vmatprep.subr.mxu0 %v2092
    %2555 = vmatpush2.msra.mxu0 %v2091
    %2556 = vmatprep.subr.mxu0 %v2088
    %2557 = vmatpush2.msra.mxu0 %v2087
    %2558 = vmatprep.subr.mxu0 %v2084
    %2559 = vmatpush2.msra.mxu0 %v2083
    %2560 = vmatprep.mubr.f32.mxu0 %v1886
    %2561 = vmatmul.mubr.f32.gmra.mxu0 %v1885
    %v2562 = vpop.f32.mrf.mxu0
    %v2563 = vadd.f32 %v2492, %v2562
    %v2564 = vpop.f32.mrf.mxu0
    %v2565 = vadd.f32 %v2494, %v2564
    %2566 = vdwg.mxu0
    %2567 = vmatprep.subr.mxu0 %v2208
    %2568 = vmatpush1.msra.mxu0 %v2207
    %2569 = vmatprep.subr.mxu0 %v2204
    %2570 = vmatpush1.msra.mxu0 %v2203
    %2571 = vmatprep.subr.mxu0 %v2200
    %2572 = vmatpush1.msra.mxu0 %v2199
    %2573 = vmatprep.subr.mxu0 %v2196
    %2574 = vmatpush1.msra.mxu0 %v2195
    %2575 = vmatprep.subr.mxu0 %v2192
    %2576 = vmatpush1.msra.mxu0 %v2191
    %2577 = vmatprep.subr.mxu0 %v2188
    %2578 = vmatpush1.msra.mxu0 %v2187
    %2579 = vmatprep.subr.mxu0 %v2184
    %2580 = vmatpush1.msra.mxu0 %v2183
    %2581 = vmatprep.subr.mxu0 %v2180
    %2582 = vmatpush1.msra.mxu0 %v2179
    %2583 = vmatprep.subr.mxu0 %v2176
    %2584 = vmatpush1.msra.mxu0 %v2175
    %2585 = vmatprep.subr.mxu0 %v2172
    %2586 = vmatpush1.msra.mxu0 %v2171
    %2587 = vmatprep.subr.mxu0 %v2168
    %2588 = vmatpush1.msra.mxu0 %v2167
    %2589 = vmatprep.subr.mxu0 %v2164
    %2590 = vmatpush1.msra.mxu0 %v2163
    %2591 = vmatprep.subr.mxu0 %v2160
    %2592 = vmatpush1.msra.mxu0 %v2159
    %2593 = vmatprep.subr.mxu0 %v2156
    %2594 = vmatpush1.msra.mxu0 %v2155
    %2595 = vmatprep.subr.mxu0 %v2152
    %2596 = vmatpush1.msra.mxu0 %v2151
    %2597 = vmatprep.subr.mxu0 %v2148
    %2598 = vmatpush1.msra.mxu0 %v2147
    %2599 = vmatprep.subr.mxu0 %v2272
    %2600 = vmatpush2.msra.mxu0 %v2271
    %2601 = vmatprep.subr.mxu0 %v2268
    %2602 = vmatpush2.msra.mxu0 %v2267
    %2603 = vmatprep.subr.mxu0 %v2264
    %2604 = vmatpush2.msra.mxu0 %v2263
    %2605 = vmatprep.subr.mxu0 %v2260
    %2606 = vmatpush2.msra.mxu0 %v2259
    %2607 = vmatprep.subr.mxu0 %v2256
    %2608 = vmatpush2.msra.mxu0 %v2255
    %2609 = vmatprep.subr.mxu0 %v2252
    %2610 = vmatpush2.msra.mxu0 %v2251
    %2611 = vmatprep.subr.mxu0 %v2248
    %2612 = vmatpush2.msra.mxu0 %v2247
    %2613 = vmatprep.subr.mxu0 %v2244
    %2614 = vmatpush2.msra.mxu0 %v2243
    %2615 = vmatprep.subr.mxu0 %v2240
    %2616 = vmatpush2.msra.mxu0 %v2239
    %2617 = vmatprep.subr.mxu0 %v2236
    %2618 = vmatpush2.msra.mxu0 %v2235
    %2619 = vmatprep.subr.mxu0 %v2232
    %2620 = vmatpush2.msra.mxu0 %v2231
    %2621 = vmatprep.subr.mxu0 %v2228
    %2622 = vmatpush2.msra.mxu0 %v2227
    %2623 = vmatprep.subr.mxu0 %v2224
    %2624 = vmatpush2.msra.mxu0 %v2223
    %2625 = vmatprep.subr.mxu0 %v2220
    %2626 = vmatpush2.msra.mxu0 %v2219
    %2627 = vmatprep.subr.mxu0 %v2216
    %2628 = vmatpush2.msra.mxu0 %v2215
    %2629 = vmatprep.subr.mxu0 %v2212
    %2630 = vmatpush2.msra.mxu0 %v2211
    %2631 = vmatprep.mubr.f32.mxu0 %v1888
    %2632 = vmatmul.mubr.f32.gmra.mxu0 %v1887
    %v2633 = vpop.f32.mrf.mxu0
    %v2634 = vadd.f32 %v2563, %v2633
    %v2635 = vpop.f32.mrf.mxu0
    %v2636 = vadd.f32 %v2565, %v2635
    %2637 = vdwg.mxu0
    %2638 = vmatprep.subr.mxu0 %v2336
    %2639 = vmatpush1.msra.mxu0 %v2335
    %2640 = vmatprep.subr.mxu0 %v2332
    %2641 = vmatpush1.msra.mxu0 %v2331
    %2642 = vmatprep.subr.mxu0 %v2328
    %2643 = vmatpush1.msra.mxu0 %v2327
    %2644 = vmatprep.subr.mxu0 %v2324
    %2645 = vmatpush1.msra.mxu0 %v2323
    %2646 = vmatprep.subr.mxu0 %v2320
    %2647 = vmatpush1.msra.mxu0 %v2319
    %2648 = vmatprep.subr.mxu0 %v2316
    %2649 = vmatpush1.msra.mxu0 %v2315
    %2650 = vmatprep.subr.mxu0 %v2312
    %2651 = vmatpush1.msra.mxu0 %v2311
    %2652 = vmatprep.subr.mxu0 %v2308
    %2653 = vmatpush1.msra.mxu0 %v2307
    %2654 = vmatprep.subr.mxu0 %v2304
    %2655 = vmatpush1.msra.mxu0 %v2303
    %2656 = vmatprep.subr.mxu0 %v2300
    %2657 = vmatpush1.msra.mxu0 %v2299
    %2658 = vmatprep.subr.mxu0 %v2296
    %2659 = vmatpush1.msra.mxu0 %v2295
    %2660 = vmatprep.subr.mxu0 %v2292
    %2661 = vmatpush1.msra.mxu0 %v2291
    %2662 = vmatprep.subr.mxu0 %v2288
    %2663 = vmatpush1.msra.mxu0 %v2287
    %2664 = vmatprep.subr.mxu0 %v2284
    %2665 = vmatpush1.msra.mxu0 %v2283
    %2666 = vmatprep.subr.mxu0 %v2280
    %2667 = vmatpush1.msra.mxu0 %v2279
    %2668 = vmatprep.subr.mxu0 %v2276
    %2669 = vmatpush1.msra.mxu0 %v2275
    %2670 = vmatprep.subr.mxu0 %v2400
    %2671 = vmatpush2.msra.mxu0 %v2399
    %2672 = vmatprep.subr.mxu0 %v2396
    %2673 = vmatpush2.msra.mxu0 %v2395
    %2674 = vmatprep.subr.mxu0 %v2392
    %2675 = vmatpush2.msra.mxu0 %v2391
    %2676 = vmatprep.subr.mxu0 %v2388
    %2677 = vmatpush2.msra.mxu0 %v2387
    %2678 = vmatprep.subr.mxu0 %v2384
    %2679 = vmatpush2.msra.mxu0 %v2383
    %2680 = vmatprep.subr.mxu0 %v2380
    %2681 = vmatpush2.msra.mxu0 %v2379
    %2682 = vmatprep.subr.mxu0 %v2376
    %2683 = vmatpush2.msra.mxu0 %v2375
    %2684 = vmatprep.subr.mxu0 %v2372
    %2685 = vmatpush2.msra.mxu0 %v2371
    %2686 = vmatprep.subr.mxu0 %v2368
    %2687 = vmatpush2.msra.mxu0 %v2367
    %2688 = vmatprep.subr.mxu0 %v2364
    %2689 = vmatpush2.msra.mxu0 %v2363
    %2690 = vmatprep.subr.mxu0 %v2360
    %2691 = vmatpush2.msra.mxu0 %v2359
    %2692 = vmatprep.subr.mxu0 %v2356
    %2693 = vmatpush2.msra.mxu0 %v2355
    %2694 = vmatprep.subr.mxu0 %v2352
    %2695 = vmatpush2.msra.mxu0 %v2351
    %2696 = vmatprep.subr.mxu0 %v2348
    %2697 = vmatpush2.msra.mxu0 %v2347
    %2698 = vmatprep.subr.mxu0 %v2344
    %2699 = vmatpush2.msra.mxu0 %v2343
    %2700 = vmatprep.subr.mxu0 %v2340
    %2701 = vmatpush2.msra.mxu0 %v2339
    %2702 = vmatprep.mubr.f32.mxu0 %v1890
    %2703 = vmatmul.mubr.f32.gmra.mxu0 %v1889
    %v2704 = vpop.f32.mrf.mxu0
    %v2705 = vadd.f32 %v2634, %v2704
    %v2706 = vpop.f32.mrf.mxu0
    %v2707 = vadd.f32 %v2636, %v2706
    %2708 = vdwg.mxu0
    %2709 = vmatprep.subr.mxu0 %v1954
    %2710 = vmatpush1.msra.mxu0 %v1953
    %2711 = vmatprep.subr.mxu0 %v1950
    %2712 = vmatpush1.msra.mxu0 %v1949
    %2713 = vmatprep.subr.mxu0 %v1946
    %2714 = vmatpush1.msra.mxu0 %v1945
    %2715 = vmatprep.subr.mxu0 %v1942
    %2716 = vmatpush1.msra.mxu0 %v1941
    %2717 = vmatprep.subr.mxu0 %v1938
    %2718 = vmatpush1.msra.mxu0 %v1937
    %2719 = vmatprep.subr.mxu0 %v1934
    %2720 = vmatpush1.msra.mxu0 %v1933
    %2721 = vmatprep.subr.mxu0 %v1930
    %2722 = vmatpush1.msra.mxu0 %v1929
    %2723 = vmatprep.subr.mxu0 %v1926
    %2724 = vmatpush1.msra.mxu0 %v1925
    %2725 = vmatprep.subr.mxu0 %v1922
    %2726 = vmatpush1.msra.mxu0 %v1921
    %2727 = vmatprep.subr.mxu0 %v1918
    %2728 = vmatpush1.msra.mxu0 %v1917
    %2729 = vmatprep.subr.mxu0 %v1914
    %2730 = vmatpush1.msra.mxu0 %v1913
    %2731 = vmatprep.subr.mxu0 %v1910
    %2732 = vmatpush1.msra.mxu0 %v1909
    %2733 = vmatprep.subr.mxu0 %v1906
    %2734 = vmatpush1.msra.mxu0 %v1905
    %2735 = vmatprep.subr.mxu0 %v1902
    %2736 = vmatpush1.msra.mxu0 %v1901
    %2737 = vmatprep.subr.mxu0 %v1898
    %2738 = vmatpush1.msra.mxu0 %v1897
    %2739 = vmatprep.subr.mxu0 %v1894
    %2740 = vmatpush1.msra.mxu0 %v1893
    %2741 = vmatprep.subr.mxu0 %v2018
    %2742 = vmatpush2.msra.mxu0 %v2017
    %2743 = vmatprep.subr.mxu0 %v2014
    %2744 = vmatpush2.msra.mxu0 %v2013
    %2745 = vmatprep.subr.mxu0 %v2010
    %2746 = vmatpush2.msra.mxu0 %v2009
    %2747 = vmatprep.subr.mxu0 %v2006
    %2748 = vmatpush2.msra.mxu0 %v2005
    %2749 = vmatprep.subr.mxu0 %v2002
    %2750 = vmatpush2.msra.mxu0 %v2001
    %2751 = vmatprep.subr.mxu0 %v1998
    %2752 = vmatpush2.msra.mxu0 %v1997
    %2753 = vmatprep.subr.mxu0 %v1994
    %2754 = vmatpush2.msra.mxu0 %v1993
    %2755 = vmatprep.subr.mxu0 %v1990
    %2756 = vmatpush2.msra.mxu0 %v1989
    %2757 = vmatprep.subr.mxu0 %v1986
    %2758 = vmatpush2.msra.mxu0 %v1985
    %2759 = vmatprep.subr.mxu0 %v1982
    %2760 = vmatpush2.msra.mxu0 %v1981
    %2761 = vmatprep.subr.mxu0 %v1978
    %2762 = vmatpush2.msra.mxu0 %v1977
    %2763 = vmatprep.subr.mxu0 %v1974
    %2764 = vmatpush2.msra.mxu0 %v1973
    %2765 = vmatprep.subr.mxu0 %v1970
    %2766 = vmatpush2.msra.mxu0 %v1969
    %2767 = vmatprep.subr.mxu0 %v1966
    %2768 = vmatpush2.msra.mxu0 %v1965
    %2769 = vmatprep.subr.mxu0 %v1962
    %2770 = vmatpush2.msra.mxu0 %v1961
    %2771 = vmatprep.subr.mxu0 %v1958
    %2772 = vmatpush2.msra.mxu0 %v1957
    %2773 = vmatprep.mubr.f32.mxu0 %v1884
    %2774 = vmatmul.mubr.f32.gmra.mxu0 %v1883
    %v2775 = vpop.f32.mrf.mxu0
    %v2776 = vadd.f32 %v2416, %v2775
    %v2777 = vpop.f32.mrf.mxu0
    %v2778 = vadd.f32 %v2420, %v2777
    %2779 = vdwg.mxu0
    %2780 = vmatprep.subr.mxu0 %v2082
    %2781 = vmatpush1.msra.mxu0 %v2081
    %2782 = vmatprep.subr.mxu0 %v2078
    %2783 = vmatpush1.msra.mxu0 %v2077
    %2784 = vmatprep.subr.mxu0 %v2074
    %2785 = vmatpush1.msra.mxu0 %v2073
    %2786 = vmatprep.subr.mxu0 %v2070
    %2787 = vmatpush1.msra.mxu0 %v2069
    %2788 = vmatprep.subr.mxu0 %v2066
    %2789 = vmatpush1.msra.mxu0 %v2065
    %2790 = vmatprep.subr.mxu0 %v2062
    %2791 = vmatpush1.msra.mxu0 %v2061
    %2792 = vmatprep.subr.mxu0 %v2058
    %2793 = vmatpush1.msra.mxu0 %v2057
    %2794 = vmatprep.subr.mxu0 %v2054
    %2795 = vmatpush1.msra.mxu0 %v2053
    %2796 = vmatprep.subr.mxu0 %v2050
    %2797 = vmatpush1.msra.mxu0 %v2049
    %2798 = vmatprep.subr.mxu0 %v2046
    %2799 = vmatpush1.msra.mxu0 %v2045
    %2800 = vmatprep.subr.mxu0 %v2042
    %2801 = vmatpush1.msra.mxu0 %v2041
    %2802 = vmatprep.subr.mxu0 %v2038
    %2803 = vmatpush1.msra.mxu0 %v2037
    %2804 = vmatprep.subr.mxu0 %v2034
    %2805 = vmatpush1.msra.mxu0 %v2033
    %2806 = vmatprep.subr.mxu0 %v2030
    %2807 = vmatpush1.msra.mxu0 %v2029
    %2808 = vmatprep.subr.mxu0 %v2026
    %2809 = vmatpush1.msra.mxu0 %v2025
    %2810 = vmatprep.subr.mxu0 %v2022
    %2811 = vmatpush1.msra.mxu0 %v2021
    %2812 = vmatprep.subr.mxu0 %v2146
    %2813 = vmatpush2.msra.mxu0 %v2145
    %2814 = vmatprep.subr.mxu0 %v2142
    %2815 = vmatpush2.msra.mxu0 %v2141
    %2816 = vmatprep.subr.mxu0 %v2138
    %2817 = vmatpush2.msra.mxu0 %v2137
    %2818 = vmatprep.subr.mxu0 %v2134
    %2819 = vmatpush2.msra.mxu0 %v2133
    %2820 = vmatprep.subr.mxu0 %v2130
    %2821 = vmatpush2.msra.mxu0 %v2129
    %2822 = vmatprep.subr.mxu0 %v2126
    %2823 = vmatpush2.msra.mxu0 %v2125
    %2824 = vmatprep.subr.mxu0 %v2122
    %2825 = vmatpush2.msra.mxu0 %v2121
    %2826 = vmatprep.subr.mxu0 %v2118
    %2827 = vmatpush2.msra.mxu0 %v2117
    %2828 = vmatprep.subr.mxu0 %v2114
    %2829 = vmatpush2.msra.mxu0 %v2113
    %2830 = vmatprep.subr.mxu0 %v2110
    %2831 = vmatpush2.msra.mxu0 %v2109
    %2832 = vmatprep.subr.mxu0 %v2106
    %2833 = vmatpush2.msra.mxu0 %v2105
    %2834 = vmatprep.subr.mxu0 %v2102
    %2835 = vmatpush2.msra.mxu0 %v2101
    %2836 = vmatprep.subr.mxu0 %v2098
    %2837 = vmatpush2.msra.mxu0 %v2097
    %2838 = vmatprep.subr.mxu0 %v2094
    %2839 = vmatpush2.msra.mxu0 %v2093
    %2840 = vmatprep.subr.mxu0 %v2090
    %2841 = vmatpush2.msra.mxu0 %v2089
    %2842 = vmatprep.subr.mxu0 %v2086
    %2843 = vmatpush2.msra.mxu0 %v2085
    %2844 = vmatprep.mubr.f32.mxu0 %v1886
    %2845 = vmatmul.mubr.f32.gmra.mxu0 %v1885
    %v2846 = vpop.f32.mrf.mxu0
    %v2847 = vadd.f32 %v2776, %v2846
    %v2848 = vpop.f32.mrf.mxu0
    %v2849 = vadd.f32 %v2778, %v2848
    %2850 = vdwg.mxu0
    %2851 = vmatprep.subr.mxu0 %v2210
    %2852 = vmatpush1.msra.mxu0 %v2209
    %2853 = vmatprep.subr.mxu0 %v2206
    %2854 = vmatpush1.msra.mxu0 %v2205
    %2855 = vmatprep.subr.mxu0 %v2202
    %2856 = vmatpush1.msra.mxu0 %v2201
    %2857 = vmatprep.subr.mxu0 %v2198
    %2858 = vmatpush1.msra.mxu0 %v2197
    %2859 = vmatprep.subr.mxu0 %v2194
    %2860 = vmatpush1.msra.mxu0 %v2193
    %2861 = vmatprep.subr.mxu0 %v2190
    %2862 = vmatpush1.msra.mxu0 %v2189
    %2863 = vmatprep.subr.mxu0 %v2186
    %2864 = vmatpush1.msra.mxu0 %v2185
    %2865 = vmatprep.subr.mxu0 %v2182
    %2866 = vmatpush1.msra.mxu0 %v2181
    %2867 = vmatprep.subr.mxu0 %v2178
    %2868 = vmatpush1.msra.mxu0 %v2177
    %2869 = vmatprep.subr.mxu0 %v2174
    %2870 = vmatpush1.msra.mxu0 %v2173
    %2871 = vmatprep.subr.mxu0 %v2170
    %2872 = vmatpush1.msra.mxu0 %v2169
    %2873 = vmatprep.subr.mxu0 %v2166
    %2874 = vmatpush1.msra.mxu0 %v2165
    %2875 = vmatprep.subr.mxu0 %v2162
    %2876 = vmatpush1.msra.mxu0 %v2161
    %2877 = vmatprep.subr.mxu0 %v2158
    %2878 = vmatpush1.msra.mxu0 %v2157
    %2879 = vmatprep.subr.mxu0 %v2154
    %2880 = vmatpush1.msra.mxu0 %v2153
    %2881 = vmatprep.subr.mxu0 %v2150
    %2882 = vmatpush1.msra.mxu0 %v2149
    %2883 = vmatprep.subr.mxu0 %v2274
    %2884 = vmatpush2.msra.mxu0 %v2273
    %2885 = vmatprep.subr.mxu0 %v2270
    %2886 = vmatpush2.msra.mxu0 %v2269
    %2887 = vmatprep.subr.mxu0 %v2266
    %2888 = vmatpush2.msra.mxu0 %v2265
    %2889 = vmatprep.subr.mxu0 %v2262
    %2890 = vmatpush2.msra.mxu0 %v2261
    %2891 = vmatprep.subr.mxu0 %v2258
    %2892 = vmatpush2.msra.mxu0 %v2257
    %2893 = vmatprep.subr.mxu0 %v2254
    %2894 = vmatpush2.msra.mxu0 %v2253
    %2895 = vmatprep.subr.mxu0 %v2250
    %2896 = vmatpush2.msra.mxu0 %v2249
    %2897 = vmatprep.subr.mxu0 %v2246
    %2898 = vmatpush2.msra.mxu0 %v2245
    %2899 = vmatprep.subr.mxu0 %v2242
    %2900 = vmatpush2.msra.mxu0 %v2241
    %2901 = vmatprep.subr.mxu0 %v2238
    %2902 = vmatpush2.msra.mxu0 %v2237
    %2903 = vmatprep.subr.mxu0 %v2234
    %2904 = vmatpush2.msra.mxu0 %v2233
    %2905 = vmatprep.subr.mxu0 %v2230
    %2906 = vmatpush2.msra.mxu0 %v2229
    %2907 = vmatprep.subr.mxu0 %v2226
    %2908 = vmatpush2.msra.mxu0 %v2225
    %2909 = vmatprep.subr.mxu0 %v2222
    %2910 = vmatpush2.msra.mxu0 %v2221
    %2911 = vmatprep.subr.mxu0 %v2218
    %2912 = vmatpush2.msra.mxu0 %v2217
    %2913 = vmatprep.subr.mxu0 %v2214
    %2914 = vmatpush2.msra.mxu0 %v2213
    %2915 = vmatprep.mubr.f32.mxu0 %v1888
    %2916 = vmatmul.mubr.f32.gmra.mxu0 %v1887
    %v2917 = vpop.f32.mrf.mxu0
    %v2918 = vadd.f32 %v2847, %v2917
    %v2919 = vpop.f32.mrf.mxu0
    %v2920 = vadd.f32 %v2849, %v2919
    %2921 = vdwg.mxu0
    %2922 = vmatprep.subr.mxu0 %v2338
    %2923 = vmatpush1.msra.mxu0 %v2337
    %2924 = vmatprep.subr.mxu0 %v2334
    %2925 = vmatpush1.msra.mxu0 %v2333
    %2926 = vmatprep.subr.mxu0 %v2330
    %2927 = vmatpush1.msra.mxu0 %v2329
    %2928 = vmatprep.subr.mxu0 %v2326
    %2929 = vmatpush1.msra.mxu0 %v2325
    %2930 = vmatprep.subr.mxu0 %v2322
    %2931 = vmatpush1.msra.mxu0 %v2321
    %2932 = vmatprep.subr.mxu0 %v2318
    %2933 = vmatpush1.msra.mxu0 %v2317
    %2934 = vmatprep.subr.mxu0 %v2314
    %2935 = vmatpush1.msra.mxu0 %v2313
    %2936 = vmatprep.subr.mxu0 %v2310
    %2937 = vmatpush1.msra.mxu0 %v2309
    %2938 = vmatprep.subr.mxu0 %v2306
    %2939 = vmatpush1.msra.mxu0 %v2305
    %2940 = vmatprep.subr.mxu0 %v2302
    %2941 = vmatpush1.msra.mxu0 %v2301
    %2942 = vmatprep.subr.mxu0 %v2298
    %2943 = vmatpush1.msra.mxu0 %v2297
    %2944 = vmatprep.subr.mxu0 %v2294
    %2945 = vmatpush1.msra.mxu0 %v2293
    %2946 = vmatprep.subr.mxu0 %v2290
    %2947 = vmatpush1.msra.mxu0 %v2289
    %2948 = vmatprep.subr.mxu0 %v2286
    %2949 = vmatpush1.msra.mxu0 %v2285
    %2950 = vmatprep.subr.mxu0 %v2282
    %2951 = vmatpush1.msra.mxu0 %v2281
    %2952 = vmatprep.subr.mxu0 %v2278
    %2953 = vmatpush1.msra.mxu0 %v2277
    %2954 = vmatprep.subr.mxu0 %v2402
    %2955 = vmatpush2.msra.mxu0 %v2401
    %2956 = vmatprep.subr.mxu0 %v2398
    %2957 = vmatpush2.msra.mxu0 %v2397
    %2958 = vmatprep.subr.mxu0 %v2394
    %2959 = vmatpush2.msra.mxu0 %v2393
    %2960 = vmatprep.subr.mxu0 %v2390
    %2961 = vmatpush2.msra.mxu0 %v2389
    %2962 = vmatprep.subr.mxu0 %v2386
    %2963 = vmatpush2.msra.mxu0 %v2385
    %2964 = vmatprep.subr.mxu0 %v2382
    %2965 = vmatpush2.msra.mxu0 %v2381
    %2966 = vmatprep.subr.mxu0 %v2378
    %2967 = vmatpush2.msra.mxu0 %v2377
    %2968 = vmatprep.subr.mxu0 %v2374
    %2969 = vmatpush2.msra.mxu0 %v2373
    %2970 = vmatprep.subr.mxu0 %v2370
    %2971 = vmatpush2.msra.mxu0 %v2369
    %2972 = vmatprep.subr.mxu0 %v2366
    %2973 = vmatpush2.msra.mxu0 %v2365
    %2974 = vmatprep.subr.mxu0 %v2362
    %2975 = vmatpush2.msra.mxu0 %v2361
    %2976 = vmatprep.subr.mxu0 %v2358
    %2977 = vmatpush2.msra.mxu0 %v2357
    %2978 = vmatprep.subr.mxu0 %v2354
    %2979 = vmatpush2.msra.mxu0 %v2353
    %2980 = vmatprep.subr.mxu0 %v2350
    %2981 = vmatpush2.msra.mxu0 %v2349
    %2982 = vmatprep.subr.mxu0 %v2346
    %2983 = vmatpush2.msra.mxu0 %v2345
    %2984 = vmatprep.subr.mxu0 %v2342
    %2985 = vmatpush2.msra.mxu0 %v2341
    %2986 = vmatprep.mubr.f32.mxu0 %v1890
    %2987 = vmatmul.mubr.f32.gmra.mxu0 %v1889
    %v2988 = vpop.f32.mrf.mxu0
    %v2989 = vadd.f32 %v2918, %v2988
    %v2990 = vpop.f32.mrf.mxu0
    %v2991 = vadd.f32 %v2920, %v2990
    %2992 = vdwg.mxu0
    %v2993 = vmax.f32 %v2705, 0.0
    %v2994 = vmax.f32 %v2707, 0.0
    %v2995 = vmax.f32 %v2989, 0.0
    %v2996 = vmax.f32 %v2991, 0.0
    %v2997 = vld [vmem:[%s9] sm:$0xff]
    %v2998 = vld [vmem:[%s9 + $0x8] sm:$0xff]
    %v2999 = vld [vmem:[%s9 + $0x10] sm:$0xff]
    %v3000 = vld [vmem:[%s9 + $0x18] sm:$0xff]
    %v3001 = vld [vmem:[%s9 + $0x20] sm:$0xff]
    %v3002 = vld [vmem:[%s9 + $0x28] sm:$0xff]
    %v3003 = vld [vmem:[%s9 + $0x30] sm:$0xff]
    %v3004 = vld [vmem:[%s9 + $0x38] sm:$0xff]
    %v3005 = vld [vmem:[%s9 + $0x40] sm:$0xff]
    %v3006 = vld [vmem:[%s9 + $0x48] sm:$0xff]
    %v3007 = vld [vmem:[%s9 + $0x50] sm:$0xff]
    %v3008 = vld [vmem:[%s9 + $0x58] sm:$0xff]
    %v3009 = vld [vmem:[%s9 + $0x60] sm:$0xff]
    %v3010 = vld [vmem:[%s9 + $0x68] sm:$0xff]
    %v3011 = vld [vmem:[%s9 + $0x70] sm:$0xff]
    %v3012 = vld [vmem:[%s9 + $0x78] sm:$0xff]
    %v3013 = vld [vmem:[%s9 + $0x80] sm:$0xff]
    %v3014 = vld [vmem:[%s9 + $0x88] sm:$0xff]
    %v3015 = vld [vmem:[%s9 + $0x90] sm:$0xff]
    %v3016 = vld [vmem:[%s9 + $0x98] sm:$0xff]
    %v3017 = vld [vmem:[%s9 + $0xa0] sm:$0xff]
    %v3018 = vld [vmem:[%s9 + $0xa8] sm:$0xff]
    %v3019 = vld [vmem:[%s9 + $0xb0] sm:$0xff]
    %v3020 = vld [vmem:[%s9 + $0xb8] sm:$0xff]
    %v3021 = vld [vmem:[%s9 + $0xc0] sm:$0xff]
    %v3022 = vld [vmem:[%s9 + $0xc8] sm:$0xff]
    %v3023 = vld [vmem:[%s9 + $0xd0] sm:$0xff]
    %v3024 = vld [vmem:[%s9 + $0xd8] sm:$0xff]
    %v3025 = vld [vmem:[%s9 + $0xe0] sm:$0xff]
    %v3026 = vld [vmem:[%s9 + $0xe8] sm:$0xff]
    %v3027 = vld [vmem:[%s9 + $0xf0] sm:$0xff]
    %v3028 = vld [vmem:[%s9 + $0xf8] sm:$0xff]
    %v3029 = vld [vmem:[%s9 + $0x100] sm:$0xff]
    %v3030 = vld [vmem:[%s9 + $0x108] sm:$0xff]
    %v3031 = vld [vmem:[%s9 + $0x110] sm:$0xff]
    %v3032 = vld [vmem:[%s9 + $0x118] sm:$0xff]
    %v3033 = vld [vmem:[%s9 + $0x120] sm:$0xff]
    %v3034 = vld [vmem:[%s9 + $0x128] sm:$0xff]
    %v3035 = vld [vmem:[%s9 + $0x130] sm:$0xff]
    %v3036 = vld [vmem:[%s9 + $0x138] sm:$0xff]
    %v3037 = vld [vmem:[%s9 + $0x140] sm:$0xff]
    %v3038 = vld [vmem:[%s9 + $0x148] sm:$0xff]
    %v3039 = vld [vmem:[%s9 + $0x150] sm:$0xff]
    %v3040 = vld [vmem:[%s9 + $0x158] sm:$0xff]
    %v3041 = vld [vmem:[%s9 + $0x160] sm:$0xff]
    %v3042 = vld [vmem:[%s9 + $0x168] sm:$0xff]
    %v3043 = vld [vmem:[%s9 + $0x170] sm:$0xff]
    %v3044 = vld [vmem:[%s9 + $0x178] sm:$0xff]
    %v3045 = vld [vmem:[%s9 + $0x180] sm:$0xff]
    %v3046 = vld [vmem:[%s9 + $0x188] sm:$0xff]
    %v3047 = vld [vmem:[%s9 + $0x190] sm:$0xff]
    %v3048 = vld [vmem:[%s9 + $0x198] sm:$0xff]
    %v3049 = vld [vmem:[%s9 + $0x1a0] sm:$0xff]
    %v3050 = vld [vmem:[%s9 + $0x1a8] sm:$0xff]
    %v3051 = vld [vmem:[%s9 + $0x1b0] sm:$0xff]
    %v3052 = vld [vmem:[%s9 + $0x1b8] sm:$0xff]
    %v3053 = vld [vmem:[%s9 + $0x1c0] sm:$0xff]
    %v3054 = vld [vmem:[%s9 + $0x1c8] sm:$0xff]
    %v3055 = vld [vmem:[%s9 + $0x1d0] sm:$0xff]
    %v3056 = vld [vmem:[%s9 + $0x1d8] sm:$0xff]
    %v3057 = vld [vmem:[%s9 + $0x1e0] sm:$0xff]
    %v3058 = vld [vmem:[%s9 + $0x1e8] sm:$0xff]
    %v3059 = vld [vmem:[%s9 + $0x1f0] sm:$0xff]
    %v3060 = vld [vmem:[%s9 + $0x1f8] sm:$0xff]
    %v3061 = vld [vmem:[%s10] sm:$0x1]
    %v3063 = vlaneseq
    %v3064 = vshrl.u32 %v3063, 7
    %v3065 = vsub.s32 0, %v3064
    %v3066 = vrot.slane %v3061, %v3065
    %3068 = vmatprep.subr.mxu0 0.0
    %3069 = vmatpush1.msra.mxu0 %v3012
    %3070 = vmatprep.subr.mxu0 0.0
    %3071 = vmatpush1.msra.mxu0 %v3011
    %3072 = vmatprep.subr.mxu0 0.0
    %3073 = vmatpush1.msra.mxu0 %v3010
    %3074 = vmatprep.subr.mxu0 0.0
    %3075 = vmatpush1.msra.mxu0 %v3009
    %3076 = vmatprep.subr.mxu0 0.0
    %3077 = vmatpush1.msra.mxu0 %v3008
    %3078 = vmatprep.subr.mxu0 0.0
    %3079 = vmatpush1.msra.mxu0 %v3007
    %3080 = vmatprep.subr.mxu0 0.0
    %3081 = vmatpush1.msra.mxu0 %v3006
    %3082 = vmatprep.subr.mxu0 0.0
    %3083 = vmatpush1.msra.mxu0 %v3005
    %3084 = vmatprep.subr.mxu0 0.0
    %3085 = vmatpush1.msra.mxu0 %v3004
    %3086 = vmatprep.subr.mxu0 0.0
    %3087 = vmatpush1.msra.mxu0 %v3003
    %3088 = vmatprep.subr.mxu0 0.0
    %3089 = vmatpush1.msra.mxu0 %v3002
    %3090 = vmatprep.subr.mxu0 0.0
    %3091 = vmatpush1.msra.mxu0 %v3001
    %3092 = vmatprep.subr.mxu0 0.0
    %3093 = vmatpush1.msra.mxu0 %v3000
    %3094 = vmatprep.subr.mxu0 0.0
    %3095 = vmatpush1.msra.mxu0 %v2999
    %3096 = vmatprep.subr.mxu0 0.0
    %3097 = vmatpush1.msra.mxu0 %v2998
    %3098 = vmatprep.subr.mxu0 0.0
    %3099 = vmatpush1.msra.mxu0 %v2997
    %3100 = vmatprep.subr.mxu0 0.0
    %3101 = vmatpush2.msra.mxu0 %v3028
    %3102 = vmatprep.subr.mxu0 0.0
    %3103 = vmatpush2.msra.mxu0 %v3027
    %3104 = vmatprep.subr.mxu0 0.0
    %3105 = vmatpush2.msra.mxu0 %v3026
    %3106 = vmatprep.subr.mxu0 0.0
    %3107 = vmatpush2.msra.mxu0 %v3025
    %3108 = vmatprep.subr.mxu0 0.0
    %3109 = vmatpush2.msra.mxu0 %v3024
    %3110 = vmatprep.subr.mxu0 0.0
    %3111 = vmatpush2.msra.mxu0 %v3023
    %3112 = vmatprep.subr.mxu0 0.0
    %3113 = vmatpush2.msra.mxu0 %v3022
    %3114 = vmatprep.subr.mxu0 0.0
    %3115 = vmatpush2.msra.mxu0 %v3021
    %3116 = vmatprep.subr.mxu0 0.0
    %3117 = vmatpush2.msra.mxu0 %v3020
    %3118 = vmatprep.subr.mxu0 0.0
    %3119 = vmatpush2.msra.mxu0 %v3019
    %3120 = vmatprep.subr.mxu0 0.0
    %3121 = vmatpush2.msra.mxu0 %v3018
    %3122 = vmatprep.subr.mxu0 0.0
    %3123 = vmatpush2.msra.mxu0 %v3017
    %3124 = vmatprep.subr.mxu0 0.0
    %3125 = vmatpush2.msra.mxu0 %v3016
    %3126 = vmatprep.subr.mxu0 0.0
    %3127 = vmatpush2.msra.mxu0 %v3015
    %3128 = vmatprep.subr.mxu0 0.0
    %3129 = vmatpush2.msra.mxu0 %v3014
    %3130 = vmatprep.subr.mxu0 0.0
    %3131 = vmatpush2.msra.mxu0 %v3013
    %3132 = vmatprep.mubr.f32.mxu0 %v2994
    %3133 = vmatmul.mubr.f32.gmra.mxu0 %v2993
    %v3134 = vpop.f32.mrf.mxu0
    %v3135 = vadd.f32 %v3066, %v3134
    %v3136 = vpop.f32.mrf.mxu0
    %3137 = vdwg.mxu0
    %3138 = vmatprep.subr.mxu0 0.0
    %3139 = vmatpush1.msra.mxu0 %v3044
    %3140 = vmatprep.subr.mxu0 0.0
    %3141 = vmatpush1.msra.mxu0 %v3043
    %3142 = vmatprep.subr.mxu0 0.0
    %3143 = vmatpush1.msra.mxu0 %v3042
    %3144 = vmatprep.subr.mxu0 0.0
    %3145 = vmatpush1.msra.mxu0 %v3041
    %3146 = vmatprep.subr.mxu0 0.0
    %3147 = vmatpush1.msra.mxu0 %v3040
    %3148 = vmatprep.subr.mxu0 0.0
    %3149 = vmatpush1.msra.mxu0 %v3039
    %3150 = vmatprep.subr.mxu0 0.0
    %3151 = vmatpush1.msra.mxu0 %v3038
    %3152 = vmatprep.subr.mxu0 0.0
    %3153 = vmatpush1.msra.mxu0 %v3037
    %3154 = vmatprep.subr.mxu0 0.0
    %3155 = vmatpush1.msra.mxu0 %v3036
    %3156 = vmatprep.subr.mxu0 0.0
    %3157 = vmatpush1.msra.mxu0 %v3035
    %3158 = vmatprep.subr.mxu0 0.0
    %3159 = vmatpush1.msra.mxu0 %v3034
    %3160 = vmatprep.subr.mxu0 0.0
    %3161 = vmatpush1.msra.mxu0 %v3033
    %3162 = vmatprep.subr.mxu0 0.0
    %3163 = vmatpush1.msra.mxu0 %v3032
    %3164 = vmatprep.subr.mxu0 0.0
    %3165 = vmatpush1.msra.mxu0 %v3031
    %3166 = vmatprep.subr.mxu0 0.0
    %3167 = vmatpush1.msra.mxu0 %v3030
    %3168 = vmatprep.subr.mxu0 0.0
    %3169 = vmatpush1.msra.mxu0 %v3029
    %3170 = vmatprep.subr.mxu0 0.0
    %3171 = vmatpush2.msra.mxu0 %v3060
    %3172 = vmatprep.subr.mxu0 0.0
    %3173 = vmatpush2.msra.mxu0 %v3059
    %3174 = vmatprep.subr.mxu0 0.0
    %3175 = vmatpush2.msra.mxu0 %v3058
    %3176 = vmatprep.subr.mxu0 0.0
    %3177 = vmatpush2.msra.mxu0 %v3057
    %3178 = vmatprep.subr.mxu0 0.0
    %3179 = vmatpush2.msra.mxu0 %v3056
    %3180 = vmatprep.subr.mxu0 0.0
    %3181 = vmatpush2.msra.mxu0 %v3055
    %3182 = vmatprep.subr.mxu0 0.0
    %3183 = vmatpush2.msra.mxu0 %v3054
    %3184 = vmatprep.subr.mxu0 0.0
    %3185 = vmatpush2.msra.mxu0 %v3053
    %3186 = vmatprep.subr.mxu0 0.0
    %3187 = vmatpush2.msra.mxu0 %v3052
    %3188 = vmatprep.subr.mxu0 0.0
    %3189 = vmatpush2.msra.mxu0 %v3051
    %3190 = vmatprep.subr.mxu0 0.0
    %3191 = vmatpush2.msra.mxu0 %v3050
    %3192 = vmatprep.subr.mxu0 0.0
    %3193 = vmatpush2.msra.mxu0 %v3049
    %3194 = vmatprep.subr.mxu0 0.0
    %3195 = vmatpush2.msra.mxu0 %v3048
    %3196 = vmatprep.subr.mxu0 0.0
    %3197 = vmatpush2.msra.mxu0 %v3047
    %3198 = vmatprep.subr.mxu0 0.0
    %3199 = vmatpush2.msra.mxu0 %v3046
    %3200 = vmatprep.subr.mxu0 0.0
    %3201 = vmatpush2.msra.mxu0 %v3045
    %3202 = vmatprep.mubr.f32.mxu0 %v2996
    %3203 = vmatmul.mubr.f32.gmra.mxu0 %v2995
    %v3204 = vpop.f32.mrf.mxu0
    %v3205 = vadd.f32 %v3135, %v3204
    %v3206 = vpop.f32.mrf.mxu0
    %3207 = vdwg.mxu0
    %3208 = vst [vmem:[#allocation5] sm:$0x3] %v3205
    // Predicated region
    $region46: #{qnet_forward.1} parent=1 // pred_check
      _
    $region47: #{qnet_forward.1} parent=1 // pred_check_branch
      %3210 = sbr.rel (0) target = $region49
    $region48: #{qnet_forward.1} parent=1 // pred_region
      %s3212 = ssub.s32 32, 32
      %3213 = vsyncadd [#allocation6], %s3212
      %s3215 = sshll.u32 [#allocation5], 4
      %s3216 = int_to_ptr.vmem [resolvable:$true] %s3215
      %3218 = dma.vmem_to_hbm [thread:$0]  %s3216, 32, %s11, [#allocation6]
    $region49: #{qnet_forward.1} parent=1 // pred_fallthru
      _
    // Predicated region
    $region50: #{qnet_forward.1} parent=1 // pred_check
      _
    $region51: #{qnet_forward.1} parent=1 // pred_check_branch
      %3220 = sbr.rel (0) target = $region53
    $region52: #{qnet_forward.1} parent=1 // pred_region
      %3221 = dma.done [#allocation6], 32
    $region53: #{qnet_forward.1} parent=1 // pred_fallthru
      _
    %3222 = vsyncpa [#allocation6], 1

</llo_original>
